<compile_context>
chip_gen: v7x
topology: tpu7x:2x2x1
jax: 0.10.0
libtpu: 0.0.40
codegen_flags: <defaults>
</compile_context>

<pallas_src>
import functools

import jax
import jax.numpy as jnp
from jax import lax
from jax.experimental import pallas as pl
from jax.experimental.pallas import tpu as pltpu

_NEG_BIG = -1e30  # finite "-inf" pad for the max-pool branch (bf16 representable)


def _adown_kernel(p1m_ref, p1u_ref, p1d_ref, p2m_ref, p2u_ref, p2d_ref,
                  w1_ref, b1_ref, w2_ref, b2_ref, o_ref, scr1, scr2,
                  *, tp, wo, nb):
    """Fused ADown forward for one (image, output-row-block) grid point.

    p*m_ref : (1, 2, 2, tp, wo, ch) bf16  raw-input parity planes (rows of block)
    p*u_ref : (1, 2, 2, 1,  wo, ch) bf16  plane row just above the block (clamped)
    p*d_ref : (1, 2, 2, 1,  wo, ch) bf16  plane row just below the block (clamped)
    w1_ref  : (9, ch, co1) bf16  3x3 conv taps, BN scale folded in
    b1_ref  : (1, co1)     f32   folded BN bias (branch 1)
    w2_ref  : (ch, co2)    bf16  1x1 conv weight, BN scale folded in
    b2_ref  : (1, co2)     f32   folded BN bias (branch 2)
    o_ref   : (1, tp, wo, co1+co2) bf16
    scr1/2  : (4, lp, ch)  bf16  padded avg-pool parity planes (zero / -1e30 pad)
    """
    wp = wo + 1                      # one junk column per plane row
    m = tp * wp                      # flattened compute rows for this block
    ch = p1m_ref.shape[-1]
    co1 = w1_ref.shape[-1]
    b_idx = pl.program_id(1)

    # ---- init padded avg-pool planes to their pad values -------------------
    scr1[...] = jnp.zeros(scr1.shape, dtype=scr1.dtype)
    scr2[...] = jnp.full(scr2.shape, _NEG_BIG, dtype=scr2.dtype)

    def p_row(pm, pu, pd, pi, pj, r):
        # raw parity-plane row r (block-local; r == -1 / tp selects halo refs)
        if r < 0:
            return pu[0, pi, pj, 0]
        if r >= tp:
            return pd[0, pi, pj, 0]
        return pm[0, pi, pj, r]

    # ---- build padded avg-pool parity planes in VMEM (unit-stride only) ----
    # A[ai, aj][r, s] = a_pad[2*(p0 + r) + ai, 2*s + aj], a = 2x2/s1 avg of x.
    for r in range(tp + 1):
        for ai in (0, 1):
            if ai == 0:
                u_pi, u_r, v_pi, v_r = 1, r - 1, 0, r
            else:
                u_pi, u_r, v_pi, v_r = 0, r, 1, r
            for (pm, pu, pd, scr) in ((p1m_ref, p1u_ref, p1d_ref, scr1),
                                      (p2m_ref, p2u_ref, p2d_ref, scr2)):
                u0 = p_row(pm, pu, pd, u_pi, 0, u_r).astype(jnp.float32)
                u1 = p_row(pm, pu, pd, u_pi, 1, u_r).astype(jnp.float32)
                v0 = p_row(pm, pu, pd, v_pi, 0, v_r).astype(jnp.float32)
                v1 = p_row(pm, pu, pd, v_pi, 1, v_r).astype(jnp.float32)
                s0 = u0 + v0          # raw column-parity-0 contribution
                s1 = u1 + v1          # raw column-parity-1 contribution
                base = r * wp
                # col-parity aj=1 plane (index 2*ai+1): valid cols [0, wo)
                scr[2 * ai + 1, base:base + wo, :] = (
                    0.25 * (s0 + s1)).astype(scr.dtype)
                # col-parity aj=0 plane (index 2*ai): valid cols [1, wo)
                scr[2 * ai, base + 1:base + wo, :] = (
                    0.25 * (s0[1:wo, :] + s1[0:wo - 1, :])).astype(scr.dtype)

    # ---- global top / bottom rows of the padded avg map are pure padding ----
    @pl.when(b_idx == 0)
    def _():
        scr1[0, 0:wp, :] = jnp.zeros((wp, ch), dtype=scr1.dtype)
        scr1[1, 0:wp, :] = jnp.zeros((wp, ch), dtype=scr1.dtype)
        scr2[0, 0:wp, :] = jnp.full((wp, ch), _NEG_BIG, dtype=scr2.dtype)
        scr2[1, 0:wp, :] = jnp.full((wp, ch), _NEG_BIG, dtype=scr2.dtype)

    @pl.when(b_idx == nb - 1)
    def _():
        base = tp * wp
        for k in range(4):
            scr1[k, base:base + wp, :] = jnp.zeros((wp, ch), dtype=scr1.dtype)
            scr2[k, base:base + wp, :] = jnp.full((wp, ch), _NEG_BIG,
                                                  dtype=scr2.dtype)

    # ---- 9 stride-2 taps: conv (bf16 MXU dots, f32 acc) + max-pool (bf16) ---
    acc = jnp.zeros((m, co1), dtype=jnp.float32)
    mx = jnp.full((m, ch), _NEG_BIG, dtype=jnp.bfloat16)
    for t in range(9):
        ki, kj = t // 3, t % 3
        plane = 2 * (ki % 2) + (kj % 2)
        f0 = (ki // 2) * wp + (kj // 2)
        tap1 = scr1[plane, f0:f0 + m, :]                 # (m, ch) bf16
        tap2 = scr2[plane, f0:f0 + m, :]
        acc = acc + jnp.dot(tap1, w1_ref[t],
                            preferred_element_type=jnp.float32)
        mx = jnp.maximum(mx, tap2)                       # stays bf16

    # ---- epilogues: folded-BN bias + SiLU ------------------------------------
    y1 = acc + b1_ref[...]
    y1 = (y1 * jax.nn.sigmoid(y1)).astype(o_ref.dtype)
    y2 = jnp.dot(mx, w2_ref[...], preferred_element_type=jnp.float32)
    y2 = y2 + b2_ref[...]
    y2 = (y2 * jax.nn.sigmoid(y2)).astype(o_ref.dtype)

    # ---- compacted, branch-sliced stores (junk column never reaches HBM) ----
    for p in range(tp):
        o_ref[0, p, :, 0:co1] = y1[p * wp:p * wp + wo, :]
        o_ref[0, p, :, co1:] = y2[p * wp:p * wp + wo, :]


def _pick_row_block(ho, wo, ch, co1, co2, budget_bytes):
    """Largest divisor of `ho` whose per-grid-step VMEM footprint fits the budget."""
    cout = co1 + co2
    best = 1
    for tp in range(1, ho + 1):
        if ho % tp:
            continue
        wp = wo + 1
        lp = (tp + 1) * wp + 1
        m = tp * wp
        bytes_est = (
            2 * 2 * (4 * tp * wo * ch * 2)        # p1/p2 main blocks, double-buffered
            + 2 * 2 * 2 * (4 * wo * ch * 2)       # halo rows
            + 2 * (4 * lp * ch * 2)               # scratch planes (bf16)
            + 2 * (tp * wo * cout * 2)            # output block, double-buffered
            + m * co1 * 4 + m * cout * 4          # f32 accumulator / epilogue temps
            + m * ch * 2                          # bf16 running max
        )
        if bytes_est <= budget_bytes:
            best = tp
    return best


def adown_forward(x_nchw, w1, g1, b1, m1, v1, w2, g2, b2, m2, v2, *,
                  eps=1e-3, row_block=None):
    """ADown forward (eval-mode BN).  NCHW f32 in, NCHW bf16 out (PyTorch layout)."""
    n, c, h, w = x_nchw.shape
    assert c % 2 == 0 and h % 2 == 0 and w % 2 == 0, "ADown expects even dims"
    ch = c // 2
    co1, co2 = w1.shape[0], w2.shape[0]
    cout = co1 + co2
    ho, wo = h // 2, w // 2            # output spatial == parity-plane spatial
    hh = ho

    # --- single fused layout pass per channel half: raw NCHW -> bf16 parity planes
    #     P[n, pi, pj, r, s, c] = x_half[n, c, 2r+pi, 2s+pj]
    # TODO(synk): in an NHWC-native pipeline this transpose disappears (pure reshape).
    def parity_planes(x_half):
        return (x_half.reshape(n, ch, hh, 2, wo, 2)
                .transpose(0, 3, 5, 2, 4, 1)
                .astype(jnp.bfloat16))

    p1 = parity_planes(x_nchw[:, :ch])
    p2 = parity_planes(x_nchw[:, ch:])

    # --- fold eval-mode BatchNorm into the conv weights / biases
    s1 = g1 / jnp.sqrt(v1 + eps)
    w1_taps = (jnp.transpose(w1, (2, 3, 1, 0)) * s1).reshape(9, ch, co1)
    w1_taps = w1_taps.astype(jnp.bfloat16)
    bias1 = (b1 - m1 * s1).reshape(1, co1).astype(jnp.float32)
    s2 = g2 / jnp.sqrt(v2 + eps)
    w2_mat = (w2[:, :, 0, 0].T * s2).astype(jnp.bfloat16)
    bias2 = (b2 - m2 * s2).reshape(1, co2).astype(jnp.float32)

    # --- per-generation sizing (v7x: 64 MiB physical VMEM, v5e/v6e: 128 MiB)
    vmem_cap = 64 * 1024 * 1024
    try:
        vmem_cap = int(getattr(pltpu.get_tpu_info(), "vmem_capacity_bytes", vmem_cap))
    except Exception:
        pass
    vmem_limit = max(32 * 1024 * 1024, min(int(0.55 * vmem_cap), 112 * 1024 * 1024))

    if row_block is None:
        row_block = _pick_row_block(ho, wo, ch, co1, co2, vmem_limit // 3)
    assert ho % row_block == 0, "row_block must divide the output height"
    tp = row_block
    nb = ho // tp
    wp = wo + 1
    lp = (tp + 1) * wp + 1

    plane_blk = (1, 2, 2, tp, wo, ch)
    halo_blk = (1, 2, 2, 1, wo, ch)
    main_map = lambda i, b: (i, 0, 0, b, 0, 0)
    up_map = lambda i, b: (i, 0, 0, jnp.maximum(b * tp - 1, 0), 0, 0)
    dn_map = lambda i, b: (i, 0, 0, jnp.minimum((b + 1) * tp, hh - 1), 0, 0)

    kernel = functools.partial(_adown_kernel, tp=tp, wo=wo, nb=nb)

    out_nhwc = pl.pallas_call(
        kernel,
        out_shape=jax.ShapeDtypeStruct((n, ho, wo, cout), jnp.bfloat16),
        grid=(n, nb),
        in_specs=[
            pl.BlockSpec(plane_blk, main_map),
            pl.BlockSpec(halo_blk, up_map),
            pl.BlockSpec(halo_blk, dn_map),
            pl.BlockSpec(plane_blk, main_map),
            pl.BlockSpec(halo_blk, up_map),
            pl.BlockSpec(halo_blk, dn_map),
            pl.BlockSpec((9, ch, co1), lambda i, b: (0, 0, 0)),
            pl.BlockSpec((1, co1), lambda i, b: (0, 0)),
            pl.BlockSpec((ch, co2), lambda i, b: (0, 0)),
            pl.BlockSpec((1, co2), lambda i, b: (0, 0)),
        ],
        out_specs=pl.BlockSpec((1, tp, wo, cout), lambda i, b: (i, b, 0, 0)),
        scratch_shapes=[
            pltpu.VMEM((4, lp, ch), jnp.bfloat16),
            pltpu.VMEM((4, lp, ch), jnp.bfloat16),
        ],
        compiler_params=pltpu.CompilerParams(
            dimension_semantics=("parallel", "parallel"),
            vmem_limit_bytes=vmem_limit,
        ),
    )(p1, p1, p1, p2, p2, p2, w1_taps, bias1, w2_mat, bias2)

    # Kernel output is consumer-ready NHWC bf16; only the NCHW contract transpose remains.
    # TODO(synk): return out_nhwc directly in an NHWC-native model.
    return jnp.transpose(out_nhwc, (0, 3, 1, 2))


def _adown_reference(x, w1, g1, b1, m1, v1, w2, g2, b2, m2, v2, *, eps=1e-3):
    """Pure-JAX f32 reference matching the PyTorch module."""
    xf = x.astype(jnp.float32)
    a = lax.reduce_window(xf, 0.0, lax.add, (1, 1, 2, 2), (1, 1, 1, 1), "VALID") * 0.25
    ch = x.shape[1] // 2
    a1, a2 = a[:, :ch], a[:, ch:]

    y1 = lax.conv_general_dilated(a1, w1.astype(jnp.float32), (2, 2),
                                  [(1, 1), (1, 1)],
                                  dimension_numbers=("NCHW", "OIHW", "NCHW"))
    s1 = g1 / jnp.sqrt(v1 + eps)
    y1 = y1 * s1[None, :, None, None] + (b1 - m1 * s1)[None, :, None, None]
    y1 = y1 * jax.nn.sigmoid(y1)

    a2p = jnp.pad(a2, ((0, 0), (0, 0), (1, 1), (1, 1)), constant_values=-jnp.inf)
    mp = lax.reduce_window(a2p, -jnp.inf, lax.max, (1, 1, 3, 3), (1, 1, 2, 2), "VALID")
    y2 = lax.conv_general_dilated(mp, w2.astype(jnp.float32), (1, 1),
                                  [(0, 0), (0, 0)],
                                  dimension_numbers=("NCHW", "OIHW", "NCHW"))
    s2 = g2 / jnp.sqrt(v2 + eps)
    y2 = y2 * s2[None, :, None, None] + (b2 - m2 * s2)[None, :, None, None]
    y2 = y2 * jax.nn.sigmoid(y2)
    return jnp.concatenate([y1, y2], axis=1)


if __name__ == "__main__":
    key = jax.random.PRNGKey(0)
    keys = jax.random.split(key, 11)

    N, CIN, H, W = 2, 4, 16, 16
    COUT = 8
    ch, co = CIN // 2, COUT // 2   # per-branch channel counts

    x = jax.random.normal(keys[0], (N, CIN, H, W), dtype=jnp.float32)
    w1 = 0.1 * jax.random.normal(keys[1], (co, ch, 3, 3), dtype=jnp.float32)
    g1 = 1.0 + 0.1 * jax.random.normal(keys[2], (co,), dtype=jnp.float32)
    b1 = 0.1 * jax.random.normal(keys[3], (co,), dtype=jnp.float32)
    m1 = 0.1 * jax.random.normal(keys[4], (co,), dtype=jnp.float32)
    v1 = jnp.abs(jax.random.normal(keys[5], (co,), dtype=jnp.float32)) + 0.5
    w2 = 0.1 * jax.random.normal(keys[6], (co, ch, 1, 1), dtype=jnp.float32)
    g2 = 1.0 + 0.1 * jax.random.normal(keys[7], (co,), dtype=jnp.float32)
    b2 = 0.1 * jax.random.normal(keys[8], (co,), dtype=jnp.float32)
    m2 = 0.1 * jax.random.normal(keys[9], (co,), dtype=jnp.float32)
    v2 = jnp.abs(jax.random.normal(keys[10], (co,), dtype=jnp.float32)) + 0.5

    # row_block=2 -> 4 row blocks: exercises first / middle / last halo paths.
    fwd = jax.jit(lambda *a: adown_forward(*a, row_block=2))
    out = jax.block_until_ready(fwd(x, w1, g1, b1, m1, v1, w2, g2, b2, m2, v2))

    ref = _adown_reference(x, w1, g1, b1, m1, v1, w2, g2, b2, m2, v2)
    assert out.shape == (N, COUT, H // 2, W // 2), out.shape
    max_err = float(jnp.max(jnp.abs(out.astype(jnp.float32) - ref)))
    # bf16 activations / bf16 output (f32 accumulation) vs f32 reference.
    assert max_err < 3e-2, f"mismatch vs JAX reference: max_err={max_err}"

    print("KERNEL_OK")
</pallas_src>

<mosaic_0001>
module attributes {stable_mosaic.version = 11 : i64} {
  func.func @_adown_kernel(%arg0: i32, %arg1: i32, %arg2: memref<1x2x2x2x8x2xbf16, #tpu.memory_space<vmem>>, %arg3: memref<1x2x2x1x8x2xbf16, #tpu.memory_space<vmem>>, %arg4: memref<1x2x2x1x8x2xbf16, #tpu.memory_space<vmem>>, %arg5: memref<1x2x2x2x8x2xbf16, #tpu.memory_space<vmem>>, %arg6: memref<1x2x2x1x8x2xbf16, #tpu.memory_space<vmem>>, %arg7: memref<1x2x2x1x8x2xbf16, #tpu.memory_space<vmem>>, %arg8: memref<9x2x4xbf16, #tpu.memory_space<vmem>>, %arg9: memref<1x4xf32, #tpu.memory_space<vmem>>, %arg10: memref<2x4xbf16, #tpu.memory_space<vmem>>, %arg11: memref<1x4xf32, #tpu.memory_space<vmem>>, %arg12: memref<1x2x8x8xbf16, #tpu.memory_space<vmem>>, %arg13: memref<4x28x2xbf16, #tpu.memory_space<vmem>>, %arg14: memref<4x28x2xbf16, #tpu.memory_space<vmem>>) attributes {dimension_semantics = [#tpu.dimension_semantics<parallel>, #tpu.dimension_semantics<parallel>], iteration_bounds = array<i64: 2, 4>, scalar_prefetch = 0 : i64, scratch_operands = 2 : i64, tpu.core_type = #tpu.core_type<tc>, window_params = [{transform_indices = @transform_0, window_bounds = array<i64: 1, 2, 2, 2, 8, 2>}, {transform_indices = @transform_1, window_bounds = array<i64: 1, 2, 2, 1, 8, 2>}, {transform_indices = @transform_2, window_bounds = array<i64: 1, 2, 2, 1, 8, 2>}, {transform_indices = @transform_3, window_bounds = array<i64: 1, 2, 2, 2, 8, 2>}, {transform_indices = @transform_4, window_bounds = array<i64: 1, 2, 2, 1, 8, 2>}, {transform_indices = @transform_5, window_bounds = array<i64: 1, 2, 2, 1, 8, 2>}, {pipeline_mode = #tpu.pipeline_mode<synchronous>, transform_indices = @transform_6, window_bounds = array<i64: 9, 2, 4>}, {pipeline_mode = #tpu.pipeline_mode<synchronous>, transform_indices = @transform_7, window_bounds = array<i64: 1, 4>}, {pipeline_mode = #tpu.pipeline_mode<synchronous>, transform_indices = @transform_8, window_bounds = array<i64: 2, 4>}, {pipeline_mode = #tpu.pipeline_mode<synchronous>, transform_indices = @transform_9, window_bounds = array<i64: 1, 4>}, {transform_indices = @transform_10, window_bounds = array<i64: 1, 2, 8, 8>}]} {
    %cst = arith.constant 0.000000e+00 : bf16
    %0 = vector.broadcast %cst : bf16 to vector<4x28x2xbf16>
    %c0 = arith.constant 0 : index
    %c0_0 = arith.constant 0 : index
    %c0_1 = arith.constant 0 : index
    %1 = vector.load %arg13[%c0, %c0_0, %c0_1] : memref<4x28x2xbf16, #tpu.memory_space<vmem>>, vector<4x28x2xbf16>
    tpu.vector_store %arg13[%c0, %c0_0, %c0_1], %0 {strides = array<i32>} : memref<4x28x2xbf16, #tpu.memory_space<vmem>>, vector<4x28x2xbf16>,
    %cst_2 = arith.constant -1.000260e+30 : bf16
    %2 = vector.broadcast %cst_2 : bf16 to vector<4x28x2xbf16>
    %c0_3 = arith.constant 0 : index
    %c0_4 = arith.constant 0 : index
    %c0_5 = arith.constant 0 : index
    %3 = vector.load %arg14[%c0_3, %c0_4, %c0_5] : memref<4x28x2xbf16, #tpu.memory_space<vmem>>, vector<4x28x2xbf16>
    tpu.vector_store %arg14[%c0_3, %c0_4, %c0_5], %2 {strides = array<i32>} : memref<4x28x2xbf16, #tpu.memory_space<vmem>>, vector<4x28x2xbf16>,
    %c0_6 = arith.constant 0 : index
    %c1 = arith.constant 1 : index
    %c0_7 = arith.constant 0 : index
    %c0_8 = arith.constant 0 : index
    %c0_9 = arith.constant 0 : index
    %c0_10 = arith.constant 0 : index
    %4 = vector.load %arg3[%c0_6, %c1, %c0_7, %c0_8, %c0_9, %c0_10] : memref<1x2x2x1x8x2xbf16, #tpu.memory_space<vmem>>, vector<1x1x1x1x8x2xbf16>
    %5 = vector.shape_cast %4 : vector<1x1x1x1x8x2xbf16> to vector<8x2xbf16>
    %6 = arith.extf %5 : vector<8x2xbf16> to vector<8x2xf32>
    %c0_11 = arith.constant 0 : index
    %c1_12 = arith.constant 1 : index
    %c1_13 = arith.constant 1 : index
    %c0_14 = arith.constant 0 : index
    %c0_15 = arith.constant 0 : index
    %c0_16 = arith.constant 0 : index
    %7 = vector.load %arg3[%c0_11, %c1_12, %c1_13, %c0_14, %c0_15, %c0_16] : memref<1x2x2x1x8x2xbf16, #tpu.memory_space<vmem>>, vector<1x1x1x1x8x2xbf16>
    %8 = vector.shape_cast %7 : vector<1x1x1x1x8x2xbf16> to vector<8x2xbf16>
    %9 = arith.extf %8 : vector<8x2xbf16> to vector<8x2xf32>
    %c0_17 = arith.constant 0 : index
    %c0_18 = arith.constant 0 : index
    %c0_19 = arith.constant 0 : index
    %c0_20 = arith.constant 0 : index
    %c0_21 = arith.constant 0 : index
    %c0_22 = arith.constant 0 : index
    %10 = vector.load %arg2[%c0_17, %c0_18, %c0_19, %c0_20, %c0_21, %c0_22] : memref<1x2x2x2x8x2xbf16, #tpu.memory_space<vmem>>, vector<1x1x1x1x8x2xbf16>
    %11 = vector.shape_cast %10 : vector<1x1x1x1x8x2xbf16> to vector<8x2xbf16>
    %12 = arith.extf %11 : vector<8x2xbf16> to vector<8x2xf32>
    %c0_23 = arith.constant 0 : index
    %c0_24 = arith.constant 0 : index
    %c1_25 = arith.constant 1 : index
    %c0_26 = arith.constant 0 : index
    %c0_27 = arith.constant 0 : index
    %c0_28 = arith.constant 0 : index
    %13 = vector.load %arg2[%c0_23, %c0_24, %c1_25, %c0_26, %c0_27, %c0_28] : memref<1x2x2x2x8x2xbf16, #tpu.memory_space<vmem>>, vector<1x1x1x1x8x2xbf16>
    %14 = vector.shape_cast %13 : vector<1x1x1x1x8x2xbf16> to vector<8x2xbf16>
    %15 = arith.extf %14 : vector<8x2xbf16> to vector<8x2xf32>
    %16 = arith.addf %6, %12 : vector<8x2xf32>
    %17 = arith.addf %9, %15 : vector<8x2xf32>
    %18 = arith.addf %16, %17 : vector<8x2xf32>
    %cst_29 = arith.constant 2.500000e-01 : f32
    %19 = vector.broadcast %cst_29 : f32 to vector<8x2xf32>
    %20 = arith.mulf %19, %18 : vector<8x2xf32>
    %21 = arith.truncf %20 : vector<8x2xf32> to vector<8x2xbf16>
    %c1_30 = arith.constant 1 : index
    %c0_31 = arith.constant 0 : index
    %c0_32 = arith.constant 0 : index
    %22 = vector.load %arg13[%c1_30, %c0_31, %c0_32] : memref<4x28x2xbf16, #tpu.memory_space<vmem>>, vector<1x8x2xbf16>
    %23 = vector.shape_cast %22 : vector<1x8x2xbf16> to vector<8x2xbf16>
    %24 = vector.shape_cast %21 : vector<8x2xbf16> to vector<1x8x2xbf16>
    tpu.vector_store %arg13[%c1_30, %c0_31, %c0_32], %24 {strides = array<i32>} : memref<4x28x2xbf16, #tpu.memory_space<vmem>>, vector<1x8x2xbf16>,
    %25 = vector.extract_strided_slice %16 {offsets = [1, 0], sizes = [7, 2], strides = [1, 1]} : vector<8x2xf32> to vector<7x2xf32>
    %26 = vector.extract_strided_slice %17 {offsets = [0, 0], sizes = [7, 2], strides = [1, 1]} : vector<8x2xf32> to vector<7x2xf32>
    %27 = arith.addf %25, %26 : vector<7x2xf32>
    %cst_33 = arith.constant 2.500000e-01 : f32
    %28 = vector.broadcast %cst_33 : f32 to vector<7x2xf32>
    %29 = arith.mulf %28, %27 : vector<7x2xf32>
    %30 = arith.truncf %29 : vector<7x2xf32> to vector<7x2xbf16>
    %c0_34 = arith.constant 0 : index
    %c1_35 = arith.constant 1 : index
    %c0_36 = arith.constant 0 : index
    %31 = vector.load %arg13[%c0_34, %c1_35, %c0_36] : memref<4x28x2xbf16, #tpu.memory_space<vmem>>, vector<1x7x2xbf16>
    %32 = vector.shape_cast %31 : vector<1x7x2xbf16> to vector<7x2xbf16>
    %33 = vector.shape_cast %30 : vector<7x2xbf16> to vector<1x7x2xbf16>
    tpu.vector_store %arg13[%c0_34, %c1_35, %c0_36], %33 {strides = array<i32>} : memref<4x28x2xbf16, #tpu.memory_space<vmem>>, vector<1x7x2xbf16>,
    %c0_37 = arith.constant 0 : index
    %c1_38 = arith.constant 1 : index
    %c0_39 = arith.constant 0 : index
    %c0_40 = arith.constant 0 : index
    %c0_41 = arith.constant 0 : index
    %c0_42 = arith.constant 0 : index
    %34 = vector.load %arg6[%c0_37, %c1_38, %c0_39, %c0_40, %c0_41, %c0_42] : memref<1x2x2x1x8x2xbf16, #tpu.memory_space<vmem>>, vector<1x1x1x1x8x2xbf16>
    %35 = vector.shape_cast %34 : vector<1x1x1x1x8x2xbf16> to vector<8x2xbf16>
    %36 = arith.extf %35 : vector<8x2xbf16> to vector<8x2xf32>
    %c0_43 = arith.constant 0 : index
    %c1_44 = arith.constant 1 : index
    %c1_45 = arith.constant 1 : index
    %c0_46 = arith.constant 0 : index
    %c0_47 = arith.constant 0 : index
    %c0_48 = arith.constant 0 : index
    %37 = vector.load %arg6[%c0_43, %c1_44, %c1_45, %c0_46, %c0_47, %c0_48] : memref<1x2x2x1x8x2xbf16, #tpu.memory_space<vmem>>, vector<1x1x1x1x8x2xbf16>
    %38 = vector.shape_cast %37 : vector<1x1x1x1x8x2xbf16> to vector<8x2xbf16>
    %39 = arith.extf %38 : vector<8x2xbf16> to vector<8x2xf32>
    %c0_49 = arith.constant 0 : index
    %c0_50 = arith.constant 0 : index
    %c0_51 = arith.constant 0 : index
    %c0_52 = arith.constant 0 : index
    %c0_53 = arith.constant 0 : index
    %c0_54 = arith.constant 0 : index
    %40 = vector.load %arg5[%c0_49, %c0_50, %c0_51, %c0_52, %c0_53, %c0_54] : memref<1x2x2x2x8x2xbf16, #tpu.memory_space<vmem>>, vector<1x1x1x1x8x2xbf16>
    %41 = vector.shape_cast %40 : vector<1x1x1x1x8x2xbf16> to vector<8x2xbf16>
    %42 = arith.extf %41 : vector<8x2xbf16> to vector<8x2xf32>
    %c0_55 = arith.constant 0 : index
    %c0_56 = arith.constant 0 : index
    %c1_57 = arith.constant 1 : index
    %c0_58 = arith.constant 0 : index
    %c0_59 = arith.constant 0 : index
    %c0_60 = arith.constant 0 : index
    %43 = vector.load %arg5[%c0_55, %c0_56, %c1_57, %c0_58, %c0_59, %c0_60] : memref<1x2x2x2x8x2xbf16, #tpu.memory_space<vmem>>, vector<1x1x1x1x8x2xbf16>
    %44 = vector.shape_cast %43 : vector<1x1x1x1x8x2xbf16> to vector<8x2xbf16>
    %45 = arith.extf %44 : vector<8x2xbf16> to vector<8x2xf32>
    %46 = arith.addf %36, %42 : vector<8x2xf32>
    %47 = arith.addf %39, %45 : vector<8x2xf32>
    %48 = arith.addf %46, %47 : vector<8x2xf32>
    %cst_61 = arith.constant 2.500000e-01 : f32
    %49 = vector.broadcast %cst_61 : f32 to vector<8x2xf32>
    %50 = arith.mulf %49, %48 : vector<8x2xf32>
    %51 = arith.truncf %50 : vector<8x2xf32> to vector<8x2xbf16>
    %c1_62 = arith.constant 1 : index
    %c0_63 = arith.constant 0 : index
    %c0_64 = arith.constant 0 : index
    %52 = vector.load %arg14[%c1_62, %c0_63, %c0_64] : memref<4x28x2xbf16, #tpu.memory_space<vmem>>, vector<1x8x2xbf16>
    %53 = vector.shape_cast %52 : vector<1x8x2xbf16> to vector<8x2xbf16>
    %54 = vector.shape_cast %51 : vector<8x2xbf16> to vector<1x8x2xbf16>
    tpu.vector_store %arg14[%c1_62, %c0_63, %c0_64], %54 {strides = array<i32>} : memref<4x28x2xbf16, #tpu.memory_space<vmem>>, vector<1x8x2xbf16>,
    %55 = vector.extract_strided_slice %46 {offsets = [1, 0], sizes = [7, 2], strides = [1, 1]} : vector<8x2xf32> to vector<7x2xf32>
    %56 = vector.extract_strided_slice %47 {offsets = [0, 0], sizes = [7, 2], strides = [1, 1]} : vector<8x2xf32> to vector<7x2xf32>
    %57 = arith.addf %55, %56 : vector<7x2xf32>
    %cst_65 = arith.constant 2.500000e-01 : f32
    %58 = vector.broadcast %cst_65 : f32 to vector<7x2xf32>
    %59 = arith.mulf %58, %57 : vector<7x2xf32>
    %60 = arith.truncf %59 : vector<7x2xf32> to vector<7x2xbf16>
    %c0_66 = arith.constant 0 : index
    %c1_67 = arith.constant 1 : index
    %c0_68 = arith.constant 0 : index
    %61 = vector.load %arg14[%c0_66, %c1_67, %c0_68] : memref<4x28x2xbf16, #tpu.memory_space<vmem>>, vector<1x7x2xbf16>
    %62 = vector.shape_cast %61 : vector<1x7x2xbf16> to vector<7x2xbf16>
    %63 = vector.shape_cast %60 : vector<7x2xbf16> to vector<1x7x2xbf16>
    tpu.vector_store %arg14[%c0_66, %c1_67, %c0_68], %63 {strides = array<i32>} : memref<4x28x2xbf16, #tpu.memory_space<vmem>>, vector<1x7x2xbf16>,
    %c0_69 = arith.constant 0 : index
    %c0_70 = arith.constant 0 : index
    %c0_71 = arith.constant 0 : index
    %c0_72 = arith.constant 0 : index
    %c0_73 = arith.constant 0 : index
    %c0_74 = arith.constant 0 : index
    %64 = vector.load %arg2[%c0_69, %c0_70, %c0_71, %c0_72, %c0_73, %c0_74] : memref<1x2x2x2x8x2xbf16, #tpu.memory_space<vmem>>, vector<1x1x1x1x8x2xbf16>
    %65 = vector.shape_cast %64 : vector<1x1x1x1x8x2xbf16> to vector<8x2xbf16>
    %66 = arith.extf %65 : vector<8x2xbf16> to vector<8x2xf32>
    %c0_75 = arith.constant 0 : index
    %c0_76 = arith.constant 0 : index
    %c1_77 = arith.constant 1 : index
    %c0_78 = arith.constant 0 : index
    %c0_79 = arith.constant 0 : index
    %c0_80 = arith.constant 0 : index
    %67 = vector.load %arg2[%c0_75, %c0_76, %c1_77, %c0_78, %c0_79, %c0_80] : memref<1x2x2x2x8x2xbf16, #tpu.memory_space<vmem>>, vector<1x1x1x1x8x2xbf16>
    %68 = vector.shape_cast %67 : vector<1x1x1x1x8x2xbf16> to vector<8x2xbf16>
    %69 = arith.extf %68 : vector<8x2xbf16> to vector<8x2xf32>
    %c0_81 = arith.constant 0 : index
    %c1_82 = arith.constant 1 : index
    %c0_83 = arith.constant 0 : index
    %c0_84 = arith.constant 0 : index
    %c0_85 = arith.constant 0 : index
    %c0_86 = arith.constant 0 : index
    %70 = vector.load %arg2[%c0_81, %c1_82, %c0_83, %c0_84, %c0_85, %c0_86] : memref<1x2x2x2x8x2xbf16, #tpu.memory_space<vmem>>, vector<1x1x1x1x8x2xbf16>
    %71 = vector.shape_cast %70 : vector<1x1x1x1x8x2xbf16> to vector<8x2xbf16>
    %72 = arith.extf %71 : vector<8x2xbf16> to vector<8x2xf32>
    %c0_87 = arith.constant 0 : index
    %c1_88 = arith.constant 1 : index
    %c1_89 = arith.constant 1 : index
    %c0_90 = arith.constant 0 : index
    %c0_91 = arith.constant 0 : index
    %c0_92 = arith.constant 0 : index
    %73 = vector.load %arg2[%c0_87, %c1_88, %c1_89, %c0_90, %c0_91, %c0_92] : memref<1x2x2x2x8x2xbf16, #tpu.memory_space<vmem>>, vector<1x1x1x1x8x2xbf16>
    %74 = vector.shape_cast %73 : vector<1x1x1x1x8x2xbf16> to vector<8x2xbf16>
    %75 = arith.extf %74 : vector<8x2xbf16> to vector<8x2xf32>
    %76 = arith.addf %66, %72 : vector<8x2xf32>
    %77 = arith.addf %69, %75 : vector<8x2xf32>
    %78 = arith.addf %76, %77 : vector<8x2xf32>
    %cst_93 = arith.constant 2.500000e-01 : f32
    %79 = vector.broadcast %cst_93 : f32 to vector<8x2xf32>
    %80 = arith.mulf %79, %78 : vector<8x2xf32>
    %81 = arith.truncf %80 : vector<8x2xf32> to vector<8x2xbf16>
    %c3 = arith.constant 3 : index
    %c0_94 = arith.constant 0 : index
    %c0_95 = arith.constant 0 : index
    %82 = vector.load %arg13[%c3, %c0_94, %c0_95] : memref<4x28x2xbf16, #tpu.memory_space<vmem>>, vector<1x8x2xbf16>
    %83 = vector.shape_cast %82 : vector<1x8x2xbf16> to vector<8x2xbf16>
    %84 = vector.shape_cast %81 : vector<8x2xbf16> to vector<1x8x2xbf16>
    tpu.vector_store %arg13[%c3, %c0_94, %c0_95], %84 {strides = array<i32>} : memref<4x28x2xbf16, #tpu.memory_space<vmem>>, vector<1x8x2xbf16>,
    %85 = vector.extract_strided_slice %76 {offsets = [1, 0], sizes = [7, 2], strides = [1, 1]} : vector<8x2xf32> to vector<7x2xf32>
    %86 = vector.extract_strided_slice %77 {offsets = [0, 0], sizes = [7, 2], strides = [1, 1]} : vector<8x2xf32> to vector<7x2xf32>
    %87 = arith.addf %85, %86 : vector<7x2xf32>
    %cst_96 = arith.constant 2.500000e-01 : f32
    %88 = vector.broadcast %cst_96 : f32 to vector<7x2xf32>
    %89 = arith.mulf %88, %87 : vector<7x2xf32>
    %90 = arith.truncf %89 : vector<7x2xf32> to vector<7x2xbf16>
    %c2 = arith.constant 2 : index
    %c1_97 = arith.constant 1 : index
    %c0_98 = arith.constant 0 : index
    %91 = vector.load %arg13[%c2, %c1_97, %c0_98] : memref<4x28x2xbf16, #tpu.memory_space<vmem>>, vector<1x7x2xbf16>
    %92 = vector.shape_cast %91 : vector<1x7x2xbf16> to vector<7x2xbf16>
    %93 = vector.shape_cast %90 : vector<7x2xbf16> to vector<1x7x2xbf16>
    tpu.vector_store %arg13[%c2, %c1_97, %c0_98], %93 {strides = array<i32>} : memref<4x28x2xbf16, #tpu.memory_space<vmem>>, vector<1x7x2xbf16>,
    %c0_99 = arith.constant 0 : index
    %c0_100 = arith.constant 0 : index
    %c0_101 = arith.constant 0 : index
    %c0_102 = arith.constant 0 : index
    %c0_103 = arith.constant 0 : index
    %c0_104 = arith.constant 0 : index
    %94 = vector.load %arg5[%c0_99, %c0_100, %c0_101, %c0_102, %c0_103, %c0_104] : memref<1x2x2x2x8x2xbf16, #tpu.memory_space<vmem>>, vector<1x1x1x1x8x2xbf16>
    %95 = vector.shape_cast %94 : vector<1x1x1x1x8x2xbf16> to vector<8x2xbf16>
    %96 = arith.extf %95 : vector<8x2xbf16> to vector<8x2xf32>
    %c0_105 = arith.constant 0 : index
    %c0_106 = arith.constant 0 : index
    %c1_107 = arith.constant 1 : index
    %c0_108 = arith.constant 0 : index
    %c0_109 = arith.constant 0 : index
    %c0_110 = arith.constant 0 : index
    %97 = vector.load %arg5[%c0_105, %c0_106, %c1_107, %c0_108, %c0_109, %c0_110] : memref<1x2x2x2x8x2xbf16, #tpu.memory_space<vmem>>, vector<1x1x1x1x8x2xbf16>
    %98 = vector.shape_cast %97 : vector<1x1x1x1x8x2xbf16> to vector<8x2xbf16>
    %99 = arith.extf %98 : vector<8x2xbf16> to vector<8x2xf32>
    %c0_111 = arith.constant 0 : index
    %c1_112 = arith.constant 1 : index
    %c0_113 = arith.constant 0 : index
    %c0_114 = arith.constant 0 : index
    %c0_115 = arith.constant 0 : index
    %c0_116 = arith.constant 0 : index
    %100 = vector.load %arg5[%c0_111, %c1_112, %c0_113, %c0_114, %c0_115, %c0_116] : memref<1x2x2x2x8x2xbf16, #tpu.memory_space<vmem>>, vector<1x1x1x1x8x2xbf16>
    %101 = vector.shape_cast %100 : vector<1x1x1x1x8x2xbf16> to vector<8x2xbf16>
    %102 = arith.extf %101 : vector<8x2xbf16> to vector<8x2xf32>
    %c0_117 = arith.constant 0 : index
    %c1_118 = arith.constant 1 : index
    %c1_119 = arith.constant 1 : index
    %c0_120 = arith.constant 0 : index
    %c0_121 = arith.constant 0 : index
    %c0_122 = arith.constant 0 : index
    %103 = vector.load %arg5[%c0_117, %c1_118, %c1_119, %c0_120, %c0_121, %c0_122] : memref<1x2x2x2x8x2xbf16, #tpu.memory_space<vmem>>, vector<1x1x1x1x8x2xbf16>
    %104 = vector.shape_cast %103 : vector<1x1x1x1x8x2xbf16> to vector<8x2xbf16>
    %105 = arith.extf %104 : vector<8x2xbf16> to vector<8x2xf32>
    %106 = arith.addf %96, %102 : vector<8x2xf32>
    %107 = arith.addf %99, %105 : vector<8x2xf32>
    %108 = arith.addf %106, %107 : vector<8x2xf32>
    %cst_123 = arith.constant 2.500000e-01 : f32
    %109 = vector.broadcast %cst_123 : f32 to vector<8x2xf32>
    %110 = arith.mulf %109, %108 : vector<8x2xf32>
    %111 = arith.truncf %110 : vector<8x2xf32> to vector<8x2xbf16>
    %c3_124 = arith.constant 3 : index
    %c0_125 = arith.constant 0 : index
    %c0_126 = arith.constant 0 : index
    %112 = vector.load %arg14[%c3_124, %c0_125, %c0_126] : memref<4x28x2xbf16, #tpu.memory_space<vmem>>, vector<1x8x2xbf16>
    %113 = vector.shape_cast %112 : vector<1x8x2xbf16> to vector<8x2xbf16>
    %114 = vector.shape_cast %111 : vector<8x2xbf16> to vector<1x8x2xbf16>
    tpu.vector_store %arg14[%c3_124, %c0_125, %c0_126], %114 {strides = array<i32>} : memref<4x28x2xbf16, #tpu.memory_space<vmem>>, vector<1x8x2xbf16>,
    %115 = vector.extract_strided_slice %106 {offsets = [1, 0], sizes = [7, 2], strides = [1, 1]} : vector<8x2xf32> to vector<7x2xf32>
    %116 = vector.extract_strided_slice %107 {offsets = [0, 0], sizes = [7, 2], strides = [1, 1]} : vector<8x2xf32> to vector<7x2xf32>
    %117 = arith.addf %115, %116 : vector<7x2xf32>
    %cst_127 = arith.constant 2.500000e-01 : f32
    %118 = vector.broadcast %cst_127 : f32 to vector<7x2xf32>
    %119 = arith.mulf %118, %117 : vector<7x2xf32>
    %120 = arith.truncf %119 : vector<7x2xf32> to vector<7x2xbf16>
    %c2_128 = arith.constant 2 : index
    %c1_129 = arith.constant 1 : index
    %c0_130 = arith.constant 0 : index
    %121 = vector.load %arg14[%c2_128, %c1_129, %c0_130] : memref<4x28x2xbf16, #tpu.memory_space<vmem>>, vector<1x7x2xbf16>
    %122 = vector.shape_cast %121 : vector<1x7x2xbf16> to vector<7x2xbf16>
    %123 = vector.shape_cast %120 : vector<7x2xbf16> to vector<1x7x2xbf16>
    tpu.vector_store %arg14[%c2_128, %c1_129, %c0_130], %123 {strides = array<i32>} : memref<4x28x2xbf16, #tpu.memory_space<vmem>>, vector<1x7x2xbf16>,
    %c0_131 = arith.constant 0 : index
    %c1_132 = arith.constant 1 : index
    %c0_133 = arith.constant 0 : index
    %c0_134 = arith.constant 0 : index
    %c0_135 = arith.constant 0 : index
    %c0_136 = arith.constant 0 : index
    %124 = vector.load %arg2[%c0_131, %c1_132, %c0_133, %c0_134, %c0_135, %c0_136] : memref<1x2x2x2x8x2xbf16, #tpu.memory_space<vmem>>, vector<1x1x1x1x8x2xbf16>
    %125 = vector.shape_cast %124 : vector<1x1x1x1x8x2xbf16> to vector<8x2xbf16>
    %126 = arith.extf %125 : vector<8x2xbf16> to vector<8x2xf32>
    %c0_137 = arith.constant 0 : index
    %c1_138 = arith.constant 1 : index
    %c1_139 = arith.constant 1 : index
    %c0_140 = arith.constant 0 : index
    %c0_141 = arith.constant 0 : index
    %c0_142 = arith.constant 0 : index
    %127 = vector.load %arg2[%c0_137, %c1_138, %c1_139, %c0_140, %c0_141, %c0_142] : memref<1x2x2x2x8x2xbf16, #tpu.memory_space<vmem>>, vector<1x1x1x1x8x2xbf16>
    %128 = vector.shape_cast %127 : vector<1x1x1x1x8x2xbf16> to vector<8x2xbf16>
    %129 = arith.extf %128 : vector<8x2xbf16> to vector<8x2xf32>
    %c0_143 = arith.constant 0 : index
    %c0_144 = arith.constant 0 : index
    %c0_145 = arith.constant 0 : index
    %c1_146 = arith.constant 1 : index
    %c0_147 = arith.constant 0 : index
    %c0_148 = arith.constant 0 : index
    %130 = vector.load %arg2[%c0_143, %c0_144, %c0_145, %c1_146, %c0_147, %c0_148] : memref<1x2x2x2x8x2xbf16, #tpu.memory_space<vmem>>, vector<1x1x1x1x8x2xbf16>
    %131 = vector.shape_cast %130 : vector<1x1x1x1x8x2xbf16> to vector<8x2xbf16>
    %132 = arith.extf %131 : vector<8x2xbf16> to vector<8x2xf32>
    %c0_149 = arith.constant 0 : index
    %c0_150 = arith.constant 0 : index
    %c1_151 = arith.constant 1 : index
    %c1_152 = arith.constant 1 : index
    %c0_153 = arith.constant 0 : index
    %c0_154 = arith.constant 0 : index
    %133 = vector.load %arg2[%c0_149, %c0_150, %c1_151, %c1_152, %c0_153, %c0_154] : memref<1x2x2x2x8x2xbf16, #tpu.memory_space<vmem>>, vector<1x1x1x1x8x2xbf16>
    %134 = vector.shape_cast %133 : vector<1x1x1x1x8x2xbf16> to vector<8x2xbf16>
    %135 = arith.extf %134 : vector<8x2xbf16> to vector<8x2xf32>
    %136 = arith.addf %126, %132 : vector<8x2xf32>
    %137 = arith.addf %129, %135 : vector<8x2xf32>
    %138 = arith.addf %136, %137 : vector<8x2xf32>
    %cst_155 = arith.constant 2.500000e-01 : f32
    %139 = vector.broadcast %cst_155 : f32 to vector<8x2xf32>
    %140 = arith.mulf %139, %138 : vector<8x2xf32>
    %141 = arith.truncf %140 : vector<8x2xf32> to vector<8x2xbf16>
    %c1_156 = arith.constant 1 : index
    %c9 = arith.constant 9 : index
    %c0_157 = arith.constant 0 : index
    %142 = vector.load %arg13[%c1_156, %c9, %c0_157] : memref<4x28x2xbf16, #tpu.memory_space<vmem>>, vector<1x8x2xbf16>
    %143 = vector.shape_cast %142 : vector<1x8x2xbf16> to vector<8x2xbf16>
    %144 = vector.shape_cast %141 : vector<8x2xbf16> to vector<1x8x2xbf16>
    tpu.vector_store %arg13[%c1_156, %c9, %c0_157], %144 {strides = array<i32>} : memref<4x28x2xbf16, #tpu.memory_space<vmem>>, vector<1x8x2xbf16>,
    %145 = vector.extract_strided_slice %136 {offsets = [1, 0], sizes = [7, 2], strides = [1, 1]} : vector<8x2xf32> to vector<7x2xf32>
    %146 = vector.extract_strided_slice %137 {offsets = [0, 0], sizes = [7, 2], strides = [1, 1]} : vector<8x2xf32> to vector<7x2xf32>
    %147 = arith.addf %145, %146 : vector<7x2xf32>
    %cst_158 = arith.constant 2.500000e-01 : f32
    %148 = vector.broadcast %cst_158 : f32 to vector<7x2xf32>
    %149 = arith.mulf %148, %147 : vector<7x2xf32>
    %150 = arith.truncf %149 : vector<7x2xf32> to vector<7x2xbf16>
    %c0_159 = arith.constant 0 : index
    %c10 = arith.constant 10 : index
    %c0_160 = arith.constant 0 : index
    %151 = vector.load %arg13[%c0_159, %c10, %c0_160] : memref<4x28x2xbf16, #tpu.memory_space<vmem>>, vector<1x7x2xbf16>
    %152 = vector.shape_cast %151 : vector<1x7x2xbf16> to vector<7x2xbf16>
    %153 = vector.shape_cast %150 : vector<7x2xbf16> to vector<1x7x2xbf16>
    tpu.vector_store %arg13[%c0_159, %c10, %c0_160], %153 {strides = array<i32>} : memref<4x28x2xbf16, #tpu.memory_space<vmem>>, vector<1x7x2xbf16>,
    %c0_161 = arith.constant 0 : index
    %c1_162 = arith.constant 1 : index
    %c0_163 = arith.constant 0 : index
    %c0_164 = arith.constant 0 : index
    %c0_165 = arith.constant 0 : index
    %c0_166 = arith.constant 0 : index
    %154 = vector.load %arg5[%c0_161, %c1_162, %c0_163, %c0_164, %c0_165, %c0_166] : memref<1x2x2x2x8x2xbf16, #tpu.memory_space<vmem>>, vector<1x1x1x1x8x2xbf16>
    %155 = vector.shape_cast %154 : vector<1x1x1x1x8x2xbf16> to vector<8x2xbf16>
    %156 = arith.extf %155 : vector<8x2xbf16> to vector<8x2xf32>
    %c0_167 = arith.constant 0 : index
    %c1_168 = arith.constant 1 : index
    %c1_169 = arith.constant 1 : index
    %c0_170 = arith.constant 0 : index
    %c0_171 = arith.constant 0 : index
    %c0_172 = arith.constant 0 : index
    %157 = vector.load %arg5[%c0_167, %c1_168, %c1_169, %c0_170, %c0_171, %c0_172] : memref<1x2x2x2x8x2xbf16, #tpu.memory_space<vmem>>, vector<1x1x1x1x8x2xbf16>
    %158 = vector.shape_cast %157 : vector<1x1x1x1x8x2xbf16> to vector<8x2xbf16>
    %159 = arith.extf %158 : vector<8x2xbf16> to vector<8x2xf32>
    %c0_173 = arith.constant 0 : index
    %c0_174 = arith.constant 0 : index
    %c0_175 = arith.constant 0 : index
    %c1_176 = arith.constant 1 : index
    %c0_177 = arith.constant 0 : index
    %c0_178 = arith.constant 0 : index
    %160 = vector.load %arg5[%c0_173, %c0_174, %c0_175, %c1_176, %c0_177, %c0_178] : memref<1x2x2x2x8x2xbf16, #tpu.memory_space<vmem>>, vector<1x1x1x1x8x2xbf16>
    %161 = vector.shape_cast %160 : vector<1x1x1x1x8x2xbf16> to vector<8x2xbf16>
    %162 = arith.extf %161 : vector<8x2xbf16> to vector<8x2xf32>
    %c0_179 = arith.constant 0 : index
    %c0_180 = arith.constant 0 : index
    %c1_181 = arith.constant 1 : index
    %c1_182 = arith.constant 1 : index
    %c0_183 = arith.constant 0 : index
    %c0_184 = arith.constant 0 : index
    %163 = vector.load %arg5[%c0_179, %c0_180, %c1_181, %c1_182, %c0_183, %c0_184] : memref<1x2x2x2x8x2xbf16, #tpu.memory_space<vmem>>, vector<1x1x1x1x8x2xbf16>
    %164 = vector.shape_cast %163 : vector<1x1x1x1x8x2xbf16> to vector<8x2xbf16>
    %165 = arith.extf %164 : vector<8x2xbf16> to vector<8x2xf32>
    %166 = arith.addf %156, %162 : vector<8x2xf32>
    %167 = arith.addf %159, %165 : vector<8x2xf32>
    %168 = arith.addf %166, %167 : vector<8x2xf32>
    %cst_185 = arith.constant 2.500000e-01 : f32
    %169 = vector.broadcast %cst_185 : f32 to vector<8x2xf32>
    %170 = arith.mulf %169, %168 : vector<8x2xf32>
    %171 = arith.truncf %170 : vector<8x2xf32> to vector<8x2xbf16>
    %c1_186 = arith.constant 1 : index
    %c9_187 = arith.constant 9 : index
    %c0_188 = arith.constant 0 : index
    %172 = vector.load %arg14[%c1_186, %c9_187, %c0_188] : memref<4x28x2xbf16, #tpu.memory_space<vmem>>, vector<1x8x2xbf16>
    %173 = vector.shape_cast %172 : vector<1x8x2xbf16> to vector<8x2xbf16>
    %174 = vector.shape_cast %171 : vector<8x2xbf16> to vector<1x8x2xbf16>
    tpu.vector_store %arg14[%c1_186, %c9_187, %c0_188], %174 {strides = array<i32>} : memref<4x28x2xbf16, #tpu.memory_space<vmem>>, vector<1x8x2xbf16>,
    %175 = vector.extract_strided_slice %166 {offsets = [1, 0], sizes = [7, 2], strides = [1, 1]} : vector<8x2xf32> to vector<7x2xf32>
    %176 = vector.extract_strided_slice %167 {offsets = [0, 0], sizes = [7, 2], strides = [1, 1]} : vector<8x2xf32> to vector<7x2xf32>
    %177 = arith.addf %175, %176 : vector<7x2xf32>
    %cst_189 = arith.constant 2.500000e-01 : f32
    %178 = vector.broadcast %cst_189 : f32 to vector<7x2xf32>
    %179 = arith.mulf %178, %177 : vector<7x2xf32>
    %180 = arith.truncf %179 : vector<7x2xf32> to vector<7x2xbf16>
    %c0_190 = arith.constant 0 : index
    %c10_191 = arith.constant 10 : index
    %c0_192 = arith.constant 0 : index
    %181 = vector.load %arg14[%c0_190, %c10_191, %c0_192] : memref<4x28x2xbf16, #tpu.memory_space<vmem>>, vector<1x7x2xbf16>
    %182 = vector.shape_cast %181 : vector<1x7x2xbf16> to vector<7x2xbf16>
    %183 = vector.shape_cast %180 : vector<7x2xbf16> to vector<1x7x2xbf16>
    tpu.vector_store %arg14[%c0_190, %c10_191, %c0_192], %183 {strides = array<i32>} : memref<4x28x2xbf16, #tpu.memory_space<vmem>>, vector<1x7x2xbf16>,
    %c0_193 = arith.constant 0 : index
    %c0_194 = arith.constant 0 : index
    %c0_195 = arith.constant 0 : index
    %c1_196 = arith.constant 1 : index
    %c0_197 = arith.constant 0 : index
    %c0_198 = arith.constant 0 : index
    %184 = vector.load %arg2[%c0_193, %c0_194, %c0_195, %c1_196, %c0_197, %c0_198] : memref<1x2x2x2x8x2xbf16, #tpu.memory_space<vmem>>, vector<1x1x1x1x8x2xbf16>
    %185 = vector.shape_cast %184 : vector<1x1x1x1x8x2xbf16> to vector<8x2xbf16>
    %186 = arith.extf %185 : vector<8x2xbf16> to vector<8x2xf32>
    %c0_199 = arith.constant 0 : index
    %c0_200 = arith.constant 0 : index
    %c1_201 = arith.constant 1 : index
    %c1_202 = arith.constant 1 : index
    %c0_203 = arith.constant 0 : index
    %c0_204 = arith.constant 0 : index
    %187 = vector.load %arg2[%c0_199, %c0_200, %c1_201, %c1_202, %c0_203, %c0_204] : memref<1x2x2x2x8x2xbf16, #tpu.memory_space<vmem>>, vector<1x1x1x1x8x2xbf16>
    %188 = vector.shape_cast %187 : vector<1x1x1x1x8x2xbf16> to vector<8x2xbf16>
    %189 = arith.extf %188 : vector<8x2xbf16> to vector<8x2xf32>
    %c0_205 = arith.constant 0 : index
    %c1_206 = arith.constant 1 : index
    %c0_207 = arith.constant 0 : index
    %c1_208 = arith.constant 1 : index
    %c0_209 = arith.constant 0 : index
    %c0_210 = arith.constant 0 : index
    %190 = vector.load %arg2[%c0_205, %c1_206, %c0_207, %c1_208, %c0_209, %c0_210] : memref<1x2x2x2x8x2xbf16, #tpu.memory_space<vmem>>, vector<1x1x1x1x8x2xbf16>
    %191 = vector.shape_cast %190 : vector<1x1x1x1x8x2xbf16> to vector<8x2xbf16>
    %192 = arith.extf %191 : vector<8x2xbf16> to vector<8x2xf32>
    %c0_211 = arith.constant 0 : index
    %c1_212 = arith.constant 1 : index
    %c1_213 = arith.constant 1 : index
    %c1_214 = arith.constant 1 : index
    %c0_215 = arith.constant 0 : index
    %c0_216 = arith.constant 0 : index
    %193 = vector.load %arg2[%c0_211, %c1_212, %c1_213, %c1_214, %c0_215, %c0_216] : memref<1x2x2x2x8x2xbf16, #tpu.memory_space<vmem>>, vector<1x1x1x1x8x2xbf16>
    %194 = vector.shape_cast %193 : vector<1x1x1x1x8x2xbf16> to vector<8x2xbf16>
    %195 = arith.extf %194 : vector<8x2xbf16> to vector<8x2xf32>
    %196 = arith.addf %186, %192 : vector<8x2xf32>
    %197 = arith.addf %189, %195 : vector<8x2xf32>
    %198 = arith.addf %196, %197 : vector<8x2xf32>
    %cst_217 = arith.constant 2.500000e-01 : f32
    %199 = vector.broadcast %cst_217 : f32 to vector<8x2xf32>
    %200 = arith.mulf %199, %198 : vector<8x2xf32>
    %201 = arith.truncf %200 : vector<8x2xf32> to vector<8x2xbf16>
    %c3_218 = arith.constant 3 : index
    %c9_219 = arith.constant 9 : index
    %c0_220 = arith.constant 0 : index
    %202 = vector.load %arg13[%c3_218, %c9_219, %c0_220] : memref<4x28x2xbf16, #tpu.memory_space<vmem>>, vector<1x8x2xbf16>
    %203 = vector.shape_cast %202 : vector<1x8x2xbf16> to vector<8x2xbf16>
    %204 = vector.shape_cast %201 : vector<8x2xbf16> to vector<1x8x2xbf16>
    tpu.vector_store %arg13[%c3_218, %c9_219, %c0_220], %204 {strides = array<i32>} : memref<4x28x2xbf16, #tpu.memory_space<vmem>>, vector<1x8x2xbf16>,
    %205 = vector.extract_strided_slice %196 {offsets = [1, 0], sizes = [7, 2], strides = [1, 1]} : vector<8x2xf32> to vector<7x2xf32>
    %206 = vector.extract_strided_slice %197 {offsets = [0, 0], sizes = [7, 2], strides = [1, 1]} : vector<8x2xf32> to vector<7x2xf32>
    %207 = arith.addf %205, %206 : vector<7x2xf32>
    %cst_221 = arith.constant 2.500000e-01 : f32
    %208 = vector.broadcast %cst_221 : f32 to vector<7x2xf32>
    %209 = arith.mulf %208, %207 : vector<7x2xf32>
    %210 = arith.truncf %209 : vector<7x2xf32> to vector<7x2xbf16>
    %c2_222 = arith.constant 2 : index
    %c10_223 = arith.constant 10 : index
    %c0_224 = arith.constant 0 : index
    %211 = vector.load %arg13[%c2_222, %c10_223, %c0_224] : memref<4x28x2xbf16, #tpu.memory_space<vmem>>, vector<1x7x2xbf16>
    %212 = vector.shape_cast %211 : vector<1x7x2xbf16> to vector<7x2xbf16>
    %213 = vector.shape_cast %210 : vector<7x2xbf16> to vector<1x7x2xbf16>
    tpu.vector_store %arg13[%c2_222, %c10_223, %c0_224], %213 {strides = array<i32>} : memref<4x28x2xbf16, #tpu.memory_space<vmem>>, vector<1x7x2xbf16>,
    %c0_225 = arith.constant 0 : index
    %c0_226 = arith.constant 0 : index
    %c0_227 = arith.constant 0 : index
    %c1_228 = arith.constant 1 : index
    %c0_229 = arith.constant 0 : index
    %c0_230 = arith.constant 0 : index
    %214 = vector.load %arg5[%c0_225, %c0_226, %c0_227, %c1_228, %c0_229, %c0_230] : memref<1x2x2x2x8x2xbf16, #tpu.memory_space<vmem>>, vector<1x1x1x1x8x2xbf16>
    %215 = vector.shape_cast %214 : vector<1x1x1x1x8x2xbf16> to vector<8x2xbf16>
    %216 = arith.extf %215 : vector<8x2xbf16> to vector<8x2xf32>
    %c0_231 = arith.constant 0 : index
    %c0_232 = arith.constant 0 : index
    %c1_233 = arith.constant 1 : index
    %c1_234 = arith.constant 1 : index
    %c0_235 = arith.constant 0 : index
    %c0_236 = arith.constant 0 : index
    %217 = vector.load %arg5[%c0_231, %c0_232, %c1_233, %c1_234, %c0_235, %c0_236] : memref<1x2x2x2x8x2xbf16, #tpu.memory_space<vmem>>, vector<1x1x1x1x8x2xbf16>
    %218 = vector.shape_cast %217 : vector<1x1x1x1x8x2xbf16> to vector<8x2xbf16>
    %219 = arith.extf %218 : vector<8x2xbf16> to vector<8x2xf32>
    %c0_237 = arith.constant 0 : index
    %c1_238 = arith.constant 1 : index
    %c0_239 = arith.constant 0 : index
    %c1_240 = arith.constant 1 : index
    %c0_241 = arith.constant 0 : index
    %c0_242 = arith.constant 0 : index
    %220 = vector.load %arg5[%c0_237, %c1_238, %c0_239, %c1_240, %c0_241, %c0_242] : memref<1x2x2x2x8x2xbf16, #tpu.memory_space<vmem>>, vector<1x1x1x1x8x2xbf16>
    %221 = vector.shape_cast %220 : vector<1x1x1x1x8x2xbf16> to vector<8x2xbf16>
    %222 = arith.extf %221 : vector<8x2xbf16> to vector<8x2xf32>
    %c0_243 = arith.constant 0 : index
    %c1_244 = arith.constant 1 : index
    %c1_245 = arith.constant 1 : index
    %c1_246 = arith.constant 1 : index
    %c0_247 = arith.constant 0 : index
    %c0_248 = arith.constant 0 : index
    %223 = vector.load %arg5[%c0_243, %c1_244, %c1_245, %c1_246, %c0_247, %c0_248] : memref<1x2x2x2x8x2xbf16, #tpu.memory_space<vmem>>, vector<1x1x1x1x8x2xbf16>
    %224 = vector.shape_cast %223 : vector<1x1x1x1x8x2xbf16> to vector<8x2xbf16>
    %225 = arith.extf %224 : vector<8x2xbf16> to vector<8x2xf32>
    %226 = arith.addf %216, %222 : vector<8x2xf32>
    %227 = arith.addf %219, %225 : vector<8x2xf32>
    %228 = arith.addf %226, %227 : vector<8x2xf32>
    %cst_249 = arith.constant 2.500000e-01 : f32
    %229 = vector.broadcast %cst_249 : f32 to vector<8x2xf32>
    %230 = arith.mulf %229, %228 : vector<8x2xf32>
    %231 = arith.truncf %230 : vector<8x2xf32> to vector<8x2xbf16>
    %c3_250 = arith.constant 3 : index
    %c9_251 = arith.constant 9 : index
    %c0_252 = arith.constant 0 : index
    %232 = vector.load %arg14[%c3_250, %c9_251, %c0_252] : memref<4x28x2xbf16, #tpu.memory_space<vmem>>, vector<1x8x2xbf16>
    %233 = vector.shape_cast %232 : vector<1x8x2xbf16> to vector<8x2xbf16>
    %234 = vector.shape_cast %231 : vector<8x2xbf16> to vector<1x8x2xbf16>
    tpu.vector_store %arg14[%c3_250, %c9_251, %c0_252], %234 {strides = array<i32>} : memref<4x28x2xbf16, #tpu.memory_space<vmem>>, vector<1x8x2xbf16>,
    %235 = vector.extract_strided_slice %226 {offsets = [1, 0], sizes = [7, 2], strides = [1, 1]} : vector<8x2xf32> to vector<7x2xf32>
    %236 = vector.extract_strided_slice %227 {offsets = [0, 0], sizes = [7, 2], strides = [1, 1]} : vector<8x2xf32> to vector<7x2xf32>
    %237 = arith.addf %235, %236 : vector<7x2xf32>
    %cst_253 = arith.constant 2.500000e-01 : f32
    %238 = vector.broadcast %cst_253 : f32 to vector<7x2xf32>
    %239 = arith.mulf %238, %237 : vector<7x2xf32>
    %240 = arith.truncf %239 : vector<7x2xf32> to vector<7x2xbf16>
    %c2_254 = arith.constant 2 : index
    %c10_255 = arith.constant 10 : index
    %c0_256 = arith.constant 0 : index
    %241 = vector.load %arg14[%c2_254, %c10_255, %c0_256] : memref<4x28x2xbf16, #tpu.memory_space<vmem>>, vector<1x7x2xbf16>
    %242 = vector.shape_cast %241 : vector<1x7x2xbf16> to vector<7x2xbf16>
    %243 = vector.shape_cast %240 : vector<7x2xbf16> to vector<1x7x2xbf16>
    tpu.vector_store %arg14[%c2_254, %c10_255, %c0_256], %243 {strides = array<i32>} : memref<4x28x2xbf16, #tpu.memory_space<vmem>>, vector<1x7x2xbf16>,
    %c0_257 = arith.constant 0 : index
    %c1_258 = arith.constant 1 : index
    %c0_259 = arith.constant 0 : index
    %c1_260 = arith.constant 1 : index
    %c0_261 = arith.constant 0 : index
    %c0_262 = arith.constant 0 : index
    %244 = vector.load %arg2[%c0_257, %c1_258, %c0_259, %c1_260, %c0_261, %c0_262] : memref<1x2x2x2x8x2xbf16, #tpu.memory_space<vmem>>, vector<1x1x1x1x8x2xbf16>
    %245 = vector.shape_cast %244 : vector<1x1x1x1x8x2xbf16> to vector<8x2xbf16>
    %246 = arith.extf %245 : vector<8x2xbf16> to vector<8x2xf32>
    %c0_263 = arith.constant 0 : index
    %c1_264 = arith.constant 1 : index
    %c1_265 = arith.constant 1 : index
    %c1_266 = arith.constant 1 : index
    %c0_267 = arith.constant 0 : index
    %c0_268 = arith.constant 0 : index
    %247 = vector.load %arg2[%c0_263, %c1_264, %c1_265, %c1_266, %c0_267, %c0_268] : memref<1x2x2x2x8x2xbf16, #tpu.memory_space<vmem>>, vector<1x1x1x1x8x2xbf16>
    %248 = vector.shape_cast %247 : vector<1x1x1x1x8x2xbf16> to vector<8x2xbf16>
    %249 = arith.extf %248 : vector<8x2xbf16> to vector<8x2xf32>
    %c0_269 = arith.constant 0 : index
    %c0_270 = arith.constant 0 : index
    %c0_271 = arith.constant 0 : index
    %c0_272 = arith.constant 0 : index
    %c0_273 = arith.constant 0 : index
    %c0_274 = arith.constant 0 : index
    %250 = vector.load %arg4[%c0_269, %c0_270, %c0_271, %c0_272, %c0_273, %c0_274] : memref<1x2x2x1x8x2xbf16, #tpu.memory_space<vmem>>, vector<1x1x1x1x8x2xbf16>
    %251 = vector.shape_cast %250 : vector<1x1x1x1x8x2xbf16> to vector<8x2xbf16>
    %252 = arith.extf %251 : vector<8x2xbf16> to vector<8x2xf32>
    %c0_275 = arith.constant 0 : index
    %c0_276 = arith.constant 0 : index
    %c1_277 = arith.constant 1 : index
    %c0_278 = arith.constant 0 : index
    %c0_279 = arith.constant 0 : index
    %c0_280 = arith.constant 0 : index
    %253 = vector.load %arg4[%c0_275, %c0_276, %c1_277, %c0_278, %c0_279, %c0_280] : memref<1x2x2x1x8x2xbf16, #tpu.memory_space<vmem>>, vector<1x1x1x1x8x2xbf16>
    %254 = vector.shape_cast %253 : vector<1x1x1x1x8x2xbf16> to vector<8x2xbf16>
    %255 = arith.extf %254 : vector<8x2xbf16> to vector<8x2xf32>
    %256 = arith.addf %246, %252 : vector<8x2xf32>
    %257 = arith.addf %249, %255 : vector<8x2xf32>
    %258 = arith.addf %256, %257 : vector<8x2xf32>
    %cst_281 = arith.constant 2.500000e-01 : f32
    %259 = vector.broadcast %cst_281 : f32 to vector<8x2xf32>
    %260 = arith.mulf %259, %258 : vector<8x2xf32>
    %261 = arith.truncf %260 : vector<8x2xf32> to vector<8x2xbf16>
    %c1_282 = arith.constant 1 : index
    %c18 = arith.constant 18 : index
    %c0_283 = arith.constant 0 : index
    %262 = vector.load %arg13[%c1_282, %c18, %c0_283] : memref<4x28x2xbf16, #tpu.memory_space<vmem>>, vector<1x8x2xbf16>
    %263 = vector.shape_cast %262 : vector<1x8x2xbf16> to vector<8x2xbf16>
    %264 = vector.shape_cast %261 : vector<8x2xbf16> to vector<1x8x2xbf16>
    tpu.vector_store %arg13[%c1_282, %c18, %c0_283], %264 {strides = array<i32>} : memref<4x28x2xbf16, #tpu.memory_space<vmem>>, vector<1x8x2xbf16>,
    %265 = vector.extract_strided_slice %256 {offsets = [1, 0], sizes = [7, 2], strides = [1, 1]} : vector<8x2xf32> to vector<7x2xf32>
    %266 = vector.extract_strided_slice %257 {offsets = [0, 0], sizes = [7, 2], strides = [1, 1]} : vector<8x2xf32> to vector<7x2xf32>
    %267 = arith.addf %265, %266 : vector<7x2xf32>
    %cst_284 = arith.constant 2.500000e-01 : f32
    %268 = vector.broadcast %cst_284 : f32 to vector<7x2xf32>
    %269 = arith.mulf %268, %267 : vector<7x2xf32>
    %270 = arith.truncf %269 : vector<7x2xf32> to vector<7x2xbf16>
    %c0_285 = arith.constant 0 : index
    %c19 = arith.constant 19 : index
    %c0_286 = arith.constant 0 : index
    %271 = vector.load %arg13[%c0_285, %c19, %c0_286] : memref<4x28x2xbf16, #tpu.memory_space<vmem>>, vector<1x7x2xbf16>
    %272 = vector.shape_cast %271 : vector<1x7x2xbf16> to vector<7x2xbf16>
    %273 = vector.shape_cast %270 : vector<7x2xbf16> to vector<1x7x2xbf16>
    tpu.vector_store %arg13[%c0_285, %c19, %c0_286], %273 {strides = array<i32>} : memref<4x28x2xbf16, #tpu.memory_space<vmem>>, vector<1x7x2xbf16>,
    %c0_287 = arith.constant 0 : index
    %c1_288 = arith.constant 1 : index
    %c0_289 = arith.constant 0 : index
    %c1_290 = arith.constant 1 : index
    %c0_291 = arith.constant 0 : index
    %c0_292 = arith.constant 0 : index
    %274 = vector.load %arg5[%c0_287, %c1_288, %c0_289, %c1_290, %c0_291, %c0_292] : memref<1x2x2x2x8x2xbf16, #tpu.memory_space<vmem>>, vector<1x1x1x1x8x2xbf16>
    %275 = vector.shape_cast %274 : vector<1x1x1x1x8x2xbf16> to vector<8x2xbf16>
    %276 = arith.extf %275 : vector<8x2xbf16> to vector<8x2xf32>
    %c0_293 = arith.constant 0 : index
    %c1_294 = arith.constant 1 : index
    %c1_295 = arith.constant 1 : index
    %c1_296 = arith.constant 1 : index
    %c0_297 = arith.constant 0 : index
    %c0_298 = arith.constant 0 : index
    %277 = vector.load %arg5[%c0_293, %c1_294, %c1_295, %c1_296, %c0_297, %c0_298] : memref<1x2x2x2x8x2xbf16, #tpu.memory_space<vmem>>, vector<1x1x1x1x8x2xbf16>
    %278 = vector.shape_cast %277 : vector<1x1x1x1x8x2xbf16> to vector<8x2xbf16>
    %279 = arith.extf %278 : vector<8x2xbf16> to vector<8x2xf32>
    %c0_299 = arith.constant 0 : index
    %c0_300 = arith.constant 0 : index
    %c0_301 = arith.constant 0 : index
    %c0_302 = arith.constant 0 : index
    %c0_303 = arith.constant 0 : index
    %c0_304 = arith.constant 0 : index
    %280 = vector.load %arg7[%c0_299, %c0_300, %c0_301, %c0_302, %c0_303, %c0_304] : memref<1x2x2x1x8x2xbf16, #tpu.memory_space<vmem>>, vector<1x1x1x1x8x2xbf16>
    %281 = vector.shape_cast %280 : vector<1x1x1x1x8x2xbf16> to vector<8x2xbf16>
    %282 = arith.extf %281 : vector<8x2xbf16> to vector<8x2xf32>
    %c0_305 = arith.constant 0 : index
    %c0_306 = arith.constant 0 : index
    %c1_307 = arith.constant 1 : index
    %c0_308 = arith.constant 0 : index
    %c0_309 = arith.constant 0 : index
    %c0_310 = arith.constant 0 : index
    %283 = vector.load %arg7[%c0_305, %c0_306, %c1_307, %c0_308, %c0_309, %c0_310] : memref<1x2x2x1x8x2xbf16, #tpu.memory_space<vmem>>, vector<1x1x1x1x8x2xbf16>
    %284 = vector.shape_cast %283 : vector<1x1x1x1x8x2xbf16> to vector<8x2xbf16>
    %285 = arith.extf %284 : vector<8x2xbf16> to vector<8x2xf32>
    %286 = arith.addf %276, %282 : vector<8x2xf32>
    %287 = arith.addf %279, %285 : vector<8x2xf32>
    %288 = arith.addf %286, %287 : vector<8x2xf32>
    %cst_311 = arith.constant 2.500000e-01 : f32
    %289 = vector.broadcast %cst_311 : f32 to vector<8x2xf32>
    %290 = arith.mulf %289, %288 : vector<8x2xf32>
    %291 = arith.truncf %290 : vector<8x2xf32> to vector<8x2xbf16>
    %c1_312 = arith.constant 1 : index
    %c18_313 = arith.constant 18 : index
    %c0_314 = arith.constant 0 : index
    %292 = vector.load %arg14[%c1_312, %c18_313, %c0_314] : memref<4x28x2xbf16, #tpu.memory_space<vmem>>, vector<1x8x2xbf16>
    %293 = vector.shape_cast %292 : vector<1x8x2xbf16> to vector<8x2xbf16>
    %294 = vector.shape_cast %291 : vector<8x2xbf16> to vector<1x8x2xbf16>
    tpu.vector_store %arg14[%c1_312, %c18_313, %c0_314], %294 {strides = array<i32>} : memref<4x28x2xbf16, #tpu.memory_space<vmem>>, vector<1x8x2xbf16>,
    %295 = vector.extract_strided_slice %286 {offsets = [1, 0], sizes = [7, 2], strides = [1, 1]} : vector<8x2xf32> to vector<7x2xf32>
    %296 = vector.extract_strided_slice %287 {offsets = [0, 0], sizes = [7, 2], strides = [1, 1]} : vector<8x2xf32> to vector<7x2xf32>
    %297 = arith.addf %295, %296 : vector<7x2xf32>
    %cst_315 = arith.constant 2.500000e-01 : f32
    %298 = vector.broadcast %cst_315 : f32 to vector<7x2xf32>
    %299 = arith.mulf %298, %297 : vector<7x2xf32>
    %300 = arith.truncf %299 : vector<7x2xf32> to vector<7x2xbf16>
    %c0_316 = arith.constant 0 : index
    %c19_317 = arith.constant 19 : index
    %c0_318 = arith.constant 0 : index
    %301 = vector.load %arg14[%c0_316, %c19_317, %c0_318] : memref<4x28x2xbf16, #tpu.memory_space<vmem>>, vector<1x7x2xbf16>
    %302 = vector.shape_cast %301 : vector<1x7x2xbf16> to vector<7x2xbf16>
    %303 = vector.shape_cast %300 : vector<7x2xbf16> to vector<1x7x2xbf16>
    tpu.vector_store %arg14[%c0_316, %c19_317, %c0_318], %303 {strides = array<i32>} : memref<4x28x2xbf16, #tpu.memory_space<vmem>>, vector<1x7x2xbf16>,
    %c0_319 = arith.constant 0 : index
    %c0_320 = arith.constant 0 : index
    %c0_321 = arith.constant 0 : index
    %c0_322 = arith.constant 0 : index
    %c0_323 = arith.constant 0 : index
    %c0_324 = arith.constant 0 : index
    %304 = vector.load %arg4[%c0_319, %c0_320, %c0_321, %c0_322, %c0_323, %c0_324] : memref<1x2x2x1x8x2xbf16, #tpu.memory_space<vmem>>, vector<1x1x1x1x8x2xbf16>
    %305 = vector.shape_cast %304 : vector<1x1x1x1x8x2xbf16> to vector<8x2xbf16>
    %306 = arith.extf %305 : vector<8x2xbf16> to vector<8x2xf32>
    %c0_325 = arith.constant 0 : index
    %c0_326 = arith.constant 0 : index
    %c1_327 = arith.constant 1 : index
    %c0_328 = arith.constant 0 : index
    %c0_329 = arith.constant 0 : index
    %c0_330 = arith.constant 0 : index
    %307 = vector.load %arg4[%c0_325, %c0_326, %c1_327, %c0_328, %c0_329, %c0_330] : memref<1x2x2x1x8x2xbf16, #tpu.memory_space<vmem>>, vector<1x1x1x1x8x2xbf16>
    %308 = vector.shape_cast %307 : vector<1x1x1x1x8x2xbf16> to vector<8x2xbf16>
    %309 = arith.extf %308 : vector<8x2xbf16> to vector<8x2xf32>
    %c0_331 = arith.constant 0 : index
    %c1_332 = arith.constant 1 : index
    %c0_333 = arith.constant 0 : index
    %c0_334 = arith.constant 0 : index
    %c0_335 = arith.constant 0 : index
    %c0_336 = arith.constant 0 : index
    %310 = vector.load %arg4[%c0_331, %c1_332, %c0_333, %c0_334, %c0_335, %c0_336] : memref<1x2x2x1x8x2xbf16, #tpu.memory_space<vmem>>, vector<1x1x1x1x8x2xbf16>
    %311 = vector.shape_cast %310 : vector<1x1x1x1x8x2xbf16> to vector<8x2xbf16>
    %312 = arith.extf %311 : vector<8x2xbf16> to vector<8x2xf32>
    %c0_337 = arith.constant 0 : index
    %c1_338 = arith.constant 1 : index
    %c1_339 = arith.constant 1 : index
    %c0_340 = arith.constant 0 : index
    %c0_341 = arith.constant 0 : index
    %c0_342 = arith.constant 0 : index
    %313 = vector.load %arg4[%c0_337, %c1_338, %c1_339, %c0_340, %c0_341, %c0_342] : memref<1x2x2x1x8x2xbf16, #tpu.memory_space<vmem>>, vector<1x1x1x1x8x2xbf16>
    %314 = vector.shape_cast %313 : vector<1x1x1x1x8x2xbf16> to vector<8x2xbf16>
    %315 = arith.extf %314 : vector<8x2xbf16> to vector<8x2xf32>
    %316 = arith.addf %306, %312 : vector<8x2xf32>
    %317 = arith.addf %309, %315 : vector<8x2xf32>
    %318 = arith.addf %316, %317 : vector<8x2xf32>
    %cst_343 = arith.constant 2.500000e-01 : f32
    %319 = vector.broadcast %cst_343 : f32 to vector<8x2xf32>
    %320 = arith.mulf %319, %318 : vector<8x2xf32>
    %321 = arith.truncf %320 : vector<8x2xf32> to vector<8x2xbf16>
    %c3_344 = arith.constant 3 : index
    %c18_345 = arith.constant 18 : index
    %c0_346 = arith.constant 0 : index
    %322 = vector.load %arg13[%c3_344, %c18_345, %c0_346] : memref<4x28x2xbf16, #tpu.memory_space<vmem>>, vector<1x8x2xbf16>
    %323 = vector.shape_cast %322 : vector<1x8x2xbf16> to vector<8x2xbf16>
    %324 = vector.shape_cast %321 : vector<8x2xbf16> to vector<1x8x2xbf16>
    tpu.vector_store %arg13[%c3_344, %c18_345, %c0_346], %324 {strides = array<i32>} : memref<4x28x2xbf16, #tpu.memory_space<vmem>>, vector<1x8x2xbf16>,
    %325 = vector.extract_strided_slice %316 {offsets = [1, 0], sizes = [7, 2], strides = [1, 1]} : vector<8x2xf32> to vector<7x2xf32>
    %326 = vector.extract_strided_slice %317 {offsets = [0, 0], sizes = [7, 2], strides = [1, 1]} : vector<8x2xf32> to vector<7x2xf32>
    %327 = arith.addf %325, %326 : vector<7x2xf32>
    %cst_347 = arith.constant 2.500000e-01 : f32
    %328 = vector.broadcast %cst_347 : f32 to vector<7x2xf32>
    %329 = arith.mulf %328, %327 : vector<7x2xf32>
    %330 = arith.truncf %329 : vector<7x2xf32> to vector<7x2xbf16>
    %c2_348 = arith.constant 2 : index
    %c19_349 = arith.constant 19 : index
    %c0_350 = arith.constant 0 : index
    %331 = vector.load %arg13[%c2_348, %c19_349, %c0_350] : memref<4x28x2xbf16, #tpu.memory_space<vmem>>, vector<1x7x2xbf16>
    %332 = vector.shape_cast %331 : vector<1x7x2xbf16> to vector<7x2xbf16>
    %333 = vector.shape_cast %330 : vector<7x2xbf16> to vector<1x7x2xbf16>
    tpu.vector_store %arg13[%c2_348, %c19_349, %c0_350], %333 {strides = array<i32>} : memref<4x28x2xbf16, #tpu.memory_space<vmem>>, vector<1x7x2xbf16>,
    %c0_351 = arith.constant 0 : index
    %c0_352 = arith.constant 0 : index
    %c0_353 = arith.constant 0 : index
    %c0_354 = arith.constant 0 : index
    %c0_355 = arith.constant 0 : index
    %c0_356 = arith.constant 0 : index
    %334 = vector.load %arg7[%c0_351, %c0_352, %c0_353, %c0_354, %c0_355, %c0_356] : memref<1x2x2x1x8x2xbf16, #tpu.memory_space<vmem>>, vector<1x1x1x1x8x2xbf16>
    %335 = vector.shape_cast %334 : vector<1x1x1x1x8x2xbf16> to vector<8x2xbf16>
    %336 = arith.extf %335 : vector<8x2xbf16> to vector<8x2xf32>
    %c0_357 = arith.constant 0 : index
    %c0_358 = arith.constant 0 : index
    %c1_359 = arith.constant 1 : index
    %c0_360 = arith.constant 0 : index
    %c0_361 = arith.constant 0 : index
    %c0_362 = arith.constant 0 : index
    %337 = vector.load %arg7[%c0_357, %c0_358, %c1_359, %c0_360, %c0_361, %c0_362] : memref<1x2x2x1x8x2xbf16, #tpu.memory_space<vmem>>, vector<1x1x1x1x8x2xbf16>
    %338 = vector.shape_cast %337 : vector<1x1x1x1x8x2xbf16> to vector<8x2xbf16>
    %339 = arith.extf %338 : vector<8x2xbf16> to vector<8x2xf32>
    %c0_363 = arith.constant 0 : index
    %c1_364 = arith.constant 1 : index
    %c0_365 = arith.constant 0 : index
    %c0_366 = arith.constant 0 : index
    %c0_367 = arith.constant 0 : index
    %c0_368 = arith.constant 0 : index
    %340 = vector.load %arg7[%c0_363, %c1_364, %c0_365, %c0_366, %c0_367, %c0_368] : memref<1x2x2x1x8x2xbf16, #tpu.memory_space<vmem>>, vector<1x1x1x1x8x2xbf16>
    %341 = vector.shape_cast %340 : vector<1x1x1x1x8x2xbf16> to vector<8x2xbf16>
    %342 = arith.extf %341 : vector<8x2xbf16> to vector<8x2xf32>
    %c0_369 = arith.constant 0 : index
    %c1_370 = arith.constant 1 : index
    %c1_371 = arith.constant 1 : index
    %c0_372 = arith.constant 0 : index
    %c0_373 = arith.constant 0 : index
    %c0_374 = arith.constant 0 : index
    %343 = vector.load %arg7[%c0_369, %c1_370, %c1_371, %c0_372, %c0_373, %c0_374] : memref<1x2x2x1x8x2xbf16, #tpu.memory_space<vmem>>, vector<1x1x1x1x8x2xbf16>
    %344 = vector.shape_cast %343 : vector<1x1x1x1x8x2xbf16> to vector<8x2xbf16>
    %345 = arith.extf %344 : vector<8x2xbf16> to vector<8x2xf32>
    %346 = arith.addf %336, %342 : vector<8x2xf32>
    %347 = arith.addf %339, %345 : vector<8x2xf32>
    %348 = arith.addf %346, %347 : vector<8x2xf32>
    %cst_375 = arith.constant 2.500000e-01 : f32
    %349 = vector.broadcast %cst_375 : f32 to vector<8x2xf32>
    %350 = arith.mulf %349, %348 : vector<8x2xf32>
    %351 = arith.truncf %350 : vector<8x2xf32> to vector<8x2xbf16>
    %c3_376 = arith.constant 3 : index
    %c18_377 = arith.constant 18 : index
    %c0_378 = arith.constant 0 : index
    %352 = vector.load %arg14[%c3_376, %c18_377, %c0_378] : memref<4x28x2xbf16, #tpu.memory_space<vmem>>, vector<1x8x2xbf16>
    %353 = vector.shape_cast %352 : vector<1x8x2xbf16> to vector<8x2xbf16>
    %354 = vector.shape_cast %351 : vector<8x2xbf16> to vector<1x8x2xbf16>
    tpu.vector_store %arg14[%c3_376, %c18_377, %c0_378], %354 {strides = array<i32>} : memref<4x28x2xbf16, #tpu.memory_space<vmem>>, vector<1x8x2xbf16>,
    %355 = vector.extract_strided_slice %346 {offsets = [1, 0], sizes = [7, 2], strides = [1, 1]} : vector<8x2xf32> to vector<7x2xf32>
    %356 = vector.extract_strided_slice %347 {offsets = [0, 0], sizes = [7, 2], strides = [1, 1]} : vector<8x2xf32> to vector<7x2xf32>
    %357 = arith.addf %355, %356 : vector<7x2xf32>
    %cst_379 = arith.constant 2.500000e-01 : f32
    %358 = vector.broadcast %cst_379 : f32 to vector<7x2xf32>
    %359 = arith.mulf %358, %357 : vector<7x2xf32>
    %360 = arith.truncf %359 : vector<7x2xf32> to vector<7x2xbf16>
    %c2_380 = arith.constant 2 : index
    %c19_381 = arith.constant 19 : index
    %c0_382 = arith.constant 0 : index
    %361 = vector.load %arg14[%c2_380, %c19_381, %c0_382] : memref<4x28x2xbf16, #tpu.memory_space<vmem>>, vector<1x7x2xbf16>
    %362 = vector.shape_cast %361 : vector<1x7x2xbf16> to vector<7x2xbf16>
    %363 = vector.shape_cast %360 : vector<7x2xbf16> to vector<1x7x2xbf16>
    tpu.vector_store %arg14[%c2_380, %c19_381, %c0_382], %363 {strides = array<i32>} : memref<4x28x2xbf16, #tpu.memory_space<vmem>>, vector<1x7x2xbf16>,
    %c0_i32 = arith.constant 0 : i32
    %364 = arith.cmpi eq, %arg1, %c0_i32 : i32
    %365 = arith.extui %364 : i1 to i32
    %c0_i32_383 = arith.constant 0 : i32
    %366 = arith.cmpi ne, %365, %c0_i32_383 : i32
    scf.if %366 {
      %cst_497 = arith.constant 0.000000e+00 : bf16
      %491 = vector.broadcast %cst_497 : bf16 to vector<9x2xbf16>
      %c0_498 = arith.constant 0 : index
      %c0_499 = arith.constant 0 : index
      %c0_500 = arith.constant 0 : index
      %492 = vector.load %arg13[%c0_498, %c0_499, %c0_500] : memref<4x28x2xbf16, #tpu.memory_space<vmem>>, vector<1x9x2xbf16>
      %493 = vector.shape_cast %492 : vector<1x9x2xbf16> to vector<9x2xbf16>
      %494 = vector.shape_cast %491 : vector<9x2xbf16> to vector<1x9x2xbf16>
      tpu.vector_store %arg13[%c0_498, %c0_499, %c0_500], %494 {strides = array<i32>} : memref<4x28x2xbf16, #tpu.memory_space<vmem>>, vector<1x9x2xbf16>,
      %cst_501 = arith.constant 0.000000e+00 : bf16
      %495 = vector.broadcast %cst_501 : bf16 to vector<9x2xbf16>
      %c1_502 = arith.constant 1 : index
      %c0_503 = arith.constant 0 : index
      %c0_504 = arith.constant 0 : index
      %496 = vector.load %arg13[%c1_502, %c0_503, %c0_504] : memref<4x28x2xbf16, #tpu.memory_space<vmem>>, vector<1x9x2xbf16>
      %497 = vector.shape_cast %496 : vector<1x9x2xbf16> to vector<9x2xbf16>
      %498 = vector.shape_cast %495 : vector<9x2xbf16> to vector<1x9x2xbf16>
      tpu.vector_store %arg13[%c1_502, %c0_503, %c0_504], %498 {strides = array<i32>} : memref<4x28x2xbf16, #tpu.memory_space<vmem>>, vector<1x9x2xbf16>,
      %cst_505 = arith.constant -1.000260e+30 : bf16
      %499 = vector.broadcast %cst_505 : bf16 to vector<9x2xbf16>
      %c0_506 = arith.constant 0 : index
      %c0_507 = arith.constant 0 : index
      %c0_508 = arith.constant 0 : index
      %500 = vector.load %arg14[%c0_506, %c0_507, %c0_508] : memref<4x28x2xbf16, #tpu.memory_space<vmem>>, vector<1x9x2xbf16>
      %501 = vector.shape_cast %500 : vector<1x9x2xbf16> to vector<9x2xbf16>
      %502 = vector.shape_cast %499 : vector<9x2xbf16> to vector<1x9x2xbf16>
      tpu.vector_store %arg14[%c0_506, %c0_507, %c0_508], %502 {strides = array<i32>} : memref<4x28x2xbf16, #tpu.memory_space<vmem>>, vector<1x9x2xbf16>,
      %cst_509 = arith.constant -1.000260e+30 : bf16
      %503 = vector.broadcast %cst_509 : bf16 to vector<9x2xbf16>
      %c1_510 = arith.constant 1 : index
      %c0_511 = arith.constant 0 : index
      %c0_512 = arith.constant 0 : index
      %504 = vector.load %arg14[%c1_510, %c0_511, %c0_512] : memref<4x28x2xbf16, #tpu.memory_space<vmem>>, vector<1x9x2xbf16>
      %505 = vector.shape_cast %504 : vector<1x9x2xbf16> to vector<9x2xbf16>
      %506 = vector.shape_cast %503 : vector<9x2xbf16> to vector<1x9x2xbf16>
      tpu.vector_store %arg14[%c1_510, %c0_511, %c0_512], %506 {strides = array<i32>} : memref<4x28x2xbf16, #tpu.memory_space<vmem>>, vector<1x9x2xbf16>,
    } else {
    }
    %c3_i32 = arith.constant 3 : i32
    %367 = arith.cmpi eq, %arg1, %c3_i32 : i32
    %368 = arith.extui %367 : i1 to i32
    %c0_i32_384 = arith.constant 0 : i32
    %369 = arith.cmpi ne, %368, %c0_i32_384 : i32
    scf.if %369 {
      %cst_497 = arith.constant 0.000000e+00 : bf16
      %491 = vector.broadcast %cst_497 : bf16 to vector<9x2xbf16>
      %c0_498 = arith.constant 0 : index
      %c18_499 = arith.constant 18 : index
      %c0_500 = arith.constant 0 : index
      %492 = vector.load %arg13[%c0_498, %c18_499, %c0_500] : memref<4x28x2xbf16, #tpu.memory_space<vmem>>, vector<1x9x2xbf16>
      %493 = vector.shape_cast %492 : vector<1x9x2xbf16> to vector<9x2xbf16>
      %494 = vector.shape_cast %491 : vector<9x2xbf16> to vector<1x9x2xbf16>
      tpu.vector_store %arg13[%c0_498, %c18_499, %c0_500], %494 {strides = array<i32>} : memref<4x28x2xbf16, #tpu.memory_space<vmem>>, vector<1x9x2xbf16>,
      %cst_501 = arith.constant -1.000260e+30 : bf16
      %495 = vector.broadcast %cst_501 : bf16 to vector<9x2xbf16>
      %c0_502 = arith.constant 0 : index
      %c18_503 = arith.constant 18 : index
      %c0_504 = arith.constant 0 : index
      %496 = vector.load %arg14[%c0_502, %c18_503, %c0_504] : memref<4x28x2xbf16, #tpu.memory_space<vmem>>, vector<1x9x2xbf16>
      %497 = vector.shape_cast %496 : vector<1x9x2xbf16> to vector<9x2xbf16>
      %498 = vector.shape_cast %495 : vector<9x2xbf16> to vector<1x9x2xbf16>
      tpu.vector_store %arg14[%c0_502, %c18_503, %c0_504], %498 {strides = array<i32>} : memref<4x28x2xbf16, #tpu.memory_space<vmem>>, vector<1x9x2xbf16>,
      %cst_505 = arith.constant 0.000000e+00 : bf16
      %499 = vector.broadcast %cst_505 : bf16 to vector<9x2xbf16>
      %c1_506 = arith.constant 1 : index
      %c18_507 = arith.constant 18 : index
      %c0_508 = arith.constant 0 : index
      %500 = vector.load %arg13[%c1_506, %c18_507, %c0_508] : memref<4x28x2xbf16, #tpu.memory_space<vmem>>, vector<1x9x2xbf16>
      %501 = vector.shape_cast %500 : vector<1x9x2xbf16> to vector<9x2xbf16>
      %502 = vector.shape_cast %499 : vector<9x2xbf16> to vector<1x9x2xbf16>
      tpu.vector_store %arg13[%c1_506, %c18_507, %c0_508], %502 {strides = array<i32>} : memref<4x28x2xbf16, #tpu.memory_space<vmem>>, vector<1x9x2xbf16>,
      %cst_509 = arith.constant -1.000260e+30 : bf16
      %503 = vector.broadcast %cst_509 : bf16 to vector<9x2xbf16>
      %c1_510 = arith.constant 1 : index
      %c18_511 = arith.constant 18 : index
      %c0_512 = arith.constant 0 : index
      %504 = vector.load %arg14[%c1_510, %c18_511, %c0_512] : memref<4x28x2xbf16, #tpu.memory_space<vmem>>, vector<1x9x2xbf16>
      %505 = vector.shape_cast %504 : vector<1x9x2xbf16> to vector<9x2xbf16>
      %506 = vector.shape_cast %503 : vector<9x2xbf16> to vector<1x9x2xbf16>
      tpu.vector_store %arg14[%c1_510, %c18_511, %c0_512], %506 {strides = array<i32>} : memref<4x28x2xbf16, #tpu.memory_space<vmem>>, vector<1x9x2xbf16>,
      %cst_513 = arith.constant 0.000000e+00 : bf16
      %507 = vector.broadcast %cst_513 : bf16 to vector<9x2xbf16>
      %c2_514 = arith.constant 2 : index
      %c18_515 = arith.constant 18 : index
      %c0_516 = arith.constant 0 : index
      %508 = vector.load %arg13[%c2_514, %c18_515, %c0_516] : memref<4x28x2xbf16, #tpu.memory_space<vmem>>, vector<1x9x2xbf16>
      %509 = vector.shape_cast %508 : vector<1x9x2xbf16> to vector<9x2xbf16>
      %510 = vector.shape_cast %507 : vector<9x2xbf16> to vector<1x9x2xbf16>
      tpu.vector_store %arg13[%c2_514, %c18_515, %c0_516], %510 {strides = array<i32>} : memref<4x28x2xbf16, #tpu.memory_space<vmem>>, vector<1x9x2xbf16>,
      %cst_517 = arith.constant -1.000260e+30 : bf16
      %511 = vector.broadcast %cst_517 : bf16 to vector<9x2xbf16>
      %c2_518 = arith.constant 2 : index
      %c18_519 = arith.constant 18 : index
      %c0_520 = arith.constant 0 : index
      %512 = vector.load %arg14[%c2_518, %c18_519, %c0_520] : memref<4x28x2xbf16, #tpu.memory_space<vmem>>, vector<1x9x2xbf16>
      %513 = vector.shape_cast %512 : vector<1x9x2xbf16> to vector<9x2xbf16>
      %514 = vector.shape_cast %511 : vector<9x2xbf16> to vector<1x9x2xbf16>
      tpu.vector_store %arg14[%c2_518, %c18_519, %c0_520], %514 {strides = array<i32>} : memref<4x28x2xbf16, #tpu.memory_space<vmem>>, vector<1x9x2xbf16>,
      %cst_521 = arith.constant 0.000000e+00 : bf16
      %515 = vector.broadcast %cst_521 : bf16 to vector<9x2xbf16>
      %c3_522 = arith.constant 3 : index
      %c18_523 = arith.constant 18 : index
      %c0_524 = arith.constant 0 : index
      %516 = vector.load %arg13[%c3_522, %c18_523, %c0_524] : memref<4x28x2xbf16, #tpu.memory_space<vmem>>, vector<1x9x2xbf16>
      %517 = vector.shape_cast %516 : vector<1x9x2xbf16> to vector<9x2xbf16>
      %518 = vector.shape_cast %515 : vector<9x2xbf16> to vector<1x9x2xbf16>
      tpu.vector_store %arg13[%c3_522, %c18_523, %c0_524], %518 {strides = array<i32>} : memref<4x28x2xbf16, #tpu.memory_space<vmem>>, vector<1x9x2xbf16>,
      %cst_525 = arith.constant -1.000260e+30 : bf16
      %519 = vector.broadcast %cst_525 : bf16 to vector<9x2xbf16>
      %c3_526 = arith.constant 3 : index
      %c18_527 = arith.constant 18 : index
      %c0_528 = arith.constant 0 : index
      %520 = vector.load %arg14[%c3_526, %c18_527, %c0_528] : memref<4x28x2xbf16, #tpu.memory_space<vmem>>, vector<1x9x2xbf16>
      %521 = vector.shape_cast %520 : vector<1x9x2xbf16> to vector<9x2xbf16>
      %522 = vector.shape_cast %519 : vector<9x2xbf16> to vector<1x9x2xbf16>
      tpu.vector_store %arg14[%c3_526, %c18_527, %c0_528], %522 {strides = array<i32>} : memref<4x28x2xbf16, #tpu.memory_space<vmem>>, vector<1x9x2xbf16>,
    } else {
    }
    %cst_385 = arith.constant 0.000000e+00 : f32
    %370 = vector.broadcast %cst_385 : f32 to vector<18x4xf32>
    %cst_386 = arith.constant -1.000260e+30 : bf16
    %371 = vector.broadcast %cst_386 : bf16 to vector<18x2xbf16>
    %c0_387 = arith.constant 0 : index
    %c0_388 = arith.constant 0 : index
    %c0_389 = arith.constant 0 : index
    %372 = vector.load %arg13[%c0_387, %c0_388, %c0_389] : memref<4x28x2xbf16, #tpu.memory_space<vmem>>, vector<1x18x2xbf16>
    %373 = vector.shape_cast %372 : vector<1x18x2xbf16> to vector<18x2xbf16>
    %c0_390 = arith.constant 0 : index
    %c0_391 = arith.constant 0 : index
    %c0_392 = arith.constant 0 : index
    %374 = vector.load %arg14[%c0_390, %c0_391, %c0_392] : memref<4x28x2xbf16, #tpu.memory_space<vmem>>, vector<1x18x2xbf16>
    %375 = vector.shape_cast %374 : vector<1x18x2xbf16> to vector<18x2xbf16>
    %c0_393 = arith.constant 0 : index
    %c0_394 = arith.constant 0 : index
    %c0_395 = arith.constant 0 : index
    %376 = vector.load %arg8[%c0_393, %c0_394, %c0_395] : memref<9x2x4xbf16, #tpu.memory_space<vmem>>, vector<1x2x4xbf16>
    %377 = vector.shape_cast %376 : vector<1x2x4xbf16> to vector<2x4xbf16>
    %cst_396 = arith.constant dense<0.000000e+00> : vector<18x4xf32>
    %378 = tpu.matmul %373, %377, %cst_396 {dimension_numbers = #tpu.dot_dimension_numbers<[1], [0], [0], [1], [0, 0, 1, 1], [], []>} : vector<18x2xbf16>, vector<2x4xbf16>, vector<18x4xf32> -> vector<18x4xf32>
    %379 = arith.addf %370, %378 : vector<18x4xf32>
    %380 = arith.maximumf %371, %375 : vector<18x2xbf16>
    %c1_397 = arith.constant 1 : index
    %c0_398 = arith.constant 0 : index
    %c0_399 = arith.constant 0 : index
    %381 = vector.load %arg13[%c1_397, %c0_398, %c0_399] : memref<4x28x2xbf16, #tpu.memory_space<vmem>>, vector<1x18x2xbf16>
    %382 = vector.shape_cast %381 : vector<1x18x2xbf16> to vector<18x2xbf16>
    %c1_400 = arith.constant 1 : index
    %c0_401 = arith.constant 0 : index
    %c0_402 = arith.constant 0 : index
    %383 = vector.load %arg14[%c1_400, %c0_401, %c0_402] : memref<4x28x2xbf16, #tpu.memory_space<vmem>>, vector<1x18x2xbf16>
    %384 = vector.shape_cast %383 : vector<1x18x2xbf16> to vector<18x2xbf16>
    %c1_403 = arith.constant 1 : index
    %c0_404 = arith.constant 0 : index
    %c0_405 = arith.constant 0 : index
    %385 = vector.load %arg8[%c1_403, %c0_404, %c0_405] : memref<9x2x4xbf16, #tpu.memory_space<vmem>>, vector<1x2x4xbf16>
    %386 = vector.shape_cast %385 : vector<1x2x4xbf16> to vector<2x4xbf16>
    %cst_406 = arith.constant dense<0.000000e+00> : vector<18x4xf32>
    %387 = tpu.matmul %382, %386, %cst_406 {dimension_numbers = #tpu.dot_dimension_numbers<[1], [0], [0], [1], [0, 0, 1, 1], [], []>} : vector<18x2xbf16>, vector<2x4xbf16>, vector<18x4xf32> -> vector<18x4xf32>
    %388 = arith.addf %379, %387 : vector<18x4xf32>
    %389 = arith.maximumf %380, %384 : vector<18x2xbf16>
    %c0_407 = arith.constant 0 : index
    %c1_408 = arith.constant 1 : index
    %c0_409 = arith.constant 0 : index
    %390 = vector.load %arg13[%c0_407, %c1_408, %c0_409] : memref<4x28x2xbf16, #tpu.memory_space<vmem>>, vector<1x18x2xbf16>
    %391 = vector.shape_cast %390 : vector<1x18x2xbf16> to vector<18x2xbf16>
    %c0_410 = arith.constant 0 : index
    %c1_411 = arith.constant 1 : index
    %c0_412 = arith.constant 0 : index
    %392 = vector.load %arg14[%c0_410, %c1_411, %c0_412] : memref<4x28x2xbf16, #tpu.memory_space<vmem>>, vector<1x18x2xbf16>
    %393 = vector.shape_cast %392 : vector<1x18x2xbf16> to vector<18x2xbf16>
    %c2_413 = arith.constant 2 : index
    %c0_414 = arith.constant 0 : index
    %c0_415 = arith.constant 0 : index
    %394 = vector.load %arg8[%c2_413, %c0_414, %c0_415] : memref<9x2x4xbf16, #tpu.memory_space<vmem>>, vector<1x2x4xbf16>
    %395 = vector.shape_cast %394 : vector<1x2x4xbf16> to vector<2x4xbf16>
    %cst_416 = arith.constant dense<0.000000e+00> : vector<18x4xf32>
    %396 = tpu.matmul %391, %395, %cst_416 {dimension_numbers = #tpu.dot_dimension_numbers<[1], [0], [0], [1], [0, 0, 1, 1], [], []>} : vector<18x2xbf16>, vector<2x4xbf16>, vector<18x4xf32> -> vector<18x4xf32>
    %397 = arith.addf %388, %396 : vector<18x4xf32>
    %398 = arith.maximumf %389, %393 : vector<18x2xbf16>
    %c2_417 = arith.constant 2 : index
    %c0_418 = arith.constant 0 : index
    %c0_419 = arith.constant 0 : index
    %399 = vector.load %arg13[%c2_417, %c0_418, %c0_419] : memref<4x28x2xbf16, #tpu.memory_space<vmem>>, vector<1x18x2xbf16>
    %400 = vector.shape_cast %399 : vector<1x18x2xbf16> to vector<18x2xbf16>
    %c2_420 = arith.constant 2 : index
    %c0_421 = arith.constant 0 : index
    %c0_422 = arith.constant 0 : index
    %401 = vector.load %arg14[%c2_420, %c0_421, %c0_422] : memref<4x28x2xbf16, #tpu.memory_space<vmem>>, vector<1x18x2xbf16>
    %402 = vector.shape_cast %401 : vector<1x18x2xbf16> to vector<18x2xbf16>
    %c3_423 = arith.constant 3 : index
    %c0_424 = arith.constant 0 : index
    %c0_425 = arith.constant 0 : index
    %403 = vector.load %arg8[%c3_423, %c0_424, %c0_425] : memref<9x2x4xbf16, #tpu.memory_space<vmem>>, vector<1x2x4xbf16>
    %404 = vector.shape_cast %403 : vector<1x2x4xbf16> to vector<2x4xbf16>
    %cst_426 = arith.constant dense<0.000000e+00> : vector<18x4xf32>
    %405 = tpu.matmul %400, %404, %cst_426 {dimension_numbers = #tpu.dot_dimension_numbers<[1], [0], [0], [1], [0, 0, 1, 1], [], []>} : vector<18x2xbf16>, vector<2x4xbf16>, vector<18x4xf32> -> vector<18x4xf32>
    %406 = arith.addf %397, %405 : vector<18x4xf32>
    %407 = arith.maximumf %398, %402 : vector<18x2xbf16>
    %c3_427 = arith.constant 3 : index
    %c0_428 = arith.constant 0 : index
    %c0_429 = arith.constant 0 : index
    %408 = vector.load %arg13[%c3_427, %c0_428, %c0_429] : memref<4x28x2xbf16, #tpu.memory_space<vmem>>, vector<1x18x2xbf16>
    %409 = vector.shape_cast %408 : vector<1x18x2xbf16> to vector<18x2xbf16>
    %c3_430 = arith.constant 3 : index
    %c0_431 = arith.constant 0 : index
    %c0_432 = arith.constant 0 : index
    %410 = vector.load %arg14[%c3_430, %c0_431, %c0_432] : memref<4x28x2xbf16, #tpu.memory_space<vmem>>, vector<1x18x2xbf16>
    %411 = vector.shape_cast %410 : vector<1x18x2xbf16> to vector<18x2xbf16>
    %c4 = arith.constant 4 : index
    %c0_433 = arith.constant 0 : index
    %c0_434 = arith.constant 0 : index
    %412 = vector.load %arg8[%c4, %c0_433, %c0_434] : memref<9x2x4xbf16, #tpu.memory_space<vmem>>, vector<1x2x4xbf16>
    %413 = vector.shape_cast %412 : vector<1x2x4xbf16> to vector<2x4xbf16>
    %cst_435 = arith.constant dense<0.000000e+00> : vector<18x4xf32>
    %414 = tpu.matmul %409, %413, %cst_435 {dimension_numbers = #tpu.dot_dimension_numbers<[1], [0], [0], [1], [0, 0, 1, 1], [], []>} : vector<18x2xbf16>, vector<2x4xbf16>, vector<18x4xf32> -> vector<18x4xf32>
    %415 = arith.addf %406, %414 : vector<18x4xf32>
    %416 = arith.maximumf %407, %411 : vector<18x2xbf16>
    %c2_436 = arith.constant 2 : index
    %c1_437 = arith.constant 1 : index
    %c0_438 = arith.constant 0 : index
    %417 = vector.load %arg13[%c2_436, %c1_437, %c0_438] : memref<4x28x2xbf16, #tpu.memory_space<vmem>>, vector<1x18x2xbf16>
    %418 = vector.shape_cast %417 : vector<1x18x2xbf16> to vector<18x2xbf16>
    %c2_439 = arith.constant 2 : index
    %c1_440 = arith.constant 1 : index
    %c0_441 = arith.constant 0 : index
    %419 = vector.load %arg14[%c2_439, %c1_440, %c0_441] : memref<4x28x2xbf16, #tpu.memory_space<vmem>>, vector<1x18x2xbf16>
    %420 = vector.shape_cast %419 : vector<1x18x2xbf16> to vector<18x2xbf16>
    %c5 = arith.constant 5 : index
    %c0_442 = arith.constant 0 : index
    %c0_443 = arith.constant 0 : index
    %421 = vector.load %arg8[%c5, %c0_442, %c0_443] : memref<9x2x4xbf16, #tpu.memory_space<vmem>>, vector<1x2x4xbf16>
    %422 = vector.shape_cast %421 : vector<1x2x4xbf16> to vector<2x4xbf16>
    %cst_444 = arith.constant dense<0.000000e+00> : vector<18x4xf32>
    %423 = tpu.matmul %418, %422, %cst_444 {dimension_numbers = #tpu.dot_dimension_numbers<[1], [0], [0], [1], [0, 0, 1, 1], [], []>} : vector<18x2xbf16>, vector<2x4xbf16>, vector<18x4xf32> -> vector<18x4xf32>
    %424 = arith.addf %415, %423 : vector<18x4xf32>
    %425 = arith.maximumf %416, %420 : vector<18x2xbf16>
    %c0_445 = arith.constant 0 : index
    %c9_446 = arith.constant 9 : index
    %c0_447 = arith.constant 0 : index
    %426 = vector.load %arg13[%c0_445, %c9_446, %c0_447] : memref<4x28x2xbf16, #tpu.memory_space<vmem>>, vector<1x18x2xbf16>
    %427 = vector.shape_cast %426 : vector<1x18x2xbf16> to vector<18x2xbf16>
    %c0_448 = arith.constant 0 : index
    %c9_449 = arith.constant 9 : index
    %c0_450 = arith.constant 0 : index
    %428 = vector.load %arg14[%c0_448, %c9_449, %c0_450] : memref<4x28x2xbf16, #tpu.memory_space<vmem>>, vector<1x18x2xbf16>
    %429 = vector.shape_cast %428 : vector<1x18x2xbf16> to vector<18x2xbf16>
    %c6 = arith.constant 6 : index
    %c0_451 = arith.constant 0 : index
    %c0_452 = arith.constant 0 : index
    %430 = vector.load %arg8[%c6, %c0_451, %c0_452] : memref<9x2x4xbf16, #tpu.memory_space<vmem>>, vector<1x2x4xbf16>
    %431 = vector.shape_cast %430 : vector<1x2x4xbf16> to vector<2x4xbf16>
    %cst_453 = arith.constant dense<0.000000e+00> : vector<18x4xf32>
    %432 = tpu.matmul %427, %431, %cst_453 {dimension_numbers = #tpu.dot_dimension_numbers<[1], [0], [0], [1], [0, 0, 1, 1], [], []>} : vector<18x2xbf16>, vector<2x4xbf16>, vector<18x4xf32> -> vector<18x4xf32>
    %433 = arith.addf %424, %432 : vector<18x4xf32>
    %434 = arith.maximumf %425, %429 : vector<18x2xbf16>
    %c1_454 = arith.constant 1 : index
    %c9_455 = arith.constant 9 : index
    %c0_456 = arith.constant 0 : index
    %435 = vector.load %arg13[%c1_454, %c9_455, %c0_456] : memref<4x28x2xbf16, #tpu.memory_space<vmem>>, vector<1x18x2xbf16>
    %436 = vector.shape_cast %435 : vector<1x18x2xbf16> to vector<18x2xbf16>
    %c1_457 = arith.constant 1 : index
    %c9_458 = arith.constant 9 : index
    %c0_459 = arith.constant 0 : index
    %437 = vector.load %arg14[%c1_457, %c9_458, %c0_459] : memref<4x28x2xbf16, #tpu.memory_space<vmem>>, vector<1x18x2xbf16>
    %438 = vector.shape_cast %437 : vector<1x18x2xbf16> to vector<18x2xbf16>
    %c7 = arith.constant 7 : index
    %c0_460 = arith.constant 0 : index
    %c0_461 = arith.constant 0 : index
    %439 = vector.load %arg8[%c7, %c0_460, %c0_461] : memref<9x2x4xbf16, #tpu.memory_space<vmem>>, vector<1x2x4xbf16>
    %440 = vector.shape_cast %439 : vector<1x2x4xbf16> to vector<2x4xbf16>
    %cst_462 = arith.constant dense<0.000000e+00> : vector<18x4xf32>
    %441 = tpu.matmul %436, %440, %cst_462 {dimension_numbers = #tpu.dot_dimension_numbers<[1], [0], [0], [1], [0, 0, 1, 1], [], []>} : vector<18x2xbf16>, vector<2x4xbf16>, vector<18x4xf32> -> vector<18x4xf32>
    %442 = arith.addf %433, %441 : vector<18x4xf32>
    %443 = arith.maximumf %434, %438 : vector<18x2xbf16>
    %c0_463 = arith.constant 0 : index
    %c10_464 = arith.constant 10 : index
    %c0_465 = arith.constant 0 : index
    %444 = vector.load %arg13[%c0_463, %c10_464, %c0_465] : memref<4x28x2xbf16, #tpu.memory_space<vmem>>, vector<1x18x2xbf16>
    %445 = vector.shape_cast %444 : vector<1x18x2xbf16> to vector<18x2xbf16>
    %c0_466 = arith.constant 0 : index
    %c10_467 = arith.constant 10 : index
    %c0_468 = arith.constant 0 : index
    %446 = vector.load %arg14[%c0_466, %c10_467, %c0_468] : memref<4x28x2xbf16, #tpu.memory_space<vmem>>, vector<1x18x2xbf16>
    %447 = vector.shape_cast %446 : vector<1x18x2xbf16> to vector<18x2xbf16>
    %c8 = arith.constant 8 : index
    %c0_469 = arith.constant 0 : index
    %c0_470 = arith.constant 0 : index
    %448 = vector.load %arg8[%c8, %c0_469, %c0_470] : memref<9x2x4xbf16, #tpu.memory_space<vmem>>, vector<1x2x4xbf16>
    %449 = vector.shape_cast %448 : vector<1x2x4xbf16> to vector<2x4xbf16>
    %cst_471 = arith.constant dense<0.000000e+00> : vector<18x4xf32>
    %450 = tpu.matmul %445, %449, %cst_471 {dimension_numbers = #tpu.dot_dimension_numbers<[1], [0], [0], [1], [0, 0, 1, 1], [], []>} : vector<18x2xbf16>, vector<2x4xbf16>, vector<18x4xf32> -> vector<18x4xf32>
    %451 = arith.addf %442, %450 : vector<18x4xf32>
    %452 = arith.maximumf %443, %447 : vector<18x2xbf16>
    %c0_472 = arith.constant 0 : index
    %c0_473 = arith.constant 0 : index
    %453 = vector.load %arg9[%c0_472, %c0_473] : memref<1x4xf32, #tpu.memory_space<vmem>>, vector<1x4xf32>
    %454 = vector.broadcast %453 : vector<1x4xf32> to vector<18x4xf32>
    %455 = arith.addf %451, %454 : vector<18x4xf32>
    %456 = arith.negf %455 : vector<18x4xf32>
    %457 = math.exp %456 : vector<18x4xf32>
    %cst_474 = arith.constant 1.000000e+00 : f32
    %458 = vector.broadcast %cst_474 : f32 to vector<18x4xf32>
    %459 = arith.addf %458, %457 : vector<18x4xf32>
    %460 = arith.divf %458, %459 : vector<18x4xf32>
    %461 = arith.mulf %455, %460 : vector<18x4xf32>
    %462 = arith.truncf %461 : vector<18x4xf32> to vector<18x4xbf16>
    %c0_475 = arith.constant 0 : index
    %c0_476 = arith.constant 0 : index
    %463 = vector.load %arg10[%c0_475, %c0_476] : memref<2x4xbf16, #tpu.memory_space<vmem>>, vector<2x4xbf16>
    %cst_477 = arith.constant dense<0.000000e+00> : vector<18x4xf32>
    %464 = tpu.matmul %452, %463, %cst_477 {dimension_numbers = #tpu.dot_dimension_numbers<[1], [0], [0], [1], [0, 0, 1, 1], [], []>} : vector<18x2xbf16>, vector<2x4xbf16>, vector<18x4xf32> -> vector<18x4xf32>
    %c0_478 = arith.constant 0 : index
    %c0_479 = arith.constant 0 : index
    %465 = vector.load %arg11[%c0_478, %c0_479] : memref<1x4xf32, #tpu.memory_space<vmem>>, vector<1x4xf32>
    %466 = vector.broadcast %465 : vector<1x4xf32> to vector<18x4xf32>
    %467 = arith.addf %464, %466 : vector<18x4xf32>
    %468 = arith.negf %467 : vector<18x4xf32>
    %469 = math.exp %468 : vector<18x4xf32>
    %cst_480 = arith.constant 1.000000e+00 : f32
    %470 = vector.broadcast %cst_480 : f32 to vector<18x4xf32>
    %471 = arith.addf %470, %469 : vector<18x4xf32>
    %472 = arith.divf %470, %471 : vector<18x4xf32>
    %473 = arith.mulf %467, %472 : vector<18x4xf32>
    %474 = arith.truncf %473 : vector<18x4xf32> to vector<18x4xbf16>
    %475 = vector.extract_strided_slice %462 {offsets = [0, 0], sizes = [8, 4], strides = [1, 1]} : vector<18x4xbf16> to vector<8x4xbf16>
    %c0_481 = arith.constant 0 : index
    %c0_482 = arith.constant 0 : index
    %c0_483 = arith.constant 0 : index
    %c0_484 = arith.constant 0 : index
    %476 = vector.load %arg12[%c0_481, %c0_482, %c0_483, %c0_484] : memref<1x2x8x8xbf16, #tpu.memory_space<vmem>>, vector<1x1x8x4xbf16>
    %477 = vector.shape_cast %476 : vector<1x1x8x4xbf16> to vector<8x4xbf16>
    %478 = vector.shape_cast %475 : vector<8x4xbf16> to vector<1x1x8x4xbf16>
    tpu.vector_store %arg12[%c0_481, %c0_482, %c0_483, %c0_484], %478 {strides = array<i32>} : memref<1x2x8x8xbf16, #tpu.memory_space<vmem>>, vector<1x1x8x4xbf16>,
    %479 = vector.extract_strided_slice %474 {offsets = [0, 0], sizes = [8, 4], strides = [1, 1]} : vector<18x4xbf16> to vector<8x4xbf16>
    %c0_485 = arith.constant 0 : index
    %c0_486 = arith.constant 0 : index
    %c0_487 = arith.constant 0 : index
    %c4_488 = arith.constant 4 : index
    %480 = vector.load %arg12[%c0_485, %c0_486, %c0_487, %c4_488] : memref<1x2x8x8xbf16, #tpu.memory_space<vmem>>, vector<1x1x8x4xbf16>
    %481 = vector.shape_cast %480 : vector<1x1x8x4xbf16> to vector<8x4xbf16>
    %482 = vector.shape_cast %479 : vector<8x4xbf16> to vector<1x1x8x4xbf16>
    tpu.vector_store %arg12[%c0_485, %c0_486, %c0_487, %c4_488], %482 {strides = array<i32>} : memref<1x2x8x8xbf16, #tpu.memory_space<vmem>>, vector<1x1x8x4xbf16>,
    %483 = vector.extract_strided_slice %462 {offsets = [9, 0], sizes = [8, 4], strides = [1, 1]} : vector<18x4xbf16> to vector<8x4xbf16>
    %c0_489 = arith.constant 0 : index
    %c1_490 = arith.constant 1 : index
    %c0_491 = arith.constant 0 : index
    %c0_492 = arith.constant 0 : index
    %484 = vector.load %arg12[%c0_489, %c1_490, %c0_491, %c0_492] : memref<1x2x8x8xbf16, #tpu.memory_space<vmem>>, vector<1x1x8x4xbf16>
    %485 = vector.shape_cast %484 : vector<1x1x8x4xbf16> to vector<8x4xbf16>
    %486 = vector.shape_cast %483 : vector<8x4xbf16> to vector<1x1x8x4xbf16>
    tpu.vector_store %arg12[%c0_489, %c1_490, %c0_491, %c0_492], %486 {strides = array<i32>} : memref<1x2x8x8xbf16, #tpu.memory_space<vmem>>, vector<1x1x8x4xbf16>,
    %487 = vector.extract_strided_slice %474 {offsets = [9, 0], sizes = [8, 4], strides = [1, 1]} : vector<18x4xbf16> to vector<8x4xbf16>
    %c0_493 = arith.constant 0 : index
    %c1_494 = arith.constant 1 : index
    %c0_495 = arith.constant 0 : index
    %c4_496 = arith.constant 4 : index
    %488 = vector.load %arg12[%c0_493, %c1_494, %c0_495, %c4_496] : memref<1x2x8x8xbf16, #tpu.memory_space<vmem>>, vector<1x1x8x4xbf16>
    %489 = vector.shape_cast %488 : vector<1x1x8x4xbf16> to vector<8x4xbf16>
    %490 = vector.shape_cast %487 : vector<8x4xbf16> to vector<1x1x8x4xbf16>
    tpu.vector_store %arg12[%c0_493, %c1_494, %c0_495, %c4_496], %490 {strides = array<i32>} : memref<1x2x8x8xbf16, #tpu.memory_space<vmem>>, vector<1x1x8x4xbf16>,
    return
  }
  func.func @transform_0(%arg0: i32, %arg1: i32) -> (i32, i32, i32, i32, i32, i32) {
    %c0_i32 = arith.constant 0 : i32
    %c0_i32_0 = arith.constant 0 : i32
    %c0_i32_1 = arith.constant 0 : i32
    %c0_i32_2 = arith.constant 0 : i32
    %c0_i32_3 = arith.constant 0 : i32
    return %arg0, %c0_i32, %c0_i32_0, %arg1, %c0_i32_1, %c0_i32_2 : i32, i32, i32, i32, i32, i32
  }
  func.func @transform_1(%arg0: i32, %arg1: i32) -> (i32, i32, i32, i32, i32, i32) {
    %c2_i32 = arith.constant 2 : i32
    %0 = arith.muli %arg1, %c2_i32 : i32
    %c1_i32 = arith.constant 1 : i32
    %1 = arith.subi %0, %c1_i32 : i32
    %c0_i32 = arith.constant 0 : i32
    %2 = arith.maxsi %1, %c0_i32 : i32
    %c0_i32_0 = arith.constant 0 : i32
    %c0_i32_1 = arith.constant 0 : i32
    %c0_i32_2 = arith.constant 0 : i32
    %c0_i32_3 = arith.constant 0 : i32
    %c0_i32_4 = arith.constant 0 : i32
    return %arg0, %c0_i32_0, %c0_i32_1, %2, %c0_i32_2, %c0_i32_3 : i32, i32, i32, i32, i32, i32
  }
  func.func @transform_2(%arg0: i32, %arg1: i32) -> (i32, i32, i32, i32, i32, i32) {
    %c1_i32 = arith.constant 1 : i32
    %0 = arith.addi %arg1, %c1_i32 : i32
    %c2_i32 = arith.constant 2 : i32
    %1 = arith.muli %0, %c2_i32 : i32
    %c7_i32 = arith.constant 7 : i32
    %2 = arith.minsi %1, %c7_i32 : i32
    %c0_i32 = arith.constant 0 : i32
    %c0_i32_0 = arith.constant 0 : i32
    %c0_i32_1 = arith.constant 0 : i32
    %c0_i32_2 = arith.constant 0 : i32
    %c0_i32_3 = arith.constant 0 : i32
    return %arg0, %c0_i32, %c0_i32_0, %2, %c0_i32_1, %c0_i32_2 : i32, i32, i32, i32, i32, i32
  }
  func.func @transform_3(%arg0: i32, %arg1: i32) -> (i32, i32, i32, i32, i32, i32) {
    %c0_i32 = arith.constant 0 : i32
    %c0_i32_0 = arith.constant 0 : i32
    %c0_i32_1 = arith.constant 0 : i32
    %c0_i32_2 = arith.constant 0 : i32
    %c0_i32_3 = arith.constant 0 : i32
    return %arg0, %c0_i32, %c0_i32_0, %arg1, %c0_i32_1, %c0_i32_2 : i32, i32, i32, i32, i32, i32
  }
  func.func @transform_4(%arg0: i32, %arg1: i32) -> (i32, i32, i32, i32, i32, i32) {
    %c2_i32 = arith.constant 2 : i32
    %0 = arith.muli %arg1, %c2_i32 : i32
    %c1_i32 = arith.constant 1 : i32
    %1 = arith.subi %0, %c1_i32 : i32
    %c0_i32 = arith.constant 0 : i32
    %2 = arith.maxsi %1, %c0_i32 : i32
    %c0_i32_0 = arith.constant 0 : i32
    %c0_i32_1 = arith.constant 0 : i32
    %c0_i32_2 = arith.constant 0 : i32
    %c0_i32_3 = arith.constant 0 : i32
    %c0_i32_4 = arith.constant 0 : i32
    return %arg0, %c0_i32_0, %c0_i32_1, %2, %c0_i32_2, %c0_i32_3 : i32, i32, i32, i32, i32, i32
  }
  func.func @transform_5(%arg0: i32, %arg1: i32) -> (i32, i32, i32, i32, i32, i32) {
    %c1_i32 = arith.constant 1 : i32
    %0 = arith.addi %arg1, %c1_i32 : i32
    %c2_i32 = arith.constant 2 : i32
    %1 = arith.muli %0, %c2_i32 : i32
    %c7_i32 = arith.constant 7 : i32
    %2 = arith.minsi %1, %c7_i32 : i32
    %c0_i32 = arith.constant 0 : i32
    %c0_i32_0 = arith.constant 0 : i32
    %c0_i32_1 = arith.constant 0 : i32
    %c0_i32_2 = arith.constant 0 : i32
    %c0_i32_3 = arith.constant 0 : i32
    return %arg0, %c0_i32, %c0_i32_0, %2, %c0_i32_1, %c0_i32_2 : i32, i32, i32, i32, i32, i32
  }
  func.func @transform_6(%arg0: i32, %arg1: i32) -> (i32, i32, i32) {
    %c0_i32 = arith.constant 0 : i32
    %c0_i32_0 = arith.constant 0 : i32
    %c0_i32_1 = arith.constant 0 : i32
    %c0_i32_2 = arith.constant 0 : i32
    return %c0_i32, %c0_i32_0, %c0_i32_1 : i32, i32, i32
  }
  func.func @transform_7(%arg0: i32, %arg1: i32) -> (i32, i32) {
    %c0_i32 = arith.constant 0 : i32
    %c0_i32_0 = arith.constant 0 : i32
    %c0_i32_1 = arith.constant 0 : i32
    return %c0_i32, %c0_i32_0 : i32, i32
  }
  func.func @transform_8(%arg0: i32, %arg1: i32) -> (i32, i32) {
    %c0_i32 = arith.constant 0 : i32
    %c0_i32_0 = arith.constant 0 : i32
    %c0_i32_1 = arith.constant 0 : i32
    return %c0_i32, %c0_i32_0 : i32, i32
  }
  func.func @transform_9(%arg0: i32, %arg1: i32) -> (i32, i32) {
    %c0_i32 = arith.constant 0 : i32
    %c0_i32_0 = arith.constant 0 : i32
    %c0_i32_1 = arith.constant 0 : i32
    return %c0_i32, %c0_i32_0 : i32, i32
  }
  func.func @transform_10(%arg0: i32, %arg1: i32) -> (i32, i32, i32, i32) {
    %c0_i32 = arith.constant 0 : i32
    %c0_i32_0 = arith.constant 0 : i32
    %c0_i32_1 = arith.constant 0 : i32
    return %arg0, %arg1, %c0_i32, %c0_i32_0 : i32, i32, i32, i32
  }
}

</mosaic_0001>

<llo_original>
// kernel: _lambda_.1
$region0: #{_lambda_.1}
  #allocation0 [shape = 'u32[]', space=smem, size = 0x4, offset = 0x4, fixed_abs, tag = 'smem constant byte address 0x4 - core index']
  #allocation1 [shape = 'u32[144,128]{1,0:T(1,128)}', space=vmem, size = 0x12000, scoped, tag = 'internal scratch']
  #allocation2 [shape = 'bf16[4,28,2]{2,1,0:T(8,128)(2,1)}', space=vmem, size = 0x8000, scoped, tag = 'scratch operand']
  #allocation3 [shape = 'bf16[4,28,2]{2,1,0:T(8,128)(2,1)}', space=vmem, size = 0x8000, scoped, tag = 'scratch operand']
  %s0 = inlined_call_operand.vmem [shape: bf16[2,2,2,8,8,2], index: 0, kind: input, shape index: {}, may-alias: {0,1,2}]
  %s1 = inlined_call_operand.vmem [shape: bf16[2,2,2,8,8,2], index: 1, kind: input, shape index: {}, may-alias: {0,1,2}]
  %s2 = inlined_call_operand.vmem [shape: bf16[2,2,2,8,8,2], index: 2, kind: input, shape index: {}, may-alias: {0,1,2}]
  %s3 = inlined_call_operand.vmem [shape: bf16[2,2,2,8,8,2], index: 3, kind: input, shape index: {}, may-alias: {3,4,5}]
  %s4 = inlined_call_operand.vmem [shape: bf16[2,2,2,8,8,2], index: 4, kind: input, shape index: {}, may-alias: {3,4,5}]
  %s5 = inlined_call_operand.vmem [shape: bf16[2,2,2,8,8,2], index: 5, kind: input, shape index: {}, may-alias: {3,4,5}]
  %s6 = inlined_call_operand.vmem [shape: bf16[9,2,4], index: 6, kind: input, shape index: {}]
  %s7 = inlined_call_operand.vmem [shape: f32[1,4], index: 7, kind: input, shape index: {}]
  %s8 = inlined_call_operand.vmem [shape: bf16[2,4], index: 8, kind: input, shape index: {}]
  %s9 = inlined_call_operand.vmem [shape: f32[1,4], index: 9, kind: input, shape index: {}]
  %s10 = inlined_call_operand.vmem [shape: bf16[2,8,8,8], index: 10, kind: output, shape index: {}]
  %s11 = sld [smem:[#allocation0]]
  $region327: #{_lambda_.1} parent=0
    _
  %s13 = ssub.s32 1, %s11
  %s14 = scalar_select 0, %s13, %s11
  $region1: #{_lambda_.1} parent=0
    #allocation4 [shape = 'u8[32768]{0}', space=vmem, size = 0x8000, scoped, tag = 'input window, operand 0']
    #allocation5 [shape = 'u8[16384]{0}', space=vmem, size = 0x4000, scoped, tag = 'input window, operand 1']
    #allocation6 [shape = 'u8[16384]{0}', space=vmem, size = 0x4000, scoped, tag = 'input window, operand 2']
    #allocation7 [shape = 'u8[32768]{0}', space=vmem, size = 0x8000, scoped, tag = 'input window, operand 3']
    #allocation8 [shape = 'u8[16384]{0}', space=vmem, size = 0x4000, scoped, tag = 'input window, operand 4']
    #allocation9 [shape = 'u8[16384]{0}', space=vmem, size = 0x4000, scoped, tag = 'input window, operand 5']
    loop: start=0, step=1, limit=10
    $region2: #{_lambda_.1} parent=1 // loop_pre_header
      _
    $region3: #{_lambda_.1} parent=1 // loop_header
      %s16 = sphi 0, %s20
      %p17 = scmp.ge.s32.totalorder %s16, 10
      %s23 = sphi 0, %s35
      %s24 = sphi 0, %s31
      %s25 = sphi 0, %s23
      %s26 = sphi 0, %s24
      %s27 = sphi 0, %s25
      %s28 = sphi 0, %s26
      %s40 = sphi 0, %s42
      %s43 = sphi 0, %s40
      %s44 = sphi 0, %s43
      %s60 = sphi 0, %s44
      %s76 = sphi 0, %s78
      %s79 = sphi 0, %s76
      %s80 = sphi 0, %s79
      %s96 = sphi 0, %s80
      %s112 = sphi 0, %s114
      %s115 = sphi 0, %s112
      %s116 = sphi 0, %s115
      %s132 = sphi 0, %s116
      %s140 = sphi 0, %s142
      %s143 = sphi 0, %s140
      %s144 = sphi 0, %s143
      %s160 = sphi 0, %s144
      %s176 = sphi 0, %s178
      %s179 = sphi 0, %s176
      %s180 = sphi 0, %s179
      %s196 = sphi 0, %s180
      %s212 = sphi 0, %s214
      %s215 = sphi 0, %s212
      %s216 = sphi 0, %s215
      %s232 = sphi 0, %s216
      %s236 = sphi 0, %s236
      %s238 = sphi 0, %s236
      %s239 = sphi 0, %s238
      %s253 = sphi 0, %s239
      %s257 = sphi 0, %s257
      %s259 = sphi 0, %s257
      %s260 = sphi 0, %s259
      %s274 = sphi 0, %s260
      %s278 = sphi 0, %s278
      %s280 = sphi 0, %s278
      %s281 = sphi 0, %s280
      %s295 = sphi 0, %s281
      %s299 = sphi 0, %s299
      %s301 = sphi 0, %s299
      %s302 = sphi 0, %s301
      %s316 = sphi 0, %s302
      %s324 = sphi 0, %s326
      %s327 = sphi 0, %s324
      %s328 = sphi 0, %s327
      %s344 = sphi 0, %s328
    $region4: #{_lambda_.1} parent=1 // loop_header_branch
      %19 = sbr.rel (%p17) target = $region8
    $region5: #{_lambda_.1} parent=1 // loop_body
      %s21 = ssub.s32 %s16, 1
      %s22 = ssub.s32 %s16, 2
      %s29 = sadd.s32 1, %s24
      %p30 = scmp.ge.s32.totalorder %s29, 4
      %s31 = scalar_select %p30, 0, %s29
      %s32 = sadd.s32 1, %s23
      %s33 = scalar_select %p30, %s32, %s23
      %p34 = scmp.ge.s32.totalorder %s33, 2
      %s35 = scalar_select %p34, 0, %s33
      %s36 = ssub.s32 %s23, %s35
      %s37 = ssub.s32 %s24, %s31
      %s38 = sor.u32 %s36, %s37
      %p39 = scmp.eq.s32.totalorder %s38, 0
      %s41 = sadd.s32 %s40, 1
      %s42 = scalar_select %p39, %s40, %s41
      %p45 = pneg %p39
      %p46 = scmp.eq.s32.totalorder %s16, 7
      %p47 = por %p45, %p46
      %p48 = scmp.ne.s32.totalorder %s40, %s43
      %p49 = scmp.eq.s32.totalorder %s16, 0
      %p50 = por %p48, %p49
      %p51 = scmp.ne.s32.totalorder %s40, %s43
      %p52 = scmp.eq.s32.totalorder %s21, 7
      %p53 = por %p51, %p52
      %p54 = scmp.ne.s32.totalorder %s43, %s44
      %p55 = scmp.eq.s32.totalorder %s21, 0
      %p56 = por %p54, %p55
      %p57 = scmp.ne.s32.totalorder %s43, %s44
      %p58 = scmp.eq.s32.totalorder %s22, 7
      %p59 = por %p57, %p58
      %p61 = scmp.ne.s32.totalorder %s44, %s60
      %p62 = scmp.eq.s32.totalorder %s22, 0
      %p63 = por %p61, %p62
      %s64 = smul.u32 %s24, 2
      %s65 = ssub.s32 %s64, 1
      %p66 = scmp.gt.s32.totalorder %s65, 0
      %s67 = scalar_select %p66, %s65, 0
      %s68 = smul.u32 %s31, 2
      %s69 = ssub.s32 %s68, 1
      %p70 = scmp.gt.s32.totalorder %s69, 0
      %s71 = scalar_select %p70, %s69, 0
      %s72 = ssub.s32 %s23, %s35
      %s73 = ssub.s32 %s67, %s71
      %s74 = sor.u32 %s72, %s73
      %p75 = scmp.eq.s32.totalorder %s74, 0
      %s77 = sadd.s32 %s76, 1
      %s78 = scalar_select %p75, %s76, %s77
      %p81 = pneg %p75
      %p82 = scmp.eq.s32.totalorder %s16, 7
      %p83 = por %p81, %p82
      %p84 = scmp.ne.s32.totalorder %s76, %s79
      %p85 = scmp.eq.s32.totalorder %s16, 0
      %p86 = por %p84, %p85
      %p87 = scmp.ne.s32.totalorder %s76, %s79
      %p88 = scmp.eq.s32.totalorder %s21, 7
      %p89 = por %p87, %p88
      %p90 = scmp.ne.s32.totalorder %s79, %s80
      %p91 = scmp.eq.s32.totalorder %s21, 0
      %p92 = por %p90, %p91
      %p93 = scmp.ne.s32.totalorder %s79, %s80
      %p94 = scmp.eq.s32.totalorder %s22, 7
      %p95 = por %p93, %p94
      %p97 = scmp.ne.s32.totalorder %s80, %s96
      %p98 = scmp.eq.s32.totalorder %s22, 0
      %p99 = por %p97, %p98
      %s100 = sadd.s32 %s24, 1
      %s101 = smul.u32 %s100, 2
      %p102 = scmp.lt.s32.totalorder %s101, 7
      %s103 = scalar_select %p102, %s101, 7
      %s104 = sadd.s32 %s31, 1
      %s105 = smul.u32 %s104, 2
      %p106 = scmp.lt.s32.totalorder %s105, 7
      %s107 = scalar_select %p106, %s105, 7
      %s108 = ssub.s32 %s23, %s35
      %s109 = ssub.s32 %s103, %s107
      %s110 = sor.u32 %s108, %s109
      %p111 = scmp.eq.s32.totalorder %s110, 0
      %s113 = sadd.s32 %s112, 1
      %s114 = scalar_select %p111, %s112, %s113
      %p117 = pneg %p111
      %p118 = scmp.eq.s32.totalorder %s16, 7
      %p119 = por %p117, %p118
      %p120 = scmp.ne.s32.totalorder %s112, %s115
      %p121 = scmp.eq.s32.totalorder %s16, 0
      %p122 = por %p120, %p121
      %p123 = scmp.ne.s32.totalorder %s112, %s115
      %p124 = scmp.eq.s32.totalorder %s21, 7
      %p125 = por %p123, %p124
      %p126 = scmp.ne.s32.totalorder %s115, %s116
      %p127 = scmp.eq.s32.totalorder %s21, 0
      %p128 = por %p126, %p127
      %p129 = scmp.ne.s32.totalorder %s115, %s116
      %p130 = scmp.eq.s32.totalorder %s22, 7
      %p131 = por %p129, %p130
      %p133 = scmp.ne.s32.totalorder %s116, %s132
      %p134 = scmp.eq.s32.totalorder %s22, 0
      %p135 = por %p133, %p134
      %s136 = ssub.s32 %s23, %s35
      %s137 = ssub.s32 %s24, %s31
      %s138 = sor.u32 %s136, %s137
      %p139 = scmp.eq.s32.totalorder %s138, 0
      %s141 = sadd.s32 %s140, 1
      %s142 = scalar_select %p139, %s140, %s141
      %p145 = pneg %p139
      %p146 = scmp.eq.s32.totalorder %s16, 7
      %p147 = por %p145, %p146
      %p148 = scmp.ne.s32.totalorder %s140, %s143
      %p149 = scmp.eq.s32.totalorder %s16, 0
      %p150 = por %p148, %p149
      %p151 = scmp.ne.s32.totalorder %s140, %s143
      %p152 = scmp.eq.s32.totalorder %s21, 7
      %p153 = por %p151, %p152
      %p154 = scmp.ne.s32.totalorder %s143, %s144
      %p155 = scmp.eq.s32.totalorder %s21, 0
      %p156 = por %p154, %p155
      %p157 = scmp.ne.s32.totalorder %s143, %s144
      %p158 = scmp.eq.s32.totalorder %s22, 7
      %p159 = por %p157, %p158
      %p161 = scmp.ne.s32.totalorder %s144, %s160
      %p162 = scmp.eq.s32.totalorder %s22, 0
      %p163 = por %p161, %p162
      %s164 = smul.u32 %s24, 2
      %s165 = ssub.s32 %s164, 1
      %p166 = scmp.gt.s32.totalorder %s165, 0
      %s167 = scalar_select %p166, %s165, 0
      %s168 = smul.u32 %s31, 2
      %s169 = ssub.s32 %s168, 1
      %p170 = scmp.gt.s32.totalorder %s169, 0
      %s171 = scalar_select %p170, %s169, 0
      %s172 = ssub.s32 %s23, %s35
      %s173 = ssub.s32 %s167, %s171
      %s174 = sor.u32 %s172, %s173
      %p175 = scmp.eq.s32.totalorder %s174, 0
      %s177 = sadd.s32 %s176, 1
      %s178 = scalar_select %p175, %s176, %s177
      %p181 = pneg %p175
      %p182 = scmp.eq.s32.totalorder %s16, 7
      %p183 = por %p181, %p182
      %p184 = scmp.ne.s32.totalorder %s176, %s179
      %p185 = scmp.eq.s32.totalorder %s16, 0
      %p186 = por %p184, %p185
      %p187 = scmp.ne.s32.totalorder %s176, %s179
      %p188 = scmp.eq.s32.totalorder %s21, 7
      %p189 = por %p187, %p188
      %p190 = scmp.ne.s32.totalorder %s179, %s180
      %p191 = scmp.eq.s32.totalorder %s21, 0
      %p192 = por %p190, %p191
      %p193 = scmp.ne.s32.totalorder %s179, %s180
      %p194 = scmp.eq.s32.totalorder %s22, 7
      %p195 = por %p193, %p194
      %p197 = scmp.ne.s32.totalorder %s180, %s196
      %p198 = scmp.eq.s32.totalorder %s22, 0
      %p199 = por %p197, %p198
      %s200 = sadd.s32 %s24, 1
      %s201 = smul.u32 %s200, 2
      %p202 = scmp.lt.s32.totalorder %s201, 7
      %s203 = scalar_select %p202, %s201, 7
      %s204 = sadd.s32 %s31, 1
      %s205 = smul.u32 %s204, 2
      %p206 = scmp.lt.s32.totalorder %s205, 7
      %s207 = scalar_select %p206, %s205, 7
      %s208 = ssub.s32 %s23, %s35
      %s209 = ssub.s32 %s203, %s207
      %s210 = sor.u32 %s208, %s209
      %p211 = scmp.eq.s32.totalorder %s210, 0
      %s213 = sadd.s32 %s212, 1
      %s214 = scalar_select %p211, %s212, %s213
      %p217 = pneg %p211
      %p218 = scmp.eq.s32.totalorder %s16, 7
      %p219 = por %p217, %p218
      %p220 = scmp.ne.s32.totalorder %s212, %s215
      %p221 = scmp.eq.s32.totalorder %s16, 0
      %p222 = por %p220, %p221
      %p223 = scmp.ne.s32.totalorder %s212, %s215
      %p224 = scmp.eq.s32.totalorder %s21, 7
      %p225 = por %p223, %p224
      %p226 = scmp.ne.s32.totalorder %s215, %s216
      %p227 = scmp.eq.s32.totalorder %s21, 0
      %p228 = por %p226, %p227
      %p229 = scmp.ne.s32.totalorder %s215, %s216
      %p230 = scmp.eq.s32.totalorder %s22, 7
      %p231 = por %p229, %p230
      %p233 = scmp.ne.s32.totalorder %s216, %s232
      %p234 = scmp.eq.s32.totalorder %s22, 0
      %p235 = por %p233, %p234
      %s237 = sadd.s32 %s236, 1
      %p240 = scmp.eq.s32.totalorder %s16, 7
      %p241 = scmp.ne.s32.totalorder %s236, %s238
      %p242 = scmp.eq.s32.totalorder %s16, 0
      %p243 = por %p241, %p242
      %p244 = scmp.ne.s32.totalorder %s236, %s238
      %p245 = scmp.eq.s32.totalorder %s21, 7
      %p246 = por %p244, %p245
      %p247 = scmp.ne.s32.totalorder %s238, %s239
      %p248 = scmp.eq.s32.totalorder %s21, 0
      %p249 = por %p247, %p248
      %p250 = scmp.ne.s32.totalorder %s238, %s239
      %p251 = scmp.eq.s32.totalorder %s22, 7
      %p252 = por %p250, %p251
      %p254 = scmp.ne.s32.totalorder %s239, %s253
      %p255 = scmp.eq.s32.totalorder %s22, 0
      %p256 = por %p254, %p255
      %s258 = sadd.s32 %s257, 1
      %p261 = scmp.eq.s32.totalorder %s16, 7
      %p262 = scmp.ne.s32.totalorder %s257, %s259
      %p263 = scmp.eq.s32.totalorder %s16, 0
      %p264 = por %p262, %p263
      %p265 = scmp.ne.s32.totalorder %s257, %s259
      %p266 = scmp.eq.s32.totalorder %s21, 7
      %p267 = por %p265, %p266
      %p268 = scmp.ne.s32.totalorder %s259, %s260
      %p269 = scmp.eq.s32.totalorder %s21, 0
      %p270 = por %p268, %p269
      %p271 = scmp.ne.s32.totalorder %s259, %s260
      %p272 = scmp.eq.s32.totalorder %s22, 7
      %p273 = por %p271, %p272
      %p275 = scmp.ne.s32.totalorder %s260, %s274
      %p276 = scmp.eq.s32.totalorder %s22, 0
      %p277 = por %p275, %p276
      %s279 = sadd.s32 %s278, 1
      %p282 = scmp.eq.s32.totalorder %s16, 7
      %p283 = scmp.ne.s32.totalorder %s278, %s280
      %p284 = scmp.eq.s32.totalorder %s16, 0
      %p285 = por %p283, %p284
      %p286 = scmp.ne.s32.totalorder %s278, %s280
      %p287 = scmp.eq.s32.totalorder %s21, 7
      %p288 = por %p286, %p287
      %p289 = scmp.ne.s32.totalorder %s280, %s281
      %p290 = scmp.eq.s32.totalorder %s21, 0
      %p291 = por %p289, %p290
      %p292 = scmp.ne.s32.totalorder %s280, %s281
      %p293 = scmp.eq.s32.totalorder %s22, 7
      %p294 = por %p292, %p293
      %p296 = scmp.ne.s32.totalorder %s281, %s295
      %p297 = scmp.eq.s32.totalorder %s22, 0
      %p298 = por %p296, %p297
      %s300 = sadd.s32 %s299, 1
      %p303 = scmp.eq.s32.totalorder %s16, 7
      %p304 = scmp.ne.s32.totalorder %s299, %s301
      %p305 = scmp.eq.s32.totalorder %s16, 0
      %p306 = por %p304, %p305
      %p307 = scmp.ne.s32.totalorder %s299, %s301
      %p308 = scmp.eq.s32.totalorder %s21, 7
      %p309 = por %p307, %p308
      %p310 = scmp.ne.s32.totalorder %s301, %s302
      %p311 = scmp.eq.s32.totalorder %s21, 0
      %p312 = por %p310, %p311
      %p313 = scmp.ne.s32.totalorder %s301, %s302
      %p314 = scmp.eq.s32.totalorder %s22, 7
      %p315 = por %p313, %p314
      %p317 = scmp.ne.s32.totalorder %s302, %s316
      %p318 = scmp.eq.s32.totalorder %s22, 0
      %p319 = por %p317, %p318
      %s320 = ssub.s32 %s23, %s35
      %s321 = ssub.s32 %s24, %s31
      %s322 = sor.u32 %s320, %s321
      %p323 = scmp.eq.s32.totalorder %s322, 0
      %s325 = sadd.s32 %s324, 1
      %s326 = scalar_select %p323, %s324, %s325
      %p329 = pneg %p323
      %p330 = scmp.eq.s32.totalorder %s16, 7
      %p331 = por %p329, %p330
      %p332 = scmp.ne.s32.totalorder %s324, %s327
      %p333 = scmp.eq.s32.totalorder %s16, 0
      %p334 = por %p332, %p333
      %p335 = scmp.ne.s32.totalorder %s324, %s327
      %p336 = scmp.eq.s32.totalorder %s21, 7
      %p337 = por %p335, %p336
      %p338 = scmp.ne.s32.totalorder %s327, %s328
      %p339 = scmp.eq.s32.totalorder %s21, 0
      %p340 = por %p338, %p339
      %p341 = scmp.ne.s32.totalorder %s327, %s328
      %p342 = scmp.eq.s32.totalorder %s22, 7
      %p343 = por %p341, %p342
      %p345 = scmp.ne.s32.totalorder %s328, %s344
      %p346 = scmp.eq.s32.totalorder %s22, 0
      %p347 = por %p345, %p346
      %p348 = scmp.le.s32.totalorder 1, %s16
      %p349 = scmp.lt.s32.totalorder %s16, 9
      %p350 = pnand %p348, %p349
      %p351 = pneg %p350
      // Predicated region
      $region9: #{_lambda_.1} parent=5 // pred_check
        _
      $region10: #{_lambda_.1} parent=5 // pred_check_branch
        %353 = sbr.rel (%p350) target = $region12
      $region11: #{_lambda_.1} parent=5 // pred_region
        %s354 = ssub.s32 %s16, 1
        // Predicated region
        $region13: #{_lambda_.1} parent=11 // pred_check
          %p355 = pneg %p249
        $region14: #{_lambda_.1} parent=11 // pred_check_branch
          %357 = sbr.rel (%p355) target = $region16
        $region15: #{_lambda_.1} parent=11 // pred_region
          _
        $region16: #{_lambda_.1} parent=11 // pred_fallthru
          _
        // Predicated region
        $region17: #{_lambda_.1} parent=11 // pred_check
          %p358 = pneg %p270
        $region18: #{_lambda_.1} parent=11 // pred_check_branch
          %360 = sbr.rel (%p358) target = $region20
        $region19: #{_lambda_.1} parent=11 // pred_region
          _
        $region20: #{_lambda_.1} parent=11 // pred_fallthru
          _
        // Predicated region
        $region21: #{_lambda_.1} parent=11 // pred_check
          %p361 = pneg %p291
        $region22: #{_lambda_.1} parent=11 // pred_check_branch
          %363 = sbr.rel (%p361) target = $region24
        $region23: #{_lambda_.1} parent=11 // pred_region
          _
        $region24: #{_lambda_.1} parent=11 // pred_fallthru
          _
        // Predicated region
        $region25: #{_lambda_.1} parent=11 // pred_check
          %p364 = pneg %p312
        $region26: #{_lambda_.1} parent=11 // pred_check_branch
          %366 = sbr.rel (%p364) target = $region28
        $region27: #{_lambda_.1} parent=11 // pred_region
          _
        $region28: #{_lambda_.1} parent=11 // pred_fallthru
          _
      $region12: #{_lambda_.1} parent=5 // pred_fallthru
        _
      %p367 = scmp.lt.s32.totalorder %s16, 8
      // Predicated region
      $region29: #{_lambda_.1} parent=5 // pred_check
        %p368 = pneg %p367
      $region30: #{_lambda_.1} parent=5 // pred_check_branch
        %370 = sbr.rel (%p368) target = $region32
      $region31: #{_lambda_.1} parent=5 // pred_region
        // Predicated region
        $region33: #{_lambda_.1} parent=31 // pred_check
          %p371 = pneg %p50
        $region34: #{_lambda_.1} parent=31 // pred_check_branch
          %373 = sbr.rel (%p371) target = $region36
        $region35: #{_lambda_.1} parent=31 // pred_region
          %s374 = sand.u32 %s40, 1
          %s375 = sand.u32 %s40, 1
          %s376 = smul.addr %s375, 32
          %s377 = scalar_lea.vmem [#allocation4], %s376
          %s378 = smul.u32 2, %s24
          %s379 = smul.addr %s23, 32
          %s380 = sadd.s32 %s378, %s379
          %s381 = smul.addr %s380, 4
          %s382 = scalar_lea.vmem %s0, %s381
          // Predicated region
          $region37: #{_lambda_.1} parent=35 // pred_check
            _
          $region38: #{_lambda_.1} parent=35 // pred_check_branch
            %384 = sbr.rel (0) target = $region40
          $region39: #{_lambda_.1} parent=35 // pred_region
            // Predicated region
            $region41: #{_lambda_.1} parent=39 // pred_check
              _
            $region42: #{_lambda_.1} parent=39 // pred_check_branch
              %386 = sbr.rel target = $region44
            $region43: #{_lambda_.1} parent=39 // pred_region
              // Predicated region
              $region56: #{_lambda_.1} parent=43 // pred_check
                _
              $region57: #{_lambda_.1} parent=43 // pred_check_branch
                %415 = sbr.rel (0) target = $region59
              $region58: #{_lambda_.1} parent=43 // pred_region
                loop: start=0, step=1, limit=1
                $region60: #{_lambda_.1} parent=58 // loop_pre_header
                  _
                $region61: #{_lambda_.1} parent=58 // loop_header
                  %s417 = sphi 0, %s421
                  %p418 = scmp.ge.s32.totalorder %s417, 1
                  %s422 = sphi %s382, %s382
                  %s423 = sphi %s377, %s377
                $region62: #{_lambda_.1} parent=58 // loop_header_branch
                  %420 = sbr.rel (%p418) target = $region66
                $region63: #{_lambda_.1} parent=58 // loop_body
                  _
                $region64: #{_lambda_.1} parent=58 // loop_footer
                  %s421 = sadd.s32 1, %s417
                $region65: #{_lambda_.1} parent=58 // loop_footer_branch
                  %416 = sbr.rel target = $region61
                $region66: #{_lambda_.1} parent=58 // loop_exit
                  _
                loop: start=0, step=1, limit=1
                $region67: #{_lambda_.1} parent=58 // loop_pre_header
                  _
                $region68: #{_lambda_.1} parent=58 // loop_header
                  %s426 = sphi 0, %s430
                  %p427 = scmp.ge.s32.totalorder %s426, 1
                  %s431 = sphi %s382, %s382
                  %s432 = sphi %s377, %s377
                $region69: #{_lambda_.1} parent=58 // loop_header_branch
                  %429 = sbr.rel (%p427) target = $region73
                $region70: #{_lambda_.1} parent=58 // loop_body
                  %v433 = vld [vmem:[%s431] sm:$0xf]
                  %434 = vst [vmem:[%s432] sm:$0xf] %v433
                  %v435 = vld [vmem:[%s431 + $0x4] sm:$0xf]
                  %436 = vst [vmem:[%s432 + $0x4] sm:$0xf] %v435
                  %v437 = vld [vmem:[%s431 + $0x20] sm:$0xf]
                  %438 = vst [vmem:[%s432 + $0x8] sm:$0xf] %v437
                  %v439 = vld [vmem:[%s431 + $0x24] sm:$0xf]
                  %440 = vst [vmem:[%s432 + $0xc] sm:$0xf] %v439
                  %v441 = vld [vmem:[%s431 + $0x40] sm:$0xf]
                  %442 = vst [vmem:[%s432 + $0x10] sm:$0xf] %v441
                  %v443 = vld [vmem:[%s431 + $0x44] sm:$0xf]
                  %444 = vst [vmem:[%s432 + $0x14] sm:$0xf] %v443
                  %v445 = vld [vmem:[%s431 + $0x60] sm:$0xf]
                  %446 = vst [vmem:[%s432 + $0x18] sm:$0xf] %v445
                  %v447 = vld [vmem:[%s431 + $0x64] sm:$0xf]
                  %448 = vst [vmem:[%s432 + $0x1c] sm:$0xf] %v447
                $region71: #{_lambda_.1} parent=58 // loop_footer
                  %s430 = sadd.s32 1, %s426
                $region72: #{_lambda_.1} parent=58 // loop_footer_branch
                  %425 = sbr.rel target = $region68
                $region73: #{_lambda_.1} parent=58 // loop_exit
                  _
              $region59: #{_lambda_.1} parent=43 // pred_fallthru
                _
            $region44: #{_lambda_.1} parent=39 // pred_fallthru
              _
            // Predicated region
            $region45: #{_lambda_.1} parent=39 // pred_check
              _
            $region46: #{_lambda_.1} parent=39 // pred_check_branch
              %388 = sbr.rel (0) target = $region48
            $region47: #{_lambda_.1} parent=39 // pred_region
              loop: start=0, step=1, limit=1
              $region49: #{_lambda_.1} parent=47 // loop_pre_header
                _
              $region50: #{_lambda_.1} parent=47 // loop_header
                %s391 = sphi 0, %s395
                %p392 = scmp.ge.s32.totalorder %s391, 1
                %s396 = sphi %s382, %s382
                %s397 = sphi %s377, %s377
              $region51: #{_lambda_.1} parent=47 // loop_header_branch
                %394 = sbr.rel (%p392) target = $region55
              $region52: #{_lambda_.1} parent=47 // loop_body
                %v398 = vld [vmem:[%s396] sm:$0xf]
                %399 = vst [vmem:[%s397] sm:$0xf] %v398
                %v400 = vld [vmem:[%s396 + $0x4] sm:$0xf]
                %401 = vst [vmem:[%s397 + $0x4] sm:$0xf] %v400
                %v402 = vld [vmem:[%s396 + $0x20] sm:$0xf]
                %403 = vst [vmem:[%s397 + $0x8] sm:$0xf] %v402
                %v404 = vld [vmem:[%s396 + $0x24] sm:$0xf]
                %405 = vst [vmem:[%s397 + $0xc] sm:$0xf] %v404
                %v406 = vld [vmem:[%s396 + $0x40] sm:$0xf]
                %407 = vst [vmem:[%s397 + $0x10] sm:$0xf] %v406
                %v408 = vld [vmem:[%s396 + $0x44] sm:$0xf]
                %409 = vst [vmem:[%s397 + $0x14] sm:$0xf] %v408
                %v410 = vld [vmem:[%s396 + $0x60] sm:$0xf]
                %411 = vst [vmem:[%s397 + $0x18] sm:$0xf] %v410
                %v412 = vld [vmem:[%s396 + $0x64] sm:$0xf]
                %413 = vst [vmem:[%s397 + $0x1c] sm:$0xf] %v412
              $region53: #{_lambda_.1} parent=47 // loop_footer
                %s395 = sadd.s32 1, %s391
              $region54: #{_lambda_.1} parent=47 // loop_footer_branch
                %390 = sbr.rel target = $region50
              $region55: #{_lambda_.1} parent=47 // loop_exit
                _
            $region48: #{_lambda_.1} parent=39 // pred_fallthru
              _
          $region40: #{_lambda_.1} parent=35 // pred_fallthru
            _
          %449 = vnop
        $region36: #{_lambda_.1} parent=31 // pred_fallthru
          _
        // Predicated region
        $region74: #{_lambda_.1} parent=31 // pred_check
          %p450 = pneg %p86
        $region75: #{_lambda_.1} parent=31 // pred_check_branch
          %452 = sbr.rel (%p450) target = $region77
        $region76: #{_lambda_.1} parent=31 // pred_region
          %s453 = sand.u32 %s76, 1
          %s454 = sand.u32 %s76, 1
          %s455 = smul.addr %s454, 16
          %s456 = scalar_lea.vmem [#allocation5], %s455
          %s457 = smul.u32 %s24, 2
          %s458 = ssub.s32 %s457, 1
          %p459 = scmp.gt.s32.totalorder %s458, 0
          %s460 = scalar_select %p459, %s458, 0
          %s461 = smul.addr %s23, 32
          %s462 = sadd.s32 %s460, %s461
          %s463 = smul.addr %s462, 4
          %s464 = scalar_lea.vmem %s1, %s463
          // Predicated region
          $region78: #{_lambda_.1} parent=76 // pred_check
            _
          $region79: #{_lambda_.1} parent=76 // pred_check_branch
            %466 = sbr.rel (0) target = $region81
          $region80: #{_lambda_.1} parent=76 // pred_region
            // Predicated region
            $region82: #{_lambda_.1} parent=80 // pred_check
              _
            $region83: #{_lambda_.1} parent=80 // pred_check_branch
              %468 = sbr.rel target = $region85
            $region84: #{_lambda_.1} parent=80 // pred_region
              // Predicated region
              $region97: #{_lambda_.1} parent=84 // pred_check
                _
              $region98: #{_lambda_.1} parent=84 // pred_check_branch
                %489 = sbr.rel (0) target = $region100
              $region99: #{_lambda_.1} parent=84 // pred_region
                loop: start=0, step=1, limit=1
                $region101: #{_lambda_.1} parent=99 // loop_pre_header
                  _
                $region102: #{_lambda_.1} parent=99 // loop_header
                  %s491 = sphi 0, %s495
                  %p492 = scmp.ge.s32.totalorder %s491, 1
                  %s496 = sphi %s464, %s464
                  %s497 = sphi %s456, %s456
                $region103: #{_lambda_.1} parent=99 // loop_header_branch
                  %494 = sbr.rel (%p492) target = $region107
                $region104: #{_lambda_.1} parent=99 // loop_body
                  _
                $region105: #{_lambda_.1} parent=99 // loop_footer
                  %s495 = sadd.s32 1, %s491
                $region106: #{_lambda_.1} parent=99 // loop_footer_branch
                  %490 = sbr.rel target = $region102
                $region107: #{_lambda_.1} parent=99 // loop_exit
                  _
                loop: start=0, step=1, limit=1
                $region108: #{_lambda_.1} parent=99 // loop_pre_header
                  _
                $region109: #{_lambda_.1} parent=99 // loop_header
                  %s500 = sphi 0, %s504
                  %p501 = scmp.ge.s32.totalorder %s500, 1
                  %s505 = sphi %s464, %s464
                  %s506 = sphi %s456, %s456
                $region110: #{_lambda_.1} parent=99 // loop_header_branch
                  %503 = sbr.rel (%p501) target = $region114
                $region111: #{_lambda_.1} parent=99 // loop_body
                  %v507 = vld [vmem:[%s505] sm:$0xf]
                  %508 = vst [vmem:[%s506] sm:$0xf] %v507
                  %v509 = vld [vmem:[%s505 + $0x20] sm:$0xf]
                  %510 = vst [vmem:[%s506 + $0x4] sm:$0xf] %v509
                  %v511 = vld [vmem:[%s505 + $0x40] sm:$0xf]
                  %512 = vst [vmem:[%s506 + $0x8] sm:$0xf] %v511
                  %v513 = vld [vmem:[%s505 + $0x60] sm:$0xf]
                  %514 = vst [vmem:[%s506 + $0xc] sm:$0xf] %v513
                $region112: #{_lambda_.1} parent=99 // loop_footer
                  %s504 = sadd.s32 1, %s500
                $region113: #{_lambda_.1} parent=99 // loop_footer_branch
                  %499 = sbr.rel target = $region109
                $region114: #{_lambda_.1} parent=99 // loop_exit
                  _
              $region100: #{_lambda_.1} parent=84 // pred_fallthru
                _
            $region85: #{_lambda_.1} parent=80 // pred_fallthru
              _
            // Predicated region
            $region86: #{_lambda_.1} parent=80 // pred_check
              _
            $region87: #{_lambda_.1} parent=80 // pred_check_branch
              %470 = sbr.rel (0) target = $region89
            $region88: #{_lambda_.1} parent=80 // pred_region
              loop: start=0, step=1, limit=1
              $region90: #{_lambda_.1} parent=88 // loop_pre_header
                _
              $region91: #{_lambda_.1} parent=88 // loop_header
                %s473 = sphi 0, %s477
                %p474 = scmp.ge.s32.totalorder %s473, 1
                %s478 = sphi %s464, %s464
                %s479 = sphi %s456, %s456
              $region92: #{_lambda_.1} parent=88 // loop_header_branch
                %476 = sbr.rel (%p474) target = $region96
              $region93: #{_lambda_.1} parent=88 // loop_body
                %v480 = vld [vmem:[%s478] sm:$0xf]
                %481 = vst [vmem:[%s479] sm:$0xf] %v480
                %v482 = vld [vmem:[%s478 + $0x20] sm:$0xf]
                %483 = vst [vmem:[%s479 + $0x4] sm:$0xf] %v482
                %v484 = vld [vmem:[%s478 + $0x40] sm:$0xf]
                %485 = vst [vmem:[%s479 + $0x8] sm:$0xf] %v484
                %v486 = vld [vmem:[%s478 + $0x60] sm:$0xf]
                %487 = vst [vmem:[%s479 + $0xc] sm:$0xf] %v486
              $region94: #{_lambda_.1} parent=88 // loop_footer
                %s477 = sadd.s32 1, %s473
              $region95: #{_lambda_.1} parent=88 // loop_footer_branch
                %472 = sbr.rel target = $region91
              $region96: #{_lambda_.1} parent=88 // loop_exit
                _
            $region89: #{_lambda_.1} parent=80 // pred_fallthru
              _
          $region81: #{_lambda_.1} parent=76 // pred_fallthru
            _
          %515 = vnop
        $region77: #{_lambda_.1} parent=31 // pred_fallthru
          _
        // Predicated region
        $region115: #{_lambda_.1} parent=31 // pred_check
          %p516 = pneg %p122
        $region116: #{_lambda_.1} parent=31 // pred_check_branch
          %518 = sbr.rel (%p516) target = $region118
        $region117: #{_lambda_.1} parent=31 // pred_region
          %s519 = sand.u32 %s112, 1
          %s520 = sand.u32 %s112, 1
          %s521 = smul.addr %s520, 16
          %s522 = scalar_lea.vmem [#allocation6], %s521
          %s523 = sadd.s32 %s24, 1
          %s524 = smul.u32 %s523, 2
          %p525 = scmp.lt.s32.totalorder %s524, 7
          %s526 = scalar_select %p525, %s524, 7
          %s527 = smul.addr %s23, 32
          %s528 = sadd.s32 %s526, %s527
          %s529 = smul.addr %s528, 4
          %s530 = scalar_lea.vmem %s2, %s529
          // Predicated region
          $region119: #{_lambda_.1} parent=117 // pred_check
            _
          $region120: #{_lambda_.1} parent=117 // pred_check_branch
            %532 = sbr.rel (0) target = $region122
          $region121: #{_lambda_.1} parent=117 // pred_region
            // Predicated region
            $region123: #{_lambda_.1} parent=121 // pred_check
              _
            $region124: #{_lambda_.1} parent=121 // pred_check_branch
              %534 = sbr.rel target = $region126
            $region125: #{_lambda_.1} parent=121 // pred_region
              // Predicated region
              $region138: #{_lambda_.1} parent=125 // pred_check
                _
              $region139: #{_lambda_.1} parent=125 // pred_check_branch
                %555 = sbr.rel (0) target = $region141
              $region140: #{_lambda_.1} parent=125 // pred_region
                loop: start=0, step=1, limit=1
                $region142: #{_lambda_.1} parent=140 // loop_pre_header
                  _
                $region143: #{_lambda_.1} parent=140 // loop_header
                  %s557 = sphi 0, %s561
                  %p558 = scmp.ge.s32.totalorder %s557, 1
                  %s562 = sphi %s530, %s530
                  %s563 = sphi %s522, %s522
                $region144: #{_lambda_.1} parent=140 // loop_header_branch
                  %560 = sbr.rel (%p558) target = $region148
                $region145: #{_lambda_.1} parent=140 // loop_body
                  _
                $region146: #{_lambda_.1} parent=140 // loop_footer
                  %s561 = sadd.s32 1, %s557
                $region147: #{_lambda_.1} parent=140 // loop_footer_branch
                  %556 = sbr.rel target = $region143
                $region148: #{_lambda_.1} parent=140 // loop_exit
                  _
                loop: start=0, step=1, limit=1
                $region149: #{_lambda_.1} parent=140 // loop_pre_header
                  _
                $region150: #{_lambda_.1} parent=140 // loop_header
                  %s566 = sphi 0, %s570
                  %p567 = scmp.ge.s32.totalorder %s566, 1
                  %s571 = sphi %s530, %s530
                  %s572 = sphi %s522, %s522
                $region151: #{_lambda_.1} parent=140 // loop_header_branch
                  %569 = sbr.rel (%p567) target = $region155
                $region152: #{_lambda_.1} parent=140 // loop_body
                  %v573 = vld [vmem:[%s571] sm:$0xf]
                  %574 = vst [vmem:[%s572] sm:$0xf] %v573
                  %v575 = vld [vmem:[%s571 + $0x20] sm:$0xf]
                  %576 = vst [vmem:[%s572 + $0x4] sm:$0xf] %v575
                  %v577 = vld [vmem:[%s571 + $0x40] sm:$0xf]
                  %578 = vst [vmem:[%s572 + $0x8] sm:$0xf] %v577
                  %v579 = vld [vmem:[%s571 + $0x60] sm:$0xf]
                  %580 = vst [vmem:[%s572 + $0xc] sm:$0xf] %v579
                $region153: #{_lambda_.1} parent=140 // loop_footer
                  %s570 = sadd.s32 1, %s566
                $region154: #{_lambda_.1} parent=140 // loop_footer_branch
                  %565 = sbr.rel target = $region150
                $region155: #{_lambda_.1} parent=140 // loop_exit
                  _
              $region141: #{_lambda_.1} parent=125 // pred_fallthru
                _
            $region126: #{_lambda_.1} parent=121 // pred_fallthru
              _
            // Predicated region
            $region127: #{_lambda_.1} parent=121 // pred_check
              _
            $region128: #{_lambda_.1} parent=121 // pred_check_branch
              %536 = sbr.rel (0) target = $region130
            $region129: #{_lambda_.1} parent=121 // pred_region
              loop: start=0, step=1, limit=1
              $region131: #{_lambda_.1} parent=129 // loop_pre_header
                _
              $region132: #{_lambda_.1} parent=129 // loop_header
                %s539 = sphi 0, %s543
                %p540 = scmp.ge.s32.totalorder %s539, 1
                %s544 = sphi %s530, %s530
                %s545 = sphi %s522, %s522
              $region133: #{_lambda_.1} parent=129 // loop_header_branch
                %542 = sbr.rel (%p540) target = $region137
              $region134: #{_lambda_.1} parent=129 // loop_body
                %v546 = vld [vmem:[%s544] sm:$0xf]
                %547 = vst [vmem:[%s545] sm:$0xf] %v546
                %v548 = vld [vmem:[%s544 + $0x20] sm:$0xf]
                %549 = vst [vmem:[%s545 + $0x4] sm:$0xf] %v548
                %v550 = vld [vmem:[%s544 + $0x40] sm:$0xf]
                %551 = vst [vmem:[%s545 + $0x8] sm:$0xf] %v550
                %v552 = vld [vmem:[%s544 + $0x60] sm:$0xf]
                %553 = vst [vmem:[%s545 + $0xc] sm:$0xf] %v552
              $region135: #{_lambda_.1} parent=129 // loop_footer
                %s543 = sadd.s32 1, %s539
              $region136: #{_lambda_.1} parent=129 // loop_footer_branch
                %538 = sbr.rel target = $region132
              $region137: #{_lambda_.1} parent=129 // loop_exit
                _
            $region130: #{_lambda_.1} parent=121 // pred_fallthru
              _
          $region122: #{_lambda_.1} parent=117 // pred_fallthru
            _
          %581 = vnop
        $region118: #{_lambda_.1} parent=31 // pred_fallthru
          _
        // Predicated region
        $region156: #{_lambda_.1} parent=31 // pred_check
          %p582 = pneg %p150
        $region157: #{_lambda_.1} parent=31 // pred_check_branch
          %584 = sbr.rel (%p582) target = $region159
        $region158: #{_lambda_.1} parent=31 // pred_region
          %s585 = sand.u32 %s140, 1
          %s586 = sand.u32 %s140, 1
          %s587 = smul.addr %s586, 32
          %s588 = scalar_lea.vmem [#allocation7], %s587
          %s589 = smul.u32 2, %s24
          %s590 = smul.addr %s23, 32
          %s591 = sadd.s32 %s589, %s590
          %s592 = smul.addr %s591, 4
          %s593 = scalar_lea.vmem %s3, %s592
          // Predicated region
          $region160: #{_lambda_.1} parent=158 // pred_check
            _
          $region161: #{_lambda_.1} parent=158 // pred_check_branch
            %595 = sbr.rel (0) target = $region163
          $region162: #{_lambda_.1} parent=158 // pred_region
            // Predicated region
            $region164: #{_lambda_.1} parent=162 // pred_check
              _
            $region165: #{_lambda_.1} parent=162 // pred_check_branch
              %597 = sbr.rel target = $region167
            $region166: #{_lambda_.1} parent=162 // pred_region
              // Predicated region
              $region179: #{_lambda_.1} parent=166 // pred_check
                _
              $region180: #{_lambda_.1} parent=166 // pred_check_branch
                %626 = sbr.rel (0) target = $region182
              $region181: #{_lambda_.1} parent=166 // pred_region
                loop: start=0, step=1, limit=1
                $region183: #{_lambda_.1} parent=181 // loop_pre_header
                  _
                $region184: #{_lambda_.1} parent=181 // loop_header
                  %s628 = sphi 0, %s632
                  %p629 = scmp.ge.s32.totalorder %s628, 1
                  %s633 = sphi %s593, %s593
                  %s634 = sphi %s588, %s588
                $region185: #{_lambda_.1} parent=181 // loop_header_branch
                  %631 = sbr.rel (%p629) target = $region189
                $region186: #{_lambda_.1} parent=181 // loop_body
                  _
                $region187: #{_lambda_.1} parent=181 // loop_footer
                  %s632 = sadd.s32 1, %s628
                $region188: #{_lambda_.1} parent=181 // loop_footer_branch
                  %627 = sbr.rel target = $region184
                $region189: #{_lambda_.1} parent=181 // loop_exit
                  _
                loop: start=0, step=1, limit=1
                $region190: #{_lambda_.1} parent=181 // loop_pre_header
                  _
                $region191: #{_lambda_.1} parent=181 // loop_header
                  %s637 = sphi 0, %s641
                  %p638 = scmp.ge.s32.totalorder %s637, 1
                  %s642 = sphi %s593, %s593
                  %s643 = sphi %s588, %s588
                $region192: #{_lambda_.1} parent=181 // loop_header_branch
                  %640 = sbr.rel (%p638) target = $region196
                $region193: #{_lambda_.1} parent=181 // loop_body
                  %v644 = vld [vmem:[%s642] sm:$0xf]
                  %645 = vst [vmem:[%s643] sm:$0xf] %v644
                  %v646 = vld [vmem:[%s642 + $0x4] sm:$0xf]
                  %647 = vst [vmem:[%s643 + $0x4] sm:$0xf] %v646
                  %v648 = vld [vmem:[%s642 + $0x20] sm:$0xf]
                  %649 = vst [vmem:[%s643 + $0x8] sm:$0xf] %v648
                  %v650 = vld [vmem:[%s642 + $0x24] sm:$0xf]
                  %651 = vst [vmem:[%s643 + $0xc] sm:$0xf] %v650
                  %v652 = vld [vmem:[%s642 + $0x40] sm:$0xf]
                  %653 = vst [vmem:[%s643 + $0x10] sm:$0xf] %v652
                  %v654 = vld [vmem:[%s642 + $0x44] sm:$0xf]
                  %655 = vst [vmem:[%s643 + $0x14] sm:$0xf] %v654
                  %v656 = vld [vmem:[%s642 + $0x60] sm:$0xf]
                  %657 = vst [vmem:[%s643 + $0x18] sm:$0xf] %v656
                  %v658 = vld [vmem:[%s642 + $0x64] sm:$0xf]
                  %659 = vst [vmem:[%s643 + $0x1c] sm:$0xf] %v658
                $region194: #{_lambda_.1} parent=181 // loop_footer
                  %s641 = sadd.s32 1, %s637
                $region195: #{_lambda_.1} parent=181 // loop_footer_branch
                  %636 = sbr.rel target = $region191
                $region196: #{_lambda_.1} parent=181 // loop_exit
                  _
              $region182: #{_lambda_.1} parent=166 // pred_fallthru
                _
            $region167: #{_lambda_.1} parent=162 // pred_fallthru
              _
            // Predicated region
            $region168: #{_lambda_.1} parent=162 // pred_check
              _
            $region169: #{_lambda_.1} parent=162 // pred_check_branch
              %599 = sbr.rel (0) target = $region171
            $region170: #{_lambda_.1} parent=162 // pred_region
              loop: start=0, step=1, limit=1
              $region172: #{_lambda_.1} parent=170 // loop_pre_header
                _
              $region173: #{_lambda_.1} parent=170 // loop_header
                %s602 = sphi 0, %s606
                %p603 = scmp.ge.s32.totalorder %s602, 1
                %s607 = sphi %s593, %s593
                %s608 = sphi %s588, %s588
              $region174: #{_lambda_.1} parent=170 // loop_header_branch
                %605 = sbr.rel (%p603) target = $region178
              $region175: #{_lambda_.1} parent=170 // loop_body
                %v609 = vld [vmem:[%s607] sm:$0xf]
                %610 = vst [vmem:[%s608] sm:$0xf] %v609
                %v611 = vld [vmem:[%s607 + $0x4] sm:$0xf]
                %612 = vst [vmem:[%s608 + $0x4] sm:$0xf] %v611
                %v613 = vld [vmem:[%s607 + $0x20] sm:$0xf]
                %614 = vst [vmem:[%s608 + $0x8] sm:$0xf] %v613
                %v615 = vld [vmem:[%s607 + $0x24] sm:$0xf]
                %616 = vst [vmem:[%s608 + $0xc] sm:$0xf] %v615
                %v617 = vld [vmem:[%s607 + $0x40] sm:$0xf]
                %618 = vst [vmem:[%s608 + $0x10] sm:$0xf] %v617
                %v619 = vld [vmem:[%s607 + $0x44] sm:$0xf]
                %620 = vst [vmem:[%s608 + $0x14] sm:$0xf] %v619
                %v621 = vld [vmem:[%s607 + $0x60] sm:$0xf]
                %622 = vst [vmem:[%s608 + $0x18] sm:$0xf] %v621
                %v623 = vld [vmem:[%s607 + $0x64] sm:$0xf]
                %624 = vst [vmem:[%s608 + $0x1c] sm:$0xf] %v623
              $region176: #{_lambda_.1} parent=170 // loop_footer
                %s606 = sadd.s32 1, %s602
              $region177: #{_lambda_.1} parent=170 // loop_footer_branch
                %601 = sbr.rel target = $region173
              $region178: #{_lambda_.1} parent=170 // loop_exit
                _
            $region171: #{_lambda_.1} parent=162 // pred_fallthru
              _
          $region163: #{_lambda_.1} parent=158 // pred_fallthru
            _
          %660 = vnop
        $region159: #{_lambda_.1} parent=31 // pred_fallthru
          _
        // Predicated region
        $region197: #{_lambda_.1} parent=31 // pred_check
          %p661 = pneg %p186
        $region198: #{_lambda_.1} parent=31 // pred_check_branch
          %663 = sbr.rel (%p661) target = $region200
        $region199: #{_lambda_.1} parent=31 // pred_region
          %s664 = sand.u32 %s176, 1
          %s665 = sand.u32 %s176, 1
          %s666 = smul.addr %s665, 16
          %s667 = scalar_lea.vmem [#allocation8], %s666
          %s668 = smul.u32 %s24, 2
          %s669 = ssub.s32 %s668, 1
          %p670 = scmp.gt.s32.totalorder %s669, 0
          %s671 = scalar_select %p670, %s669, 0
          %s672 = smul.addr %s23, 32
          %s673 = sadd.s32 %s671, %s672
          %s674 = smul.addr %s673, 4
          %s675 = scalar_lea.vmem %s4, %s674
          // Predicated region
          $region201: #{_lambda_.1} parent=199 // pred_check
            _
          $region202: #{_lambda_.1} parent=199 // pred_check_branch
            %677 = sbr.rel (0) target = $region204
          $region203: #{_lambda_.1} parent=199 // pred_region
            // Predicated region
            $region205: #{_lambda_.1} parent=203 // pred_check
              _
            $region206: #{_lambda_.1} parent=203 // pred_check_branch
              %679 = sbr.rel target = $region208
            $region207: #{_lambda_.1} parent=203 // pred_region
              // Predicated region
              $region220: #{_lambda_.1} parent=207 // pred_check
                _
              $region221: #{_lambda_.1} parent=207 // pred_check_branch
                %700 = sbr.rel (0) target = $region223
              $region222: #{_lambda_.1} parent=207 // pred_region
                loop: start=0, step=1, limit=1
                $region224: #{_lambda_.1} parent=222 // loop_pre_header
                  _
                $region225: #{_lambda_.1} parent=222 // loop_header
                  %s702 = sphi 0, %s706
                  %p703 = scmp.ge.s32.totalorder %s702, 1
                  %s707 = sphi %s675, %s675
                  %s708 = sphi %s667, %s667
                $region226: #{_lambda_.1} parent=222 // loop_header_branch
                  %705 = sbr.rel (%p703) target = $region230
                $region227: #{_lambda_.1} parent=222 // loop_body
                  _
                $region228: #{_lambda_.1} parent=222 // loop_footer
                  %s706 = sadd.s32 1, %s702
                $region229: #{_lambda_.1} parent=222 // loop_footer_branch
                  %701 = sbr.rel target = $region225
                $region230: #{_lambda_.1} parent=222 // loop_exit
                  _
                loop: start=0, step=1, limit=1
                $region231: #{_lambda_.1} parent=222 // loop_pre_header
                  _
                $region232: #{_lambda_.1} parent=222 // loop_header
                  %s711 = sphi 0, %s715
                  %p712 = scmp.ge.s32.totalorder %s711, 1
                  %s716 = sphi %s675, %s675
                  %s717 = sphi %s667, %s667
                $region233: #{_lambda_.1} parent=222 // loop_header_branch
                  %714 = sbr.rel (%p712) target = $region237
                $region234: #{_lambda_.1} parent=222 // loop_body
                  %v718 = vld [vmem:[%s716] sm:$0xf]
                  %719 = vst [vmem:[%s717] sm:$0xf] %v718
                  %v720 = vld [vmem:[%s716 + $0x20] sm:$0xf]
                  %721 = vst [vmem:[%s717 + $0x4] sm:$0xf] %v720
                  %v722 = vld [vmem:[%s716 + $0x40] sm:$0xf]
                  %723 = vst [vmem:[%s717 + $0x8] sm:$0xf] %v722
                  %v724 = vld [vmem:[%s716 + $0x60] sm:$0xf]
                  %725 = vst [vmem:[%s717 + $0xc] sm:$0xf] %v724
                $region235: #{_lambda_.1} parent=222 // loop_footer
                  %s715 = sadd.s32 1, %s711
                $region236: #{_lambda_.1} parent=222 // loop_footer_branch
                  %710 = sbr.rel target = $region232
                $region237: #{_lambda_.1} parent=222 // loop_exit
                  _
              $region223: #{_lambda_.1} parent=207 // pred_fallthru
                _
            $region208: #{_lambda_.1} parent=203 // pred_fallthru
              _
            // Predicated region
            $region209: #{_lambda_.1} parent=203 // pred_check
              _
            $region210: #{_lambda_.1} parent=203 // pred_check_branch
              %681 = sbr.rel (0) target = $region212
            $region211: #{_lambda_.1} parent=203 // pred_region
              loop: start=0, step=1, limit=1
              $region213: #{_lambda_.1} parent=211 // loop_pre_header
                _
              $region214: #{_lambda_.1} parent=211 // loop_header
                %s684 = sphi 0, %s688
                %p685 = scmp.ge.s32.totalorder %s684, 1
                %s689 = sphi %s675, %s675
                %s690 = sphi %s667, %s667
              $region215: #{_lambda_.1} parent=211 // loop_header_branch
                %687 = sbr.rel (%p685) target = $region219
              $region216: #{_lambda_.1} parent=211 // loop_body
                %v691 = vld [vmem:[%s689] sm:$0xf]
                %692 = vst [vmem:[%s690] sm:$0xf] %v691
                %v693 = vld [vmem:[%s689 + $0x20] sm:$0xf]
                %694 = vst [vmem:[%s690 + $0x4] sm:$0xf] %v693
                %v695 = vld [vmem:[%s689 + $0x40] sm:$0xf]
                %696 = vst [vmem:[%s690 + $0x8] sm:$0xf] %v695
                %v697 = vld [vmem:[%s689 + $0x60] sm:$0xf]
                %698 = vst [vmem:[%s690 + $0xc] sm:$0xf] %v697
              $region217: #{_lambda_.1} parent=211 // loop_footer
                %s688 = sadd.s32 1, %s684
              $region218: #{_lambda_.1} parent=211 // loop_footer_branch
                %683 = sbr.rel target = $region214
              $region219: #{_lambda_.1} parent=211 // loop_exit
                _
            $region212: #{_lambda_.1} parent=203 // pred_fallthru
              _
          $region204: #{_lambda_.1} parent=199 // pred_fallthru
            _
          %726 = vnop
        $region200: #{_lambda_.1} parent=31 // pred_fallthru
          _
        // Predicated region
        $region238: #{_lambda_.1} parent=31 // pred_check
          %p727 = pneg %p222
        $region239: #{_lambda_.1} parent=31 // pred_check_branch
          %729 = sbr.rel (%p727) target = $region241
        $region240: #{_lambda_.1} parent=31 // pred_region
          %s730 = sand.u32 %s212, 1
          %s731 = sand.u32 %s212, 1
          %s732 = smul.addr %s731, 16
          %s733 = scalar_lea.vmem [#allocation9], %s732
          %s734 = sadd.s32 %s24, 1
          %s735 = smul.u32 %s734, 2
          %p736 = scmp.lt.s32.totalorder %s735, 7
          %s737 = scalar_select %p736, %s735, 7
          %s738 = smul.addr %s23, 32
          %s739 = sadd.s32 %s737, %s738
          %s740 = smul.addr %s739, 4
          %s741 = scalar_lea.vmem %s5, %s740
          // Predicated region
          $region242: #{_lambda_.1} parent=240 // pred_check
            _
          $region243: #{_lambda_.1} parent=240 // pred_check_branch
            %743 = sbr.rel (0) target = $region245
          $region244: #{_lambda_.1} parent=240 // pred_region
            // Predicated region
            $region246: #{_lambda_.1} parent=244 // pred_check
              _
            $region247: #{_lambda_.1} parent=244 // pred_check_branch
              %745 = sbr.rel target = $region249
            $region248: #{_lambda_.1} parent=244 // pred_region
              // Predicated region
              $region261: #{_lambda_.1} parent=248 // pred_check
                _
              $region262: #{_lambda_.1} parent=248 // pred_check_branch
                %766 = sbr.rel (0) target = $region264
              $region263: #{_lambda_.1} parent=248 // pred_region
                loop: start=0, step=1, limit=1
                $region265: #{_lambda_.1} parent=263 // loop_pre_header
                  _
                $region266: #{_lambda_.1} parent=263 // loop_header
                  %s768 = sphi 0, %s772
                  %p769 = scmp.ge.s32.totalorder %s768, 1
                  %s773 = sphi %s741, %s741
                  %s774 = sphi %s733, %s733
                $region267: #{_lambda_.1} parent=263 // loop_header_branch
                  %771 = sbr.rel (%p769) target = $region271
                $region268: #{_lambda_.1} parent=263 // loop_body
                  _
                $region269: #{_lambda_.1} parent=263 // loop_footer
                  %s772 = sadd.s32 1, %s768
                $region270: #{_lambda_.1} parent=263 // loop_footer_branch
                  %767 = sbr.rel target = $region266
                $region271: #{_lambda_.1} parent=263 // loop_exit
                  _
                loop: start=0, step=1, limit=1
                $region272: #{_lambda_.1} parent=263 // loop_pre_header
                  _
                $region273: #{_lambda_.1} parent=263 // loop_header
                  %s777 = sphi 0, %s781
                  %p778 = scmp.ge.s32.totalorder %s777, 1
                  %s782 = sphi %s741, %s741
                  %s783 = sphi %s733, %s733
                $region274: #{_lambda_.1} parent=263 // loop_header_branch
                  %780 = sbr.rel (%p778) target = $region278
                $region275: #{_lambda_.1} parent=263 // loop_body
                  %v784 = vld [vmem:[%s782] sm:$0xf]
                  %785 = vst [vmem:[%s783] sm:$0xf] %v784
                  %v786 = vld [vmem:[%s782 + $0x20] sm:$0xf]
                  %787 = vst [vmem:[%s783 + $0x4] sm:$0xf] %v786
                  %v788 = vld [vmem:[%s782 + $0x40] sm:$0xf]
                  %789 = vst [vmem:[%s783 + $0x8] sm:$0xf] %v788
                  %v790 = vld [vmem:[%s782 + $0x60] sm:$0xf]
                  %791 = vst [vmem:[%s783 + $0xc] sm:$0xf] %v790
                $region276: #{_lambda_.1} parent=263 // loop_footer
                  %s781 = sadd.s32 1, %s777
                $region277: #{_lambda_.1} parent=263 // loop_footer_branch
                  %776 = sbr.rel target = $region273
                $region278: #{_lambda_.1} parent=263 // loop_exit
                  _
              $region264: #{_lambda_.1} parent=248 // pred_fallthru
                _
            $region249: #{_lambda_.1} parent=244 // pred_fallthru
              _
            // Predicated region
            $region250: #{_lambda_.1} parent=244 // pred_check
              _
            $region251: #{_lambda_.1} parent=244 // pred_check_branch
              %747 = sbr.rel (0) target = $region253
            $region252: #{_lambda_.1} parent=244 // pred_region
              loop: start=0, step=1, limit=1
              $region254: #{_lambda_.1} parent=252 // loop_pre_header
                _
              $region255: #{_lambda_.1} parent=252 // loop_header
                %s750 = sphi 0, %s754
                %p751 = scmp.ge.s32.totalorder %s750, 1
                %s755 = sphi %s741, %s741
                %s756 = sphi %s733, %s733
              $region256: #{_lambda_.1} parent=252 // loop_header_branch
                %753 = sbr.rel (%p751) target = $region260
              $region257: #{_lambda_.1} parent=252 // loop_body
                %v757 = vld [vmem:[%s755] sm:$0xf]
                %758 = vst [vmem:[%s756] sm:$0xf] %v757
                %v759 = vld [vmem:[%s755 + $0x20] sm:$0xf]
                %760 = vst [vmem:[%s756 + $0x4] sm:$0xf] %v759
                %v761 = vld [vmem:[%s755 + $0x40] sm:$0xf]
                %762 = vst [vmem:[%s756 + $0x8] sm:$0xf] %v761
                %v763 = vld [vmem:[%s755 + $0x60] sm:$0xf]
                %764 = vst [vmem:[%s756 + $0xc] sm:$0xf] %v763
              $region258: #{_lambda_.1} parent=252 // loop_footer
                %s754 = sadd.s32 1, %s750
              $region259: #{_lambda_.1} parent=252 // loop_footer_branch
                %749 = sbr.rel target = $region255
              $region260: #{_lambda_.1} parent=252 // loop_exit
                _
            $region253: #{_lambda_.1} parent=244 // pred_fallthru
              _
          $region245: #{_lambda_.1} parent=240 // pred_fallthru
            _
          %792 = vnop
        $region241: #{_lambda_.1} parent=31 // pred_fallthru
          _
      $region32: #{_lambda_.1} parent=5 // pred_fallthru
        _
      %p793 = scmp.le.s32.totalorder 1, %s16
      %p794 = scmp.lt.s32.totalorder %s16, 9
      %p795 = pnand %p793, %p794
      %p796 = pneg %p795
      // Predicated region
      $region279: #{_lambda_.1} parent=5 // pred_check
        _
      $region280: #{_lambda_.1} parent=5 // pred_check_branch
        %798 = sbr.rel (%p795) target = $region282
      $region281: #{_lambda_.1} parent=5 // pred_region
        %s799 = ssub.s32 %s16, 1
        %s800 = sand.u32 %s43, 1
        %s801 = sand.u32 %s43, 1
        %s802 = smul.addr %s801, 32
        %s803 = scalar_lea.vmem [#allocation4], %s802
        // Predicated region
        $region283: #{_lambda_.1} parent=281 // pred_check
          %p804 = pneg %p56
        $region284: #{_lambda_.1} parent=281 // pred_check_branch
          %806 = sbr.rel (%p804) target = $region286
        $region285: #{_lambda_.1} parent=281 // pred_region
          _
        $region286: #{_lambda_.1} parent=281 // pred_fallthru
          _
        %s807 = sand.u32 %s79, 1
        %s808 = sand.u32 %s79, 1
        %s809 = smul.addr %s808, 16
        %s810 = scalar_lea.vmem [#allocation5], %s809
        // Predicated region
        $region287: #{_lambda_.1} parent=281 // pred_check
          %p811 = pneg %p92
        $region288: #{_lambda_.1} parent=281 // pred_check_branch
          %813 = sbr.rel (%p811) target = $region290
        $region289: #{_lambda_.1} parent=281 // pred_region
          _
        $region290: #{_lambda_.1} parent=281 // pred_fallthru
          _
        %s814 = sand.u32 %s115, 1
        %s815 = sand.u32 %s115, 1
        %s816 = smul.addr %s815, 16
        %s817 = scalar_lea.vmem [#allocation6], %s816
        // Predicated region
        $region291: #{_lambda_.1} parent=281 // pred_check
          %p818 = pneg %p128
        $region292: #{_lambda_.1} parent=281 // pred_check_branch
          %820 = sbr.rel (%p818) target = $region294
        $region293: #{_lambda_.1} parent=281 // pred_region
          _
        $region294: #{_lambda_.1} parent=281 // pred_fallthru
          _
        %s821 = sand.u32 %s143, 1
        %s822 = sand.u32 %s143, 1
        %s823 = smul.addr %s822, 32
        %s824 = scalar_lea.vmem [#allocation7], %s823
        // Predicated region
        $region295: #{_lambda_.1} parent=281 // pred_check
          %p825 = pneg %p156
        $region296: #{_lambda_.1} parent=281 // pred_check_branch
          %827 = sbr.rel (%p825) target = $region298
        $region297: #{_lambda_.1} parent=281 // pred_region
          _
        $region298: #{_lambda_.1} parent=281 // pred_fallthru
          _
        %s828 = sand.u32 %s179, 1
        %s829 = sand.u32 %s179, 1
        %s830 = smul.addr %s829, 16
        %s831 = scalar_lea.vmem [#allocation8], %s830
        // Predicated region
        $region299: #{_lambda_.1} parent=281 // pred_check
          %p832 = pneg %p192
        $region300: #{_lambda_.1} parent=281 // pred_check_branch
          %834 = sbr.rel (%p832) target = $region302
        $region301: #{_lambda_.1} parent=281 // pred_region
          _
        $region302: #{_lambda_.1} parent=281 // pred_fallthru
          _
        %s835 = sand.u32 %s215, 1
        %s836 = sand.u32 %s215, 1
        %s837 = smul.addr %s836, 16
        %s838 = scalar_lea.vmem [#allocation9], %s837
        // Predicated region
        $region303: #{_lambda_.1} parent=281 // pred_check
          %p839 = pneg %p228
        $region304: #{_lambda_.1} parent=281 // pred_check_branch
          %841 = sbr.rel (%p839) target = $region306
        $region305: #{_lambda_.1} parent=281 // pred_region
          _
        $region306: #{_lambda_.1} parent=281 // pred_fallthru
          _
        %s842 = sand.u32 %s43, 1
        %s843 = sand.u32 %s43, 1
        %s844 = smul.addr %s843, 32
        %s845 = scalar_lea.vmem [#allocation4], %s844
        %p846 = pneg %p56
        %p847 = pneg %p53
        %s848 = sand.u32 %s79, 1
        %s849 = sand.u32 %s79, 1
        %s850 = smul.addr %s849, 16
        %s851 = scalar_lea.vmem [#allocation5], %s850
        %p852 = pneg %p92
        %p853 = pneg %p89
        %s854 = sand.u32 %s115, 1
        %s855 = sand.u32 %s115, 1
        %s856 = smul.addr %s855, 16
        %s857 = scalar_lea.vmem [#allocation6], %s856
        %p858 = pneg %p128
        %p859 = pneg %p125
        %s860 = sand.u32 %s143, 1
        %s861 = sand.u32 %s143, 1
        %s862 = smul.addr %s861, 32
        %s863 = scalar_lea.vmem [#allocation7], %s862
        %p864 = pneg %p156
        %p865 = pneg %p153
        %s866 = sand.u32 %s179, 1
        %s867 = sand.u32 %s179, 1
        %s868 = smul.addr %s867, 16
        %s869 = scalar_lea.vmem [#allocation8], %s868
        %p870 = pneg %p192
        %p871 = pneg %p189
        %s872 = sand.u32 %s215, 1
        %s873 = sand.u32 %s215, 1
        %s874 = smul.addr %s873, 16
        %s875 = scalar_lea.vmem [#allocation9], %s874
        %p876 = pneg %p228
        %p877 = pneg %p225
        %p878 = pneg %p249
        %p879 = pneg %p246
        %p880 = pneg %p270
        %p881 = pneg %p267
        %p882 = pneg %p291
        %p883 = pneg %p288
        %p884 = pneg %p312
        %p885 = pneg %p309
        %p886 = pneg %p340
        %p887 = pneg %p337
        %s888 = smul.u32 2, %s26
        %p889 = scmp.lt.s32.totalorder %s25, 1
        %s890 = scalar_select %p889, %s25, 1
        %p891 = scmp.lt.s32.totalorder %s888, 7
        %s892 = scalar_select %p891, %s888, 7
        %s893 = smul.addr %s890, 8
        %s894 = sadd.s32 %s892, %s893
        %s895 = smul.addr %s894, 4
        %s896 = scalar_lea.vmem %s10, %s895
        %s897 = smul.u32 2, %s26
        %s898 = smul.u32 %s26, 2
        %s899 = ssub.s32 %s898, 1
        %p900 = scmp.gt.s32.totalorder %s899, 0
        %s901 = scalar_select %p900, %s899, 0
        %s902 = sadd.s32 %s26, 1
        %s903 = smul.u32 %s902, 2
        %p904 = scmp.lt.s32.totalorder %s903, 7
        %s905 = scalar_select %p904, %s903, 7
        %s906 = smul.u32 2, %s26
        %s907 = smul.u32 %s26, 2
        %s908 = ssub.s32 %s907, 1
        %p909 = scmp.gt.s32.totalorder %s908, 0
        %s910 = scalar_select %p909, %s908, 0
        %s911 = sadd.s32 %s26, 1
        %s912 = smul.u32 %s911, 2
        %p913 = scmp.lt.s32.totalorder %s912, 7
        %s914 = scalar_select %p913, %s912, 7
        %s915 = smul.u32 2, %s26
        %p916 = scmp.lt.s32.totalorder %s25, 1
        %s917 = scalar_select %p916, %s25, 1
        %p918 = scmp.lt.s32.totalorder %s915, 7
        %s919 = scalar_select %p918, %s915, 7
        %s920 = smul.addr %s917, 8
        %s921 = sadd.s32 %s919, %s920
        %s922 = smul.addr %s921, 4
        %s923 = scalar_lea.vmem %s10, %s922
        %s924 = smul.u32 2, %s26
        %vm927 = vcmask 11264
        %928 = vst.msk [vmem:[#allocation2] sm:$0xf] %vm927, 0
        %929 = vst.msk [vmem:[#allocation2 + $0x4] sm:$0xf] %vm927, 0
        %930 = vst.msk [vmem:[#allocation2 + $0x8] sm:$0xf] %vm927, 0
        %vm931 = vcmask 9216
        %932 = vst.msk [vmem:[#allocation2 + $0xc] sm:$0x3] %vm931, 0
        %933 = vst.msk [vmem:[#allocation2 + $0x10] sm:$0xf] %vm927, 0
        %934 = vst.msk [vmem:[#allocation2 + $0x14] sm:$0xf] %vm927, 0
        %935 = vst.msk [vmem:[#allocation2 + $0x18] sm:$0xf] %vm927, 0
        %936 = vst.msk [vmem:[#allocation2 + $0x1c] sm:$0x3] %vm931, 0
        %937 = vst.msk [vmem:[#allocation2 + $0x20] sm:$0xf] %vm927, 0
        %938 = vst.msk [vmem:[#allocation2 + $0x24] sm:$0xf] %vm927, 0
        %939 = vst.msk [vmem:[#allocation2 + $0x28] sm:$0xf] %vm927, 0
        %940 = vst.msk [vmem:[#allocation2 + $0x2c] sm:$0x3] %vm931, 0
        %941 = vst.msk [vmem:[#allocation2 + $0x30] sm:$0xf] %vm927, 0
        %942 = vst.msk [vmem:[#allocation2 + $0x34] sm:$0xf] %vm927, 0
        %943 = vst.msk [vmem:[#allocation2 + $0x38] sm:$0xf] %vm927, 0
        %944 = vst.msk [vmem:[#allocation2 + $0x3c] sm:$0x3] %vm931, 0
        %945 = vst.msk [vmem:[#allocation3] sm:$0xf] %vm927, 4048220490
        %946 = vst.msk [vmem:[#allocation3 + $0x4] sm:$0xf] %vm927, 4048220490
        %947 = vst.msk [vmem:[#allocation3 + $0x8] sm:$0xf] %vm927, 4048220490
        %948 = vst.msk [vmem:[#allocation3 + $0xc] sm:$0x3] %vm931, 4048220490
        %949 = vst.msk [vmem:[#allocation3 + $0x10] sm:$0xf] %vm927, 4048220490
        %950 = vst.msk [vmem:[#allocation3 + $0x14] sm:$0xf] %vm927, 4048220490
        %951 = vst.msk [vmem:[#allocation3 + $0x18] sm:$0xf] %vm927, 4048220490
        %952 = vst.msk [vmem:[#allocation3 + $0x1c] sm:$0x3] %vm931, 4048220490
        %953 = vst.msk [vmem:[#allocation3 + $0x20] sm:$0xf] %vm927, 4048220490
        %954 = vst.msk [vmem:[#allocation3 + $0x24] sm:$0xf] %vm927, 4048220490
        %955 = vst.msk [vmem:[#allocation3 + $0x28] sm:$0xf] %vm927, 4048220490
        %956 = vst.msk [vmem:[#allocation3 + $0x2c] sm:$0x3] %vm931, 4048220490
        %957 = vst.msk [vmem:[#allocation3 + $0x30] sm:$0xf] %vm927, 4048220490
        %958 = vst.msk [vmem:[#allocation3 + $0x34] sm:$0xf] %vm927, 4048220490
        %959 = vst.msk [vmem:[#allocation3 + $0x38] sm:$0xf] %vm927, 4048220490
        %960 = vst.msk [vmem:[#allocation3 + $0x3c] sm:$0x3] %vm931, 4048220490
        %s961 = scalar_lea.vmem %s810, 8 [#allocation5]
        %v962 = vld [vmem:[%s961] sm:$0xf]
        %v963 = vunpack.c.l.bf16 %v962
        %s964 = scalar_lea.vmem %s810, 12 [#allocation5]
        %v965 = vld [vmem:[%s964] sm:$0xf]
        %v966 = vunpack.c.l.bf16 %v965
        %v967 = vld [vmem:[%s803] sm:$0xf]
        %v968 = vunpack.c.l.bf16 %v967
        %s969 = scalar_lea.vmem %s803, 8 [#allocation4]
        %v970 = vld [vmem:[%s969] sm:$0xf]
        %v971 = vunpack.c.l.bf16 %v970
        %v972 = vadd.f32 %v963, %v968
        %v973 = vadd.f32 %v966, %v971
        %v974 = vadd.f32 %v972, %v973
        %v975 = vmul.f32 %v974, 0.25
        %v976 = vpack.c.bf16 %v975, %v975
        %s977 = scalar_lea.vmem [#allocation2], 16
        %978 = vst.msk [vmem:[%s977] sm:$0xf] %vm927, %v976
        %v980 = vrot.slane %v973, 7
        %v982 = vadd.f32 %v972, %v980
        %v983 = vmul.f32 %v982, 0.25
        %v984 = vpack.c.bf16 %v983, %v983
        %vm985 = vcmask 11264
        %vm986 = vsmask.f32 7938
        %vm987 = vmand %vm985, %vm986
        %v988 = vld [vmem:[#allocation2] sm:$0xf]
        %v989 = vsel %vm987, %v984, %v988
        %990 = vst [vmem:[#allocation2] sm:$0xf] %v989
        %s991 = scalar_lea.vmem %s831, 8 [#allocation8]
        %v992 = vld [vmem:[%s991] sm:$0xf]
        %v993 = vunpack.c.l.bf16 %v992
        %s994 = scalar_lea.vmem %s831, 12 [#allocation8]
        %v995 = vld [vmem:[%s994] sm:$0xf]
        %v996 = vunpack.c.l.bf16 %v995
        %v997 = vld [vmem:[%s824] sm:$0xf]
        %v998 = vunpack.c.l.bf16 %v997
        %s999 = scalar_lea.vmem %s824, 8 [#allocation7]
        %v1000 = vld [vmem:[%s999] sm:$0xf]
        %v1001 = vunpack.c.l.bf16 %v1000
        %v1002 = vadd.f32 %v993, %v998
        %v1003 = vadd.f32 %v996, %v1001
        %v1004 = vadd.f32 %v1002, %v1003
        %v1005 = vmul.f32 %v1004, 0.25
        %v1006 = vpack.c.bf16 %v1005, %v1005
        %s1007 = scalar_lea.vmem [#allocation3], 16
        %1008 = vst.msk [vmem:[%s1007] sm:$0xf] %vm927, %v1006
        %v1010 = vrot.slane %v1003, 7
        %v1012 = vadd.f32 %v1002, %v1010
        %v1013 = vmul.f32 %v1012, 0.25
        %v1014 = vpack.c.bf16 %v1013, %v1013
        %v1015 = vld [vmem:[#allocation3] sm:$0xf]
        %v1016 = vsel %vm987, %v1014, %v1015
        %1017 = vst [vmem:[#allocation3] sm:$0xf] %v1016
        %v1018 = vld [vmem:[%s803] sm:$0xf]
        %v1019 = vunpack.c.l.bf16 %v1018
        %v1020 = vld [vmem:[%s969] sm:$0xf]
        %v1021 = vunpack.c.l.bf16 %v1020
        %s1022 = scalar_lea.vmem %s803, 16 [#allocation4]
        %v1023 = vld [vmem:[%s1022] sm:$0xf]
        %v1024 = vunpack.c.l.bf16 %v1023
        %s1025 = scalar_lea.vmem %s803, 24 [#allocation4]
        %v1026 = vld [vmem:[%s1025] sm:$0xf]
        %v1027 = vunpack.c.l.bf16 %v1026
        %v1028 = vadd.f32 %v1019, %v1024
        %v1029 = vadd.f32 %v1021, %v1027
        %v1030 = vadd.f32 %v1028, %v1029
        %v1031 = vmul.f32 %v1030, 0.25
        %v1032 = vpack.c.bf16 %v1031, %v1031
        %s1033 = scalar_lea.vmem [#allocation2], 48
        %1034 = vst.msk [vmem:[%s1033] sm:$0xf] %vm927, %v1032
        %v1036 = vrot.slane %v1029, 7
        %v1038 = vadd.f32 %v1028, %v1036
        %v1039 = vmul.f32 %v1038, 0.25
        %v1040 = vpack.c.bf16 %v1039, %v1039
        %s1041 = scalar_lea.vmem [#allocation2], 32
        %v1042 = vld [vmem:[%s1041] sm:$0xf]
        %v1043 = vsel %vm987, %v1040, %v1042
        %1044 = vst [vmem:[%s1041] sm:$0xf] %v1043
        %v1045 = vld [vmem:[%s824] sm:$0xf]
        %v1046 = vunpack.c.l.bf16 %v1045
        %v1047 = vld [vmem:[%s999] sm:$0xf]
        %v1048 = vunpack.c.l.bf16 %v1047
        %s1049 = scalar_lea.vmem %s824, 16 [#allocation7]
        %v1050 = vld [vmem:[%s1049] sm:$0xf]
        %v1051 = vunpack.c.l.bf16 %v1050
        %s1052 = scalar_lea.vmem %s824, 24 [#allocation7]
        %v1053 = vld [vmem:[%s1052] sm:$0xf]
        %v1054 = vunpack.c.l.bf16 %v1053
        %v1055 = vadd.f32 %v1046, %v1051
        %v1056 = vadd.f32 %v1048, %v1054
        %v1057 = vadd.f32 %v1055, %v1056
        %v1058 = vmul.f32 %v1057, 0.25
        %v1059 = vpack.c.bf16 %v1058, %v1058
        %s1060 = scalar_lea.vmem [#allocation3], 48
        %1061 = vst.msk [vmem:[%s1060] sm:$0xf] %vm927, %v1059
        %v1063 = vrot.slane %v1056, 7
        %v1065 = vadd.f32 %v1055, %v1063
        %v1066 = vmul.f32 %v1065, 0.25
        %v1067 = vpack.c.bf16 %v1066, %v1066
        %s1068 = scalar_lea.vmem [#allocation3], 32
        %v1069 = vld [vmem:[%s1068] sm:$0xf]
        %v1070 = vsel %vm987, %v1067, %v1069
        %1071 = vst [vmem:[%s1068] sm:$0xf] %v1070
        %v1072 = vld [vmem:[%s1022] sm:$0xf]
        %v1073 = vunpack.c.l.bf16 %v1072
        %v1074 = vld [vmem:[%s1025] sm:$0xf]
        %v1075 = vunpack.c.l.bf16 %v1074
        %s1076 = scalar_lea.vmem %s803, 4 [#allocation4]
        %v1077 = vld [vmem:[%s1076] sm:$0xf]
        %v1078 = vunpack.c.l.bf16 %v1077
        %s1079 = scalar_lea.vmem %s803, 12 [#allocation4]
        %v1080 = vld [vmem:[%s1079] sm:$0xf]
        %v1081 = vunpack.c.l.bf16 %v1080
        %v1082 = vadd.f32 %v1073, %v1078
        %v1083 = vadd.f32 %v1075, %v1081
        %v1084 = vadd.f32 %v1082, %v1083
        %v1085 = vmul.f32 %v1084, 0.25
        %v1086 = vpack.c.bf16 %v1085, %v1085
        %v1088 = vunpack.c.l.b16 %v1086
        %v1089 = vpack.c.b16 %v1088, %v1088
        %v1091 = vshrl.u32 %v1089, 16
        %v1093 = vrot.slane %v1091, 7
        %v1094 = vshll.u32 %v1089, 16
        %v1096 = vor.u32 %v1093, %v1094
        %v1097 = vrot.slane %v1093, 4
        %v1100 = vld [vmem:[%s977 + $0x4] sm:$0xf]
        %v1101 = vsel %vm987, %v1096, %v1100
        %1102 = vst [vmem:[%s977 + $0x4] sm:$0xf] %v1101
        %vm1103 = vcmask 8192
        %vm1104 = vsmask.f32 256
        %vm1105 = vmand %vm1103, %vm1104
        %v1106 = vld [vmem:[%s977 + $0x8] sm:$0x1]
        %v1107 = vsel %vm1105, %v1097, %v1106
        %1108 = vst [vmem:[%s977 + $0x8] sm:$0x1] %v1107
        %v1110 = vrot.slane %v1083, 7
        %v1112 = vadd.f32 %v1082, %v1110
        %v1113 = vmul.f32 %v1112, 0.25
        %v1114 = vpack.c.bf16 %v1113, %v1113
        %v1116 = vunpack.c.l.b16 %v1114
        %v1117 = vpack.c.b16 %v1116, %v1116
        %v1119 = vshrl.u32 %v1117, 16
        %v1121 = vrot.slane %v1119, 7
        %v1122 = vshll.u32 %v1117, 16
        %v1124 = vor.u32 %v1121, %v1122
        %v1125 = vrot.slane %v1121, 4
        %vm1128 = vcmask 11265
        %1129 = vst.msk [vmem:[#allocation2 + $0x4] sm:$0xe] %vm1128, %v1124
        %v1130 = vld [vmem:[#allocation2 + $0x8] sm:$0x1]
        %v1131 = vsel %vm1105, %v1125, %v1130
        %1132 = vst [vmem:[#allocation2 + $0x8] sm:$0x1] %v1131
        %v1133 = vld [vmem:[%s1049] sm:$0xf]
        %v1134 = vunpack.c.l.bf16 %v1133
        %v1135 = vld [vmem:[%s1052] sm:$0xf]
        %v1136 = vunpack.c.l.bf16 %v1135
        %s1137 = scalar_lea.vmem %s824, 4 [#allocation7]
        %v1138 = vld [vmem:[%s1137] sm:$0xf]
        %v1139 = vunpack.c.l.bf16 %v1138
        %s1140 = scalar_lea.vmem %s824, 12 [#allocation7]
        %v1141 = vld [vmem:[%s1140] sm:$0xf]
        %v1142 = vunpack.c.l.bf16 %v1141
        %v1143 = vadd.f32 %v1134, %v1139
        %v1144 = vadd.f32 %v1136, %v1142
        %v1145 = vadd.f32 %v1143, %v1144
        %v1146 = vmul.f32 %v1145, 0.25
        %v1147 = vpack.c.bf16 %v1146, %v1146
        %v1149 = vunpack.c.l.b16 %v1147
        %v1150 = vpack.c.b16 %v1149, %v1149
        %v1152 = vshrl.u32 %v1150, 16
        %v1154 = vrot.slane %v1152, 7
        %v1155 = vshll.u32 %v1150, 16
        %v1157 = vor.u32 %v1154, %v1155
        %v1158 = vrot.slane %v1154, 4
        %v1161 = vld [vmem:[%s1007 + $0x4] sm:$0xf]
        %v1162 = vsel %vm987, %v1157, %v1161
        %1163 = vst [vmem:[%s1007 + $0x4] sm:$0xf] %v1162
        %v1164 = vld [vmem:[%s1007 + $0x8] sm:$0x1]
        %v1165 = vsel %vm1105, %v1158, %v1164
        %1166 = vst [vmem:[%s1007 + $0x8] sm:$0x1] %v1165
        %v1168 = vrot.slane %v1144, 7
        %v1170 = vadd.f32 %v1143, %v1168
        %v1171 = vmul.f32 %v1170, 0.25
        %v1172 = vpack.c.bf16 %v1171, %v1171
        %v1174 = vunpack.c.l.b16 %v1172
        %v1175 = vpack.c.b16 %v1174, %v1174
        %v1177 = vshrl.u32 %v1175, 16
        %v1179 = vrot.slane %v1177, 7
        %v1180 = vshll.u32 %v1175, 16
        %v1182 = vor.u32 %v1179, %v1180
        %v1183 = vrot.slane %v1179, 4
        %1186 = vst.msk [vmem:[#allocation3 + $0x4] sm:$0xe] %vm1128, %v1182
        %v1187 = vld [vmem:[#allocation3 + $0x8] sm:$0x1]
        %v1188 = vsel %vm1105, %v1183, %v1187
        %1189 = vst [vmem:[#allocation3 + $0x8] sm:$0x1] %v1188
        %v1190 = vld [vmem:[%s1076] sm:$0xf]
        %v1191 = vunpack.c.l.bf16 %v1190
        %v1192 = vld [vmem:[%s1079] sm:$0xf]
        %v1193 = vunpack.c.l.bf16 %v1192
        %s1194 = scalar_lea.vmem %s803, 20 [#allocation4]
        %v1195 = vld [vmem:[%s1194] sm:$0xf]
        %v1196 = vunpack.c.l.bf16 %v1195
        %s1197 = scalar_lea.vmem %s803, 28 [#allocation4]
        %v1198 = vld [vmem:[%s1197] sm:$0xf]
        %v1199 = vunpack.c.l.bf16 %v1198
        %v1200 = vadd.f32 %v1191, %v1196
        %v1201 = vadd.f32 %v1193, %v1199
        %v1202 = vadd.f32 %v1200, %v1201
        %v1203 = vmul.f32 %v1202, 0.25
        %v1204 = vpack.c.bf16 %v1203, %v1203
        %v1206 = vunpack.c.l.b16 %v1204
        %v1207 = vpack.c.b16 %v1206, %v1206
        %v1209 = vshrl.u32 %v1207, 16
        %v1211 = vrot.slane %v1209, 7
        %v1212 = vshll.u32 %v1207, 16
        %v1214 = vor.u32 %v1211, %v1212
        %v1215 = vrot.slane %v1211, 4
        %v1218 = vld [vmem:[%s1033 + $0x4] sm:$0xf]
        %v1219 = vsel %vm987, %v1214, %v1218
        %1220 = vst [vmem:[%s1033 + $0x4] sm:$0xf] %v1219
        %v1221 = vld [vmem:[%s1033 + $0x8] sm:$0x1]
        %v1222 = vsel %vm1105, %v1215, %v1221
        %1223 = vst [vmem:[%s1033 + $0x8] sm:$0x1] %v1222
        %v1225 = vrot.slane %v1201, 7
        %v1227 = vadd.f32 %v1200, %v1225
        %v1228 = vmul.f32 %v1227, 0.25
        %v1229 = vpack.c.bf16 %v1228, %v1228
        %v1231 = vunpack.c.l.b16 %v1229
        %v1232 = vpack.c.b16 %v1231, %v1231
        %v1234 = vshrl.u32 %v1232, 16
        %v1236 = vrot.slane %v1234, 7
        %v1237 = vshll.u32 %v1232, 16
        %v1239 = vor.u32 %v1236, %v1237
        %v1240 = vrot.slane %v1236, 4
        %1243 = vst.msk [vmem:[%s1041 + $0x4] sm:$0xe] %vm1128, %v1239
        %v1244 = vld [vmem:[%s1041 + $0x8] sm:$0x1]
        %v1245 = vsel %vm1105, %v1240, %v1244
        %1246 = vst [vmem:[%s1041 + $0x8] sm:$0x1] %v1245
        %v1247 = vld [vmem:[%s1137] sm:$0xf]
        %v1248 = vunpack.c.l.bf16 %v1247
        %v1249 = vld [vmem:[%s1140] sm:$0xf]
        %v1250 = vunpack.c.l.bf16 %v1249
        %s1251 = scalar_lea.vmem %s824, 20 [#allocation7]
        %v1252 = vld [vmem:[%s1251] sm:$0xf]
        %v1253 = vunpack.c.l.bf16 %v1252
        %s1254 = scalar_lea.vmem %s824, 28 [#allocation7]
        %v1255 = vld [vmem:[%s1254] sm:$0xf]
        %v1256 = vunpack.c.l.bf16 %v1255
        %v1257 = vadd.f32 %v1248, %v1253
        %v1258 = vadd.f32 %v1250, %v1256
        %v1259 = vadd.f32 %v1257, %v1258
        %v1260 = vmul.f32 %v1259, 0.25
        %v1261 = vpack.c.bf16 %v1260, %v1260
        %v1263 = vunpack.c.l.b16 %v1261
        %v1264 = vpack.c.b16 %v1263, %v1263
        %v1266 = vshrl.u32 %v1264, 16
        %v1268 = vrot.slane %v1266, 7
        %v1269 = vshll.u32 %v1264, 16
        %v1271 = vor.u32 %v1268, %v1269
        %v1272 = vrot.slane %v1268, 4
        %v1275 = vld [vmem:[%s1060 + $0x4] sm:$0xf]
        %v1276 = vsel %vm987, %v1271, %v1275
        %1277 = vst [vmem:[%s1060 + $0x4] sm:$0xf] %v1276
        %v1278 = vld [vmem:[%s1060 + $0x8] sm:$0x1]
        %v1279 = vsel %vm1105, %v1272, %v1278
        %1280 = vst [vmem:[%s1060 + $0x8] sm:$0x1] %v1279
        %v1282 = vrot.slane %v1258, 7
        %v1284 = vadd.f32 %v1257, %v1282
        %v1285 = vmul.f32 %v1284, 0.25
        %v1286 = vpack.c.bf16 %v1285, %v1285
        %v1288 = vunpack.c.l.b16 %v1286
        %v1289 = vpack.c.b16 %v1288, %v1288
        %v1291 = vshrl.u32 %v1289, 16
        %v1293 = vrot.slane %v1291, 7
        %v1294 = vshll.u32 %v1289, 16
        %v1296 = vor.u32 %v1293, %v1294
        %v1297 = vrot.slane %v1293, 4
        %1300 = vst.msk [vmem:[%s1068 + $0x4] sm:$0xe] %vm1128, %v1296
        %v1301 = vld [vmem:[%s1068 + $0x8] sm:$0x1]
        %v1302 = vsel %vm1105, %v1297, %v1301
        %1303 = vst [vmem:[%s1068 + $0x8] sm:$0x1] %v1302
        %v1304 = vld [vmem:[%s1194] sm:$0xf]
        %v1305 = vunpack.c.l.bf16 %v1304
        %v1306 = vld [vmem:[%s1197] sm:$0xf]
        %v1307 = vunpack.c.l.bf16 %v1306
        %v1308 = vld [vmem:[%s817] sm:$0xf]
        %v1309 = vunpack.c.l.bf16 %v1308
        %s1310 = scalar_lea.vmem %s817, 4 [#allocation6]
        %v1311 = vld [vmem:[%s1310] sm:$0xf]
        %v1312 = vunpack.c.l.bf16 %v1311
        %v1313 = vadd.f32 %v1305, %v1309
        %v1314 = vadd.f32 %v1307, %v1312
        %v1315 = vadd.f32 %v1313, %v1314
        %v1316 = vmul.f32 %v1315, 0.25
        %v1317 = vpack.c.bf16 %v1316, %v1316
        %v1319 = vunpack.c.l.b16 %v1317
        %v1320 = vpack.c.b16 %v1319, %v1319
        %v1321 = vrot.slane %v1320, 7
        %v1322 = vrot.slane %v1321, 4
        %1325 = vst.msk [vmem:[%s977 + $0x8] sm:$0xe] %vm1128, %v1321
        %vm1326 = vcmask 8192
        %1327 = vst.msk [vmem:[%s977 + $0xc] sm:$0x1] %vm1326, %v1322
        %v1329 = vrot.slane %v1314, 7
        %v1331 = vadd.f32 %v1313, %v1329
        %v1332 = vmul.f32 %v1331, 0.25
        %v1333 = vpack.c.bf16 %v1332, %v1332
        %v1335 = vunpack.c.l.b16 %v1333
        %v1336 = vpack.c.b16 %v1335, %v1335
        %v1337 = vrot.slane %v1336, 7
        %v1338 = vrot.slane %v1337, 4
        %vm1341 = vcmask 11265
        %vm1342 = vsmask.f32 7942
        %vm1343 = vmand %vm1341, %vm1342
        %v1344 = vld [vmem:[#allocation2 + $0x8] sm:$0xe]
        %v1345 = vsel %vm1343, %v1337, %v1344
        %1346 = vst [vmem:[#allocation2 + $0x8] sm:$0xe] %v1345
        %1347 = vst.msk [vmem:[#allocation2 + $0xc] sm:$0x1] %vm1326, %v1338
        %v1348 = vld [vmem:[%s1251] sm:$0xf]
        %v1349 = vunpack.c.l.bf16 %v1348
        %v1350 = vld [vmem:[%s1254] sm:$0xf]
        %v1351 = vunpack.c.l.bf16 %v1350
        %v1352 = vld [vmem:[%s838] sm:$0xf]
        %v1353 = vunpack.c.l.bf16 %v1352
        %s1354 = scalar_lea.vmem %s838, 4 [#allocation9]
        %v1355 = vld [vmem:[%s1354] sm:$0xf]
        %v1356 = vunpack.c.l.bf16 %v1355
        %v1357 = vadd.f32 %v1349, %v1353
        %v1358 = vadd.f32 %v1351, %v1356
        %v1359 = vadd.f32 %v1357, %v1358
        %v1360 = vmul.f32 %v1359, 0.25
        %v1361 = vpack.c.bf16 %v1360, %v1360
        %v1363 = vunpack.c.l.b16 %v1361
        %v1364 = vpack.c.b16 %v1363, %v1363
        %v1365 = vrot.slane %v1364, 7
        %v1366 = vrot.slane %v1365, 4
        %1369 = vst.msk [vmem:[%s1007 + $0x8] sm:$0xe] %vm1128, %v1365
        %1370 = vst.msk [vmem:[%s1007 + $0xc] sm:$0x1] %vm1326, %v1366
        %v1372 = vrot.slane %v1358, 7
        %v1374 = vadd.f32 %v1357, %v1372
        %v1375 = vmul.f32 %v1374, 0.25
        %v1376 = vpack.c.bf16 %v1375, %v1375
        %v1378 = vunpack.c.l.b16 %v1376
        %v1379 = vpack.c.b16 %v1378, %v1378
        %v1380 = vrot.slane %v1379, 7
        %v1381 = vrot.slane %v1380, 4
        %v1384 = vld [vmem:[#allocation3 + $0x8] sm:$0xe]
        %v1385 = vsel %vm1343, %v1380, %v1384
        %1386 = vst [vmem:[#allocation3 + $0x8] sm:$0xe] %v1385
        %1387 = vst.msk [vmem:[#allocation3 + $0xc] sm:$0x1] %vm1326, %v1381
        %v1388 = vld [vmem:[%s817] sm:$0xf]
        %v1389 = vunpack.c.l.bf16 %v1388
        %v1390 = vld [vmem:[%s1310] sm:$0xf]
        %v1391 = vunpack.c.l.bf16 %v1390
        %s1392 = scalar_lea.vmem %s817, 8 [#allocation6]
        %v1393 = vld [vmem:[%s1392] sm:$0xf]
        %v1394 = vunpack.c.l.bf16 %v1393
        %s1395 = scalar_lea.vmem %s817, 12 [#allocation6]
        %v1396 = vld [vmem:[%s1395] sm:$0xf]
        %v1397 = vunpack.c.l.bf16 %v1396
        %v1398 = vadd.f32 %v1389, %v1394
        %v1399 = vadd.f32 %v1391, %v1397
        %v1400 = vadd.f32 %v1398, %v1399
        %v1401 = vmul.f32 %v1400, 0.25
        %v1402 = vpack.c.bf16 %v1401, %v1401
        %v1404 = vunpack.c.l.b16 %v1402
        %v1405 = vpack.c.b16 %v1404, %v1404
        %v1406 = vrot.slane %v1405, 7
        %v1407 = vrot.slane %v1406, 4
        %1410 = vst.msk [vmem:[%s1033 + $0x8] sm:$0xe] %vm1128, %v1406
        %1411 = vst.msk [vmem:[%s1033 + $0xc] sm:$0x1] %vm1326, %v1407
        %v1413 = vrot.slane %v1399, 7
        %v1415 = vadd.f32 %v1398, %v1413
        %v1416 = vmul.f32 %v1415, 0.25
        %v1417 = vpack.c.bf16 %v1416, %v1416
        %v1419 = vunpack.c.l.b16 %v1417
        %v1420 = vpack.c.b16 %v1419, %v1419
        %v1421 = vrot.slane %v1420, 7
        %v1422 = vrot.slane %v1421, 4
        %v1425 = vld [vmem:[%s1041 + $0x8] sm:$0xe]
        %v1426 = vsel %vm1343, %v1421, %v1425
        %1427 = vst [vmem:[%s1041 + $0x8] sm:$0xe] %v1426
        %1428 = vst.msk [vmem:[%s1041 + $0xc] sm:$0x1] %vm1326, %v1422
        %v1429 = vld [vmem:[%s838] sm:$0xf]
        %v1430 = vunpack.c.l.bf16 %v1429
        %v1431 = vld [vmem:[%s1354] sm:$0xf]
        %v1432 = vunpack.c.l.bf16 %v1431
        %s1433 = scalar_lea.vmem %s838, 8 [#allocation9]
        %v1434 = vld [vmem:[%s1433] sm:$0xf]
        %v1435 = vunpack.c.l.bf16 %v1434
        %s1436 = scalar_lea.vmem %s838, 12 [#allocation9]
        %v1437 = vld [vmem:[%s1436] sm:$0xf]
        %v1438 = vunpack.c.l.bf16 %v1437
        %v1439 = vadd.f32 %v1430, %v1435
        %v1440 = vadd.f32 %v1432, %v1438
        %v1441 = vadd.f32 %v1439, %v1440
        %v1442 = vmul.f32 %v1441, 0.25
        %v1443 = vpack.c.bf16 %v1442, %v1442
        %v1445 = vunpack.c.l.b16 %v1443
        %v1446 = vpack.c.b16 %v1445, %v1445
        %v1447 = vrot.slane %v1446, 7
        %v1448 = vrot.slane %v1447, 4
        %1451 = vst.msk [vmem:[%s1060 + $0x8] sm:$0xe] %vm1128, %v1447
        %1452 = vst.msk [vmem:[%s1060 + $0xc] sm:$0x1] %vm1326, %v1448
        %v1454 = vrot.slane %v1440, 7
        %v1456 = vadd.f32 %v1439, %v1454
        %v1457 = vmul.f32 %v1456, 0.25
        %v1458 = vpack.c.bf16 %v1457, %v1457
        %v1460 = vunpack.c.l.b16 %v1458
        %v1461 = vpack.c.b16 %v1460, %v1460
        %v1462 = vrot.slane %v1461, 7
        %v1463 = vrot.slane %v1462, 4
        %v1466 = vld [vmem:[%s1068 + $0x8] sm:$0xe]
        %v1467 = vsel %vm1343, %v1462, %v1466
        %1468 = vst [vmem:[%s1068 + $0x8] sm:$0xe] %v1467
        %1469 = vst.msk [vmem:[%s1068 + $0xc] sm:$0x1] %vm1326, %v1463
        %p1470 = scmp.eq.s32.totalorder %s26, 0
        // Predicated region
        $region307: #{_lambda_.1} parent=281 // pred_check
          %p1471 = pneg %p1470
        $region308: #{_lambda_.1} parent=281 // pred_check_branch
          %1473 = sbr.rel (%p1471) target = $region310
        $region309: #{_lambda_.1} parent=281 // pred_region
          %1474 = vst.msk [vmem:[#allocation2] sm:$0xf] %vm927, 0
          %v1475 = vld [vmem:[#allocation2 + $0x4] sm:$0x1]
          %v1476 = vsel %vm1105, 0, %v1475
          %1477 = vst [vmem:[#allocation2 + $0x4] sm:$0x1] %v1476
          %1478 = vst.msk [vmem:[%s977] sm:$0xf] %vm927, 0
          %v1479 = vld [vmem:[%s977 + $0x4] sm:$0x1]
          %v1480 = vsel %vm1105, 0, %v1479
          %1481 = vst [vmem:[%s977 + $0x4] sm:$0x1] %v1480
          %1482 = vst.msk [vmem:[#allocation3] sm:$0xf] %vm927, 4048220490
          %v1483 = vld [vmem:[#allocation3 + $0x4] sm:$0x1]
          %v1484 = vsel %vm1105, 4048220490, %v1483
          %1485 = vst [vmem:[#allocation3 + $0x4] sm:$0x1] %v1484
          %1486 = vst.msk [vmem:[%s1007] sm:$0xf] %vm927, 4048220490
          %v1487 = vld [vmem:[%s1007 + $0x4] sm:$0x1]
          %v1488 = vsel %vm1105, 4048220490, %v1487
          %1489 = vst [vmem:[%s1007 + $0x4] sm:$0x1] %v1488
        $region310: #{_lambda_.1} parent=281 // pred_fallthru
          _
        %p1490 = scmp.eq.s32.totalorder %s26, 3
        // Predicated region
        $region311: #{_lambda_.1} parent=281 // pred_check
          %p1491 = pneg %p1490
        $region312: #{_lambda_.1} parent=281 // pred_check_branch
          %1493 = sbr.rel (%p1491) target = $region314
        $region313: #{_lambda_.1} parent=281 // pred_region
          %1494 = vst.msk [vmem:[#allocation2 + $0x8] sm:$0xe] %vm1128, 0
          %vm1495 = vcmask 9216
          %vm1496 = vsmask.f32 1280
          %vm1497 = vmand %vm1495, %vm1496
          %v1498 = vld [vmem:[#allocation2 + $0xc] sm:$0x3]
          %v1499 = vsel %vm1497, 0, %v1498
          %1500 = vst [vmem:[#allocation2 + $0xc] sm:$0x3] %v1499
          %1501 = vst.msk [vmem:[#allocation3 + $0x8] sm:$0xe] %vm1128, 4048220490
          %v1502 = vld [vmem:[#allocation3 + $0xc] sm:$0x3]
          %v1503 = vsel %vm1497, 4048220490, %v1502
          %1504 = vst [vmem:[#allocation3 + $0xc] sm:$0x3] %v1503
          %1505 = vst.msk [vmem:[%s977 + $0x8] sm:$0xe] %vm1128, 0
          %v1506 = vld [vmem:[%s977 + $0xc] sm:$0x3]
          %v1507 = vsel %vm1497, 0, %v1506
          %1508 = vst [vmem:[%s977 + $0xc] sm:$0x3] %v1507
          %1509 = vst.msk [vmem:[%s1007 + $0x8] sm:$0xe] %vm1128, 4048220490
          %v1510 = vld [vmem:[%s1007 + $0xc] sm:$0x3]
          %v1511 = vsel %vm1497, 4048220490, %v1510
          %1512 = vst [vmem:[%s1007 + $0xc] sm:$0x3] %v1511
          %1513 = vst.msk [vmem:[%s1041 + $0x8] sm:$0xe] %vm1128, 0
          %v1514 = vld [vmem:[%s1041 + $0xc] sm:$0x3]
          %v1515 = vsel %vm1497, 0, %v1514
          %1516 = vst [vmem:[%s1041 + $0xc] sm:$0x3] %v1515
          %1517 = vst.msk [vmem:[%s1068 + $0x8] sm:$0xe] %vm1128, 4048220490
          %v1518 = vld [vmem:[%s1068 + $0xc] sm:$0x3]
          %v1519 = vsel %vm1497, 4048220490, %v1518
          %1520 = vst [vmem:[%s1068 + $0xc] sm:$0x3] %v1519
          %1521 = vst.msk [vmem:[%s1033 + $0x8] sm:$0xe] %vm1128, 0
          %v1522 = vld [vmem:[%s1033 + $0xc] sm:$0x3]
          %v1523 = vsel %vm1497, 0, %v1522
          %1524 = vst [vmem:[%s1033 + $0xc] sm:$0x3] %v1523
          %1525 = vst.msk [vmem:[%s1060 + $0x8] sm:$0xe] %vm1128, 4048220490
          %v1526 = vld [vmem:[%s1060 + $0xc] sm:$0x3]
          %v1527 = vsel %vm1497, 4048220490, %v1526
          %1528 = vst [vmem:[%s1060 + $0xc] sm:$0x3] %v1527
        $region314: #{_lambda_.1} parent=281 // pred_fallthru
          _
        %v1529 = vld [vmem:[#allocation2] sm:$0xf]
        %v1530 = vld [vmem:[#allocation2 + $0x4] sm:$0xf]
        %v1531 = vld [vmem:[#allocation2 + $0x8] sm:$0x1]
        %v1532 = vld [vmem:[#allocation3] sm:$0xf]
        %v1533 = vld [vmem:[#allocation3 + $0x4] sm:$0xf]
        %v1534 = vld [vmem:[#allocation3 + $0x8] sm:$0x1]
        %v1535 = vld [vmem:[%s6] sm:$0x1]
        %v1536 = vmax.bf16 %v1532, 4048220490
        %v1537 = vmax.bf16 %v1533, 4048220490
        %v1538 = vmax.bf16 %v1534, 4048220490
        %v1539 = vld [vmem:[%s977] sm:$0xf]
        %v1540 = vld [vmem:[%s977 + $0x4] sm:$0xf]
        %v1541 = vld [vmem:[%s977 + $0x8] sm:$0x1]
        %v1542 = vld [vmem:[%s1007] sm:$0xf]
        %v1543 = vld [vmem:[%s1007 + $0x4] sm:$0xf]
        %v1544 = vld [vmem:[%s1007 + $0x8] sm:$0x1]
        %s1545 = scalar_lea.vmem %s6, 1
        %v1546 = vld [vmem:[%s1545] sm:$0x1]
        %v1550 = vunpack.c.l.b16 %v1539
        %v1551 = vunpack.c.l.b16 %v1540
        %v1552 = vunpack.c.l.b16 %v1541
        %v1553 = vpack.c.b16 %v1551, %v1550
        %v1554 = vpack.c.b16 %v1552, %v1552
        %vm1555 = vcmask 15360
        %v1557 = vsel %vm1555, %v1553, 0
        %v1560 = vsel %vm1555, %v1554, 0
        %vm1562 = vcmask 1040384
        %v1564 = vsel %vm1562, %v1546, 0
        %1566 = vmatprep.subr.bf16.mxu0 0
        %1567 = vmatpush1.bf16.msra.mxu0 %v1564
        %1568 = vmatprep.subr.bf16.mxu0 0
        %1569 = vmatpush1.bf16.msra.mxu0 0
        %1570 = vmatprep.subr.bf16.mxu0 0
        %1571 = vmatpush1.bf16.msra.mxu0 0
        %1572 = vmatprep.subr.bf16.mxu0 0
        %1573 = vmatpush1.bf16.msra.mxu0 0
        %1574 = vmatprep.subr.bf16.mxu0 0
        %1575 = vmatpush1.bf16.msra.mxu0 0
        %1576 = vmatprep.subr.bf16.mxu0 0
        %1577 = vmatpush1.bf16.msra.mxu0 0
        %1578 = vmatprep.subr.bf16.mxu0 0
        %1579 = vmatpush1.bf16.msra.mxu0 0
        %1580 = vmatprep.subr.bf16.mxu0 0
        %1581 = vmatpush1.bf16.msra.mxu0 0
        %1582 = vmatprep.subr.bf16.mxu0 0
        %1583 = vmatpush1.bf16.msra.mxu0 0
        %1584 = vmatprep.subr.bf16.mxu0 0
        %1585 = vmatpush1.bf16.msra.mxu0 0
        %1586 = vmatprep.subr.bf16.mxu0 0
        %1587 = vmatpush1.bf16.msra.mxu0 0
        %1588 = vmatprep.subr.bf16.mxu0 0
        %1589 = vmatpush1.bf16.msra.mxu0 0
        %1590 = vmatprep.subr.bf16.mxu0 0
        %1591 = vmatpush1.bf16.msra.mxu0 0
        %1592 = vmatprep.subr.bf16.mxu0 0
        %1593 = vmatpush1.bf16.msra.mxu0 0
        %1594 = vmatprep.subr.bf16.mxu0 0
        %1595 = vmatpush1.bf16.msra.mxu0 0
        %1596 = vmatprep.subr.bf16.mxu0 0
        %1597 = vmatpush1.bf16.msra.mxu0 0
        %1598 = vmatprep.mubr.bf16.mxu0 0
        %1599 = vmatmul.mubr.bf16.gmra.mrb[0].mxu0 %v1557
        %v1600 = vpop.f32.mrb[0].mxu0
        %v1601 = vadd.f32 0.0, %v1600
        %v1602 = vpop.f32.mrb[0].mxu0
        %v1603 = vpop.f32.mrb[0].mxu0
        %v1604 = vadd.f32 0.0, %v1603
        %v1605 = vpop.f32.mrb[0].mxu0
        %1606 = vmatprep.mubr.bf16.mxu0 0
        %1607 = vmatmul.mubr.bf16.gmra.mrb[0].mxu0 %v1560
        %v1608 = vpop.f32.mrb[0].mxu0
        %v1609 = vadd.f32 0.0, %v1608
        %v1610 = vpop.f32.mrb[0].mxu0
        %v1611 = vpop.f32.mrb[0].mxu0
        %v1612 = vpop.f32.mrb[0].mxu0
        %1613 = vdwg.mxu0
        %v1617 = vunpack.c.l.b16 %v1529
        %v1618 = vunpack.c.l.b16 %v1530
        %v1619 = vunpack.c.l.b16 %v1531
        %v1620 = vpack.c.b16 %v1618, %v1617
        %v1621 = vpack.c.b16 %v1619, %v1619
        %v1623 = vsel %vm1555, %v1620, 0
        %v1626 = vsel %vm1555, %v1621, 0
        %v1629 = vsel %vm1562, %v1535, 0
        %1631 = vmatprep.subr.bf16.mxu0 0
        %1632 = vmatpush1.bf16.msra.mxu0 %v1629
        %1633 = vmatprep.subr.bf16.mxu0 0
        %1634 = vmatpush1.bf16.msra.mxu0 0
        %1635 = vmatprep.subr.bf16.mxu0 0
        %1636 = vmatpush1.bf16.msra.mxu0 0
        %1637 = vmatprep.subr.bf16.mxu0 0
        %1638 = vmatpush1.bf16.msra.mxu0 0
        %1639 = vmatprep.subr.bf16.mxu0 0
        %1640 = vmatpush1.bf16.msra.mxu0 0
        %1641 = vmatprep.subr.bf16.mxu0 0
        %1642 = vmatpush1.bf16.msra.mxu0 0
        %1643 = vmatprep.subr.bf16.mxu0 0
        %1644 = vmatpush1.bf16.msra.mxu0 0
        %1645 = vmatprep.subr.bf16.mxu0 0
        %1646 = vmatpush1.bf16.msra.mxu0 0
        %1647 = vmatprep.subr.bf16.mxu0 0
        %1648 = vmatpush1.bf16.msra.mxu0 0
        %1649 = vmatprep.subr.bf16.mxu0 0
        %1650 = vmatpush1.bf16.msra.mxu0 0
        %1651 = vmatprep.subr.bf16.mxu0 0
        %1652 = vmatpush1.bf16.msra.mxu0 0
        %1653 = vmatprep.subr.bf16.mxu0 0
        %1654 = vmatpush1.bf16.msra.mxu0 0
        %1655 = vmatprep.subr.bf16.mxu0 0
        %1656 = vmatpush1.bf16.msra.mxu0 0
        %1657 = vmatprep.subr.bf16.mxu0 0
        %1658 = vmatpush1.bf16.msra.mxu0 0
        %1659 = vmatprep.subr.bf16.mxu0 0
        %1660 = vmatpush1.bf16.msra.mxu0 0
        %1661 = vmatprep.subr.bf16.mxu0 0
        %1662 = vmatpush1.bf16.msra.mxu0 0
        %1663 = vmatprep.mubr.bf16.mxu0 0
        %1664 = vmatmul.mubr.bf16.gmra.mrb[0].mxu0 %v1623
        %v1665 = vpop.f32.mrb[0].mxu0
        %v1666 = vadd.f32 %v1601, %v1665
        %v1667 = vpop.f32.mrb[0].mxu0
        %v1668 = vpop.f32.mrb[0].mxu0
        %v1669 = vadd.f32 %v1604, %v1668
        %v1670 = vpop.f32.mrb[0].mxu0
        %1671 = vmatprep.mubr.bf16.mxu0 0
        %1672 = vmatmul.mubr.bf16.gmra.mrb[0].mxu0 %v1626
        %v1673 = vpop.f32.mrb[0].mxu0
        %v1674 = vadd.f32 %v1609, %v1673
        %v1675 = vpop.f32.mrb[0].mxu0
        %v1676 = vpop.f32.mrb[0].mxu0
        %v1677 = vpop.f32.mrb[0].mxu0
        %1678 = vdwg.mxu0
        %v1679 = vmax.bf16 %v1536, %v1542
        %v1680 = vmax.bf16 %v1537, %v1543
        %v1681 = vmax.bf16 %v1538, %v1544
        %v1682 = vld [vmem:[#allocation2 + $0x8] sm:$0x3]
        %v1683 = vld [vmem:[#allocation3 + $0x8] sm:$0x3]
        %s1684 = scalar_lea.vmem %s6, 2
        %v1685 = vld [vmem:[%s1684] sm:$0x1]
        %v1687 = vunpack.c.l.b16 %v1682
        %v1688 = vpack.c.b16 %v1687, %v1687
        %vm1689 = vsmask.f32 7424
        %v1690 = vshrl.u32 %v1620, 16
        %v1692 = vshll.u32 %v1620, 16
        %v1694 = vrot.slane %v1692, 1
        %v1695 = vor.u32 %v1690, %v1694
        %v1697 = vshll.u32 %v1688, 16
        %v1699 = vrot.slane %v1697, 1
        %v1700 = vsel %vm1689, %v1695, %v1699
        %v1701 = vshrl.u32 %v1688, 16
        %v1703 = vor.u32 %v1701, %v1699
        %v1705 = vsel %vm1555, %v1700, 0
        %v1708 = vsel %vm1555, %v1703, 0
        %v1711 = vsel %vm1562, %v1685, 0
        %1713 = vmatprep.subr.bf16.mxu0 0
        %1714 = vmatpush1.bf16.msra.mxu0 %v1711
        %1715 = vmatprep.subr.bf16.mxu0 0
        %1716 = vmatpush1.bf16.msra.mxu0 0
        %1717 = vmatprep.subr.bf16.mxu0 0
        %1718 = vmatpush1.bf16.msra.mxu0 0
        %1719 = vmatprep.subr.bf16.mxu0 0
        %1720 = vmatpush1.bf16.msra.mxu0 0
        %1721 = vmatprep.subr.bf16.mxu0 0
        %1722 = vmatpush1.bf16.msra.mxu0 0
        %1723 = vmatprep.subr.bf16.mxu0 0
        %1724 = vmatpush1.bf16.msra.mxu0 0
        %1725 = vmatprep.subr.bf16.mxu0 0
        %1726 = vmatpush1.bf16.msra.mxu0 0
        %1727 = vmatprep.subr.bf16.mxu0 0
        %1728 = vmatpush1.bf16.msra.mxu0 0
        %1729 = vmatprep.subr.bf16.mxu0 0
        %1730 = vmatpush1.bf16.msra.mxu0 0
        %1731 = vmatprep.subr.bf16.mxu0 0
        %1732 = vmatpush1.bf16.msra.mxu0 0
        %1733 = vmatprep.subr.bf16.mxu0 0
        %1734 = vmatpush1.bf16.msra.mxu0 0
        %1735 = vmatprep.subr.bf16.mxu0 0
        %1736 = vmatpush1.bf16.msra.mxu0 0
        %1737 = vmatprep.subr.bf16.mxu0 0
        %1738 = vmatpush1.bf16.msra.mxu0 0
        %1739 = vmatprep.subr.bf16.mxu0 0
        %1740 = vmatpush1.bf16.msra.mxu0 0
        %1741 = vmatprep.subr.bf16.mxu0 0
        %1742 = vmatpush1.bf16.msra.mxu0 0
        %1743 = vmatprep.subr.bf16.mxu0 0
        %1744 = vmatpush1.bf16.msra.mxu0 0
        %1745 = vmatprep.mubr.bf16.mxu0 0
        %1746 = vmatmul.mubr.bf16.gmra.mrb[0].mxu0 %v1705
        %v1747 = vpop.f32.mrb[0].mxu0
        %v1748 = vadd.f32 0.0, %v1747
        %v1749 = vpop.f32.mrb[0].mxu0
        %v1750 = vpop.f32.mrb[0].mxu0
        %v1751 = vadd.f32 0.0, %v1750
        %v1752 = vpop.f32.mrb[0].mxu0
        %1753 = vmatprep.mubr.bf16.mxu0 0
        %1754 = vmatmul.mubr.bf16.gmra.mrb[0].mxu0 %v1708
        %v1755 = vpop.f32.mrb[0].mxu0
        %v1756 = vadd.f32 0.0, %v1755
        %v1757 = vpop.f32.mrb[0].mxu0
        %v1758 = vpop.f32.mrb[0].mxu0
        %v1759 = vpop.f32.mrb[0].mxu0
        %1760 = vdwg.mxu0
        %v1761 = vadd.f32 %v1666, %v1748
        %v1762 = vadd.f32 %v1669, %v1751
        %v1763 = vadd.f32 %v1674, %v1756
        %vm1764 = vsmask.f32 3328
        %vm1765 = vsmask.f32 7440
        %vm1766 = vmor %vm1764, %vm1765
        %v1768 = vshrl.u32 %v1532, 16
        %v1770 = vrot.slane %v1768, 4
        %v1771 = vshll.u32 %v1532, 16
        %v1773 = vrot.slane %v1771, 5
        %v1774 = vor.u32 %v1770, %v1773
        %v1775 = vrot.slane %v1774, 4
        %v1777 = vshll.u32 %v1533, 16
        %v1779 = vrot.slane %v1777, 5
        %v1780 = vsel %vm1766, %v1775, %v1779
        %v1781 = vshrl.u32 %v1533, 16
        %v1783 = vrot.slane %v1781, 4
        %v1784 = vor.u32 %v1783, %v1779
        %v1785 = vrot.slane %v1784, 4
        %v1787 = vshll.u32 %v1683, 16
        %v1789 = vrot.slane %v1787, 5
        %v1790 = vsel %vm1766, %v1785, %v1789
        %v1791 = vshrl.u32 %v1683, 16
        %v1793 = vrot.slane %v1791, 4
        %v1794 = vor.u32 %v1793, %v1789
        %v1795 = vrot.slane %v1794, 4
        %v1799 = vmax.bf16 %v1679, %v1780
        %v1800 = vmax.bf16 %v1680, %v1790
        %v1801 = vmax.bf16 %v1681, %v1795
        %v1802 = vld [vmem:[%s1041] sm:$0xf]
        %v1803 = vld [vmem:[%s1041 + $0x4] sm:$0xf]
        %v1804 = vld [vmem:[%s1041 + $0x8] sm:$0x1]
        %v1805 = vld [vmem:[%s1068] sm:$0xf]
        %v1806 = vld [vmem:[%s1068 + $0x4] sm:$0xf]
        %v1807 = vld [vmem:[%s1068 + $0x8] sm:$0x1]
        %s1808 = scalar_lea.vmem %s6, 3
        %v1809 = vld [vmem:[%s1808] sm:$0x1]
        %v1813 = vunpack.c.l.b16 %v1802
        %v1814 = vunpack.c.l.b16 %v1803
        %v1815 = vunpack.c.l.b16 %v1804
        %v1816 = vpack.c.b16 %v1814, %v1813
        %v1817 = vpack.c.b16 %v1815, %v1815
        %v1819 = vsel %vm1555, %v1816, 0
        %v1822 = vsel %vm1555, %v1817, 0
        %v1825 = vsel %vm1562, %v1809, 0
        %1827 = vmatprep.subr.bf16.mxu0 0
        %1828 = vmatpush1.bf16.msra.mxu0 %v1825
        %1829 = vmatprep.subr.bf16.mxu0 0
        %1830 = vmatpush1.bf16.msra.mxu0 0
        %1831 = vmatprep.subr.bf16.mxu0 0
        %1832 = vmatpush1.bf16.msra.mxu0 0
        %1833 = vmatprep.subr.bf16.mxu0 0
        %1834 = vmatpush1.bf16.msra.mxu0 0
        %1835 = vmatprep.subr.bf16.mxu0 0
        %1836 = vmatpush1.bf16.msra.mxu0 0
        %1837 = vmatprep.subr.bf16.mxu0 0
        %1838 = vmatpush1.bf16.msra.mxu0 0
        %1839 = vmatprep.subr.bf16.mxu0 0
        %1840 = vmatpush1.bf16.msra.mxu0 0
        %1841 = vmatprep.subr.bf16.mxu0 0
        %1842 = vmatpush1.bf16.msra.mxu0 0
        %1843 = vmatprep.subr.bf16.mxu0 0
        %1844 = vmatpush1.bf16.msra.mxu0 0
        %1845 = vmatprep.subr.bf16.mxu0 0
        %1846 = vmatpush1.bf16.msra.mxu0 0
        %1847 = vmatprep.subr.bf16.mxu0 0
        %1848 = vmatpush1.bf16.msra.mxu0 0
        %1849 = vmatprep.subr.bf16.mxu0 0
        %1850 = vmatpush1.bf16.msra.mxu0 0
        %1851 = vmatprep.subr.bf16.mxu0 0
        %1852 = vmatpush1.bf16.msra.mxu0 0
        %1853 = vmatprep.subr.bf16.mxu0 0
        %1854 = vmatpush1.bf16.msra.mxu0 0
        %1855 = vmatprep.subr.bf16.mxu0 0
        %1856 = vmatpush1.bf16.msra.mxu0 0
        %1857 = vmatprep.subr.bf16.mxu0 0
        %1858 = vmatpush1.bf16.msra.mxu0 0
        %1859 = vmatprep.mubr.bf16.mxu0 0
        %1860 = vmatmul.mubr.bf16.gmra.mrb[0].mxu0 %v1819
        %v1861 = vpop.f32.mrb[0].mxu0
        %v1862 = vadd.f32 0.0, %v1861
        %v1863 = vpop.f32.mrb[0].mxu0
        %v1864 = vpop.f32.mrb[0].mxu0
        %v1865 = vadd.f32 0.0, %v1864
        %v1866 = vpop.f32.mrb[0].mxu0
        %1867 = vmatprep.mubr.bf16.mxu0 0
        %1868 = vmatmul.mubr.bf16.gmra.mrb[0].mxu0 %v1822
        %v1869 = vpop.f32.mrb[0].mxu0
        %v1870 = vadd.f32 0.0, %v1869
        %v1871 = vpop.f32.mrb[0].mxu0
        %v1872 = vpop.f32.mrb[0].mxu0
        %v1873 = vpop.f32.mrb[0].mxu0
        %1874 = vdwg.mxu0
        %v1875 = vadd.f32 %v1761, %v1862
        %v1876 = vadd.f32 %v1762, %v1865
        %v1877 = vadd.f32 %v1763, %v1870
        %v1878 = vmax.bf16 %v1799, %v1805
        %v1879 = vmax.bf16 %v1800, %v1806
        %v1880 = vmax.bf16 %v1801, %v1807
        %v1881 = vld [vmem:[%s1033] sm:$0xf]
        %v1882 = vld [vmem:[%s1033 + $0x4] sm:$0xf]
        %v1883 = vld [vmem:[%s1033 + $0x8] sm:$0x1]
        %v1884 = vld [vmem:[%s1060] sm:$0xf]
        %v1885 = vld [vmem:[%s1060 + $0x4] sm:$0xf]
        %v1886 = vld [vmem:[%s1060 + $0x8] sm:$0x1]
        %s1887 = scalar_lea.vmem %s6, 4
        %v1888 = vld [vmem:[%s1887] sm:$0x1]
        %v1892 = vunpack.c.l.b16 %v1881
        %v1893 = vunpack.c.l.b16 %v1882
        %v1894 = vunpack.c.l.b16 %v1883
        %v1895 = vpack.c.b16 %v1893, %v1892
        %v1896 = vpack.c.b16 %v1894, %v1894
        %v1898 = vsel %vm1555, %v1895, 0
        %v1901 = vsel %vm1555, %v1896, 0
        %v1904 = vsel %vm1562, %v1888, 0
        %1906 = vmatprep.subr.bf16.mxu0 0
        %1907 = vmatpush1.bf16.msra.mxu0 %v1904
        %1908 = vmatprep.subr.bf16.mxu0 0
        %1909 = vmatpush1.bf16.msra.mxu0 0
        %1910 = vmatprep.subr.bf16.mxu0 0
        %1911 = vmatpush1.bf16.msra.mxu0 0
        %1912 = vmatprep.subr.bf16.mxu0 0
        %1913 = vmatpush1.bf16.msra.mxu0 0
        %1914 = vmatprep.subr.bf16.mxu0 0
        %1915 = vmatpush1.bf16.msra.mxu0 0
        %1916 = vmatprep.subr.bf16.mxu0 0
        %1917 = vmatpush1.bf16.msra.mxu0 0
        %1918 = vmatprep.subr.bf16.mxu0 0
        %1919 = vmatpush1.bf16.msra.mxu0 0
        %1920 = vmatprep.subr.bf16.mxu0 0
        %1921 = vmatpush1.bf16.msra.mxu0 0
        %1922 = vmatprep.subr.bf16.mxu0 0
        %1923 = vmatpush1.bf16.msra.mxu0 0
        %1924 = vmatprep.subr.bf16.mxu0 0
        %1925 = vmatpush1.bf16.msra.mxu0 0
        %1926 = vmatprep.subr.bf16.mxu0 0
        %1927 = vmatpush1.bf16.msra.mxu0 0
        %1928 = vmatprep.subr.bf16.mxu0 0
        %1929 = vmatpush1.bf16.msra.mxu0 0
        %1930 = vmatprep.subr.bf16.mxu0 0
        %1931 = vmatpush1.bf16.msra.mxu0 0
        %1932 = vmatprep.subr.bf16.mxu0 0
        %1933 = vmatpush1.bf16.msra.mxu0 0
        %1934 = vmatprep.subr.bf16.mxu0 0
        %1935 = vmatpush1.bf16.msra.mxu0 0
        %1936 = vmatprep.subr.bf16.mxu0 0
        %1937 = vmatpush1.bf16.msra.mxu0 0
        %1938 = vmatprep.mubr.bf16.mxu0 0
        %1939 = vmatmul.mubr.bf16.gmra.mrb[0].mxu0 %v1898
        %v1940 = vpop.f32.mrb[0].mxu0
        %v1941 = vadd.f32 0.0, %v1940
        %v1942 = vpop.f32.mrb[0].mxu0
        %v1943 = vpop.f32.mrb[0].mxu0
        %v1944 = vadd.f32 0.0, %v1943
        %v1945 = vpop.f32.mrb[0].mxu0
        %1946 = vmatprep.mubr.bf16.mxu0 0
        %1947 = vmatmul.mubr.bf16.gmra.mrb[0].mxu0 %v1901
        %v1948 = vpop.f32.mrb[0].mxu0
        %v1949 = vadd.f32 0.0, %v1948
        %v1950 = vpop.f32.mrb[0].mxu0
        %v1951 = vpop.f32.mrb[0].mxu0
        %v1952 = vpop.f32.mrb[0].mxu0
        %1953 = vdwg.mxu0
        %v1954 = vadd.f32 %v1875, %v1941
        %v1955 = vadd.f32 %v1876, %v1944
        %v1956 = vadd.f32 %v1877, %v1949
        %v1957 = vmax.bf16 %v1878, %v1884
        %v1958 = vmax.bf16 %v1879, %v1885
        %v1959 = vmax.bf16 %v1880, %v1886
        %v1960 = vld [vmem:[%s1041 + $0x8] sm:$0x3]
        %v1961 = vld [vmem:[%s1068 + $0x8] sm:$0x3]
        %s1962 = scalar_lea.vmem %s6, 5
        %v1963 = vld [vmem:[%s1962] sm:$0x1]
        %v1965 = vunpack.c.l.b16 %v1960
        %v1966 = vpack.c.b16 %v1965, %v1965
        %v1967 = vshrl.u32 %v1816, 16
        %v1969 = vshll.u32 %v1816, 16
        %v1971 = vrot.slane %v1969, 1
        %v1972 = vor.u32 %v1967, %v1971
        %v1974 = vshll.u32 %v1966, 16
        %v1976 = vrot.slane %v1974, 1
        %v1977 = vsel %vm1689, %v1972, %v1976
        %v1978 = vshrl.u32 %v1966, 16
        %v1980 = vor.u32 %v1978, %v1976
        %v1982 = vsel %vm1555, %v1977, 0
        %v1985 = vsel %vm1555, %v1980, 0
        %v1988 = vsel %vm1562, %v1963, 0
        %1990 = vmatprep.subr.bf16.mxu0 0
        %1991 = vmatpush1.bf16.msra.mxu0 %v1988
        %1992 = vmatprep.subr.bf16.mxu0 0
        %1993 = vmatpush1.bf16.msra.mxu0 0
        %1994 = vmatprep.subr.bf16.mxu0 0
        %1995 = vmatpush1.bf16.msra.mxu0 0
        %1996 = vmatprep.subr.bf16.mxu0 0
        %1997 = vmatpush1.bf16.msra.mxu0 0
        %1998 = vmatprep.subr.bf16.mxu0 0
        %1999 = vmatpush1.bf16.msra.mxu0 0
        %2000 = vmatprep.subr.bf16.mxu0 0
        %2001 = vmatpush1.bf16.msra.mxu0 0
        %2002 = vmatprep.subr.bf16.mxu0 0
        %2003 = vmatpush1.bf16.msra.mxu0 0
        %2004 = vmatprep.subr.bf16.mxu0 0
        %2005 = vmatpush1.bf16.msra.mxu0 0
        %2006 = vmatprep.subr.bf16.mxu0 0
        %2007 = vmatpush1.bf16.msra.mxu0 0
        %2008 = vmatprep.subr.bf16.mxu0 0
        %2009 = vmatpush1.bf16.msra.mxu0 0
        %2010 = vmatprep.subr.bf16.mxu0 0
        %2011 = vmatpush1.bf16.msra.mxu0 0
        %2012 = vmatprep.subr.bf16.mxu0 0
        %2013 = vmatpush1.bf16.msra.mxu0 0
        %2014 = vmatprep.subr.bf16.mxu0 0
        %2015 = vmatpush1.bf16.msra.mxu0 0
        %2016 = vmatprep.subr.bf16.mxu0 0
        %2017 = vmatpush1.bf16.msra.mxu0 0
        %2018 = vmatprep.subr.bf16.mxu0 0
        %2019 = vmatpush1.bf16.msra.mxu0 0
        %2020 = vmatprep.subr.bf16.mxu0 0
        %2021 = vmatpush1.bf16.msra.mxu0 0
        %2022 = vmatprep.mubr.bf16.mxu0 0
        %2023 = vmatmul.mubr.bf16.gmra.mrb[0].mxu0 %v1982
        %v2024 = vpop.f32.mrb[0].mxu0
        %v2025 = vadd.f32 0.0, %v2024
        %v2026 = vpop.f32.mrb[0].mxu0
        %v2027 = vpop.f32.mrb[0].mxu0
        %v2028 = vadd.f32 0.0, %v2027
        %v2029 = vpop.f32.mrb[0].mxu0
        %2030 = vmatprep.mubr.bf16.mxu0 0
        %2031 = vmatmul.mubr.bf16.gmra.mrb[0].mxu0 %v1985
        %v2032 = vpop.f32.mrb[0].mxu0
        %v2033 = vadd.f32 0.0, %v2032
        %v2034 = vpop.f32.mrb[0].mxu0
        %v2035 = vpop.f32.mrb[0].mxu0
        %v2036 = vpop.f32.mrb[0].mxu0
        %2037 = vdwg.mxu0
        %v2038 = vadd.f32 %v1954, %v2025
        %v2039 = vadd.f32 %v1955, %v2028
        %v2040 = vadd.f32 %v1956, %v2033
        %v2042 = vshrl.u32 %v1805, 16
        %v2044 = vrot.slane %v2042, 4
        %v2045 = vshll.u32 %v1805, 16
        %v2047 = vrot.slane %v2045, 5
        %v2048 = vor.u32 %v2044, %v2047
        %v2049 = vrot.slane %v2048, 4
        %v2051 = vshll.u32 %v1806, 16
        %v2053 = vrot.slane %v2051, 5
        %v2054 = vsel %vm1766, %v2049, %v2053
        %v2055 = vshrl.u32 %v1806, 16
        %v2057 = vrot.slane %v2055, 4
        %v2058 = vor.u32 %v2057, %v2053
        %v2059 = vrot.slane %v2058, 4
        %v2061 = vshll.u32 %v1961, 16
        %v2063 = vrot.slane %v2061, 5
        %v2064 = vsel %vm1766, %v2059, %v2063
        %v2065 = vshrl.u32 %v1961, 16
        %v2067 = vrot.slane %v2065, 4
        %v2068 = vor.u32 %v2067, %v2063
        %v2069 = vrot.slane %v2068, 4
        %v2073 = vmax.bf16 %v1957, %v2054
        %v2074 = vmax.bf16 %v1958, %v2064
        %v2075 = vmax.bf16 %v1959, %v2069
        %v2076 = vld [vmem:[#allocation2 + $0x4] sm:$0xf]
        %v2077 = vld [vmem:[#allocation2 + $0x8] sm:$0xf]
        %v2078 = vld [vmem:[#allocation2 + $0xc] sm:$0x3]
        %v2079 = vld [vmem:[#allocation3 + $0x4] sm:$0xf]
        %v2080 = vld [vmem:[#allocation3 + $0x8] sm:$0xf]
        %v2081 = vld [vmem:[#allocation3 + $0xc] sm:$0x3]
        %s2082 = scalar_lea.vmem %s6, 6
        %v2083 = vld [vmem:[%s2082] sm:$0x1]
        %v2087 = vunpack.c.l.b16 %v2076
        %v2088 = vunpack.c.l.b16 %v2077
        %v2089 = vunpack.c.l.b16 %v2078
        %v2090 = vpack.c.b16 %v2088, %v2087
        %v2091 = vpack.c.b16 %v2089, %v2089
        %v2093 = vshrl.u32 %v2090, 16
        %v2095 = vshll.u32 %v2090, 16
        %v2097 = vrot.slane %v2095, 1
        %v2098 = vor.u32 %v2093, %v2097
        %v2100 = vshll.u32 %v2091, 16
        %v2102 = vrot.slane %v2100, 1
        %v2103 = vsel %vm1689, %v2098, %v2102
        %v2104 = vshrl.u32 %v2091, 16
        %v2106 = vor.u32 %v2104, %v2102
        %v2108 = vsel %vm1555, %v2103, 0
        %v2111 = vsel %vm1555, %v2106, 0
        %v2114 = vsel %vm1562, %v2083, 0
        %2116 = vmatprep.subr.bf16.mxu0 0
        %2117 = vmatpush1.bf16.msra.mxu0 %v2114
        %2118 = vmatprep.subr.bf16.mxu0 0
        %2119 = vmatpush1.bf16.msra.mxu0 0
        %2120 = vmatprep.subr.bf16.mxu0 0
        %2121 = vmatpush1.bf16.msra.mxu0 0
        %2122 = vmatprep.subr.bf16.mxu0 0
        %2123 = vmatpush1.bf16.msra.mxu0 0
        %2124 = vmatprep.subr.bf16.mxu0 0
        %2125 = vmatpush1.bf16.msra.mxu0 0
        %2126 = vmatprep.subr.bf16.mxu0 0
        %2127 = vmatpush1.bf16.msra.mxu0 0
        %2128 = vmatprep.subr.bf16.mxu0 0
        %2129 = vmatpush1.bf16.msra.mxu0 0
        %2130 = vmatprep.subr.bf16.mxu0 0
        %2131 = vmatpush1.bf16.msra.mxu0 0
        %2132 = vmatprep.subr.bf16.mxu0 0
        %2133 = vmatpush1.bf16.msra.mxu0 0
        %2134 = vmatprep.subr.bf16.mxu0 0
        %2135 = vmatpush1.bf16.msra.mxu0 0
        %2136 = vmatprep.subr.bf16.mxu0 0
        %2137 = vmatpush1.bf16.msra.mxu0 0
        %2138 = vmatprep.subr.bf16.mxu0 0
        %2139 = vmatpush1.bf16.msra.mxu0 0
        %2140 = vmatprep.subr.bf16.mxu0 0
        %2141 = vmatpush1.bf16.msra.mxu0 0
        %2142 = vmatprep.subr.bf16.mxu0 0
        %2143 = vmatpush1.bf16.msra.mxu0 0
        %2144 = vmatprep.subr.bf16.mxu0 0
        %2145 = vmatpush1.bf16.msra.mxu0 0
        %2146 = vmatprep.subr.bf16.mxu0 0
        %2147 = vmatpush1.bf16.msra.mxu0 0
        %2148 = vmatprep.mubr.bf16.mxu0 0
        %2149 = vmatmul.mubr.bf16.gmra.mrb[0].mxu0 %v2108
        %v2150 = vpop.f32.mrb[0].mxu0
        %v2151 = vadd.f32 0.0, %v2150
        %v2152 = vpop.f32.mrb[0].mxu0
        %v2153 = vpop.f32.mrb[0].mxu0
        %v2154 = vadd.f32 0.0, %v2153
        %v2155 = vpop.f32.mrb[0].mxu0
        %2156 = vmatprep.mubr.bf16.mxu0 0
        %2157 = vmatmul.mubr.bf16.gmra.mrb[0].mxu0 %v2111
        %v2158 = vpop.f32.mrb[0].mxu0
        %v2159 = vadd.f32 0.0, %v2158
        %v2160 = vpop.f32.mrb[0].mxu0
        %v2161 = vpop.f32.mrb[0].mxu0
        %v2162 = vpop.f32.mrb[0].mxu0
        %2163 = vdwg.mxu0
        %v2164 = vadd.f32 %v2038, %v2151
        %v2165 = vadd.f32 %v2039, %v2154
        %v2166 = vadd.f32 %v2040, %v2159
        %v2168 = vshrl.u32 %v2079, 16
        %v2170 = vrot.slane %v2168, 4
        %v2171 = vshll.u32 %v2079, 16
        %v2173 = vrot.slane %v2171, 5
        %v2174 = vor.u32 %v2170, %v2173
        %v2175 = vrot.slane %v2174, 4
        %v2177 = vshll.u32 %v2080, 16
        %v2179 = vrot.slane %v2177, 5
        %v2180 = vsel %vm1766, %v2175, %v2179
        %v2181 = vshrl.u32 %v2080, 16
        %v2183 = vrot.slane %v2181, 4
        %v2184 = vor.u32 %v2183, %v2179
        %v2185 = vrot.slane %v2184, 4
        %v2187 = vshll.u32 %v2081, 16
        %v2189 = vrot.slane %v2187, 5
        %v2190 = vsel %vm1766, %v2185, %v2189
        %v2191 = vshrl.u32 %v2081, 16
        %v2193 = vrot.slane %v2191, 4
        %v2194 = vor.u32 %v2193, %v2189
        %v2195 = vrot.slane %v2194, 4
        %v2199 = vmax.bf16 %v2073, %v2180
        %v2200 = vmax.bf16 %v2074, %v2190
        %v2201 = vmax.bf16 %v2075, %v2195
        %v2202 = vld [vmem:[%s977 + $0x4] sm:$0xf]
        %v2203 = vld [vmem:[%s977 + $0x8] sm:$0xf]
        %v2204 = vld [vmem:[%s977 + $0xc] sm:$0x3]
        %v2205 = vld [vmem:[%s1007 + $0x4] sm:$0xf]
        %v2206 = vld [vmem:[%s1007 + $0x8] sm:$0xf]
        %v2207 = vld [vmem:[%s1007 + $0xc] sm:$0x3]
        %s2208 = scalar_lea.vmem %s6, 7
        %v2209 = vld [vmem:[%s2208] sm:$0x1]
        %v2213 = vunpack.c.l.b16 %v2202
        %v2214 = vunpack.c.l.b16 %v2203
        %v2215 = vunpack.c.l.b16 %v2204
        %v2216 = vpack.c.b16 %v2214, %v2213
        %v2217 = vpack.c.b16 %v2215, %v2215
        %v2219 = vshrl.u32 %v2216, 16
        %v2221 = vshll.u32 %v2216, 16
        %v2223 = vrot.slane %v2221, 1
        %v2224 = vor.u32 %v2219, %v2223
        %v2226 = vshll.u32 %v2217, 16
        %v2228 = vrot.slane %v2226, 1
        %v2229 = vsel %vm1689, %v2224, %v2228
        %v2230 = vshrl.u32 %v2217, 16
        %v2232 = vor.u32 %v2230, %v2228
        %v2234 = vsel %vm1555, %v2229, 0
        %v2237 = vsel %vm1555, %v2232, 0
        %v2240 = vsel %vm1562, %v2209, 0
        %2242 = vmatprep.subr.bf16.mxu0 0
        %2243 = vmatpush1.bf16.msra.mxu0 %v2240
        %2244 = vmatprep.subr.bf16.mxu0 0
        %2245 = vmatpush1.bf16.msra.mxu0 0
        %2246 = vmatprep.subr.bf16.mxu0 0
        %2247 = vmatpush1.bf16.msra.mxu0 0
        %2248 = vmatprep.subr.bf16.mxu0 0
        %2249 = vmatpush1.bf16.msra.mxu0 0
        %2250 = vmatprep.subr.bf16.mxu0 0
        %2251 = vmatpush1.bf16.msra.mxu0 0
        %2252 = vmatprep.subr.bf16.mxu0 0
        %2253 = vmatpush1.bf16.msra.mxu0 0
        %2254 = vmatprep.subr.bf16.mxu0 0
        %2255 = vmatpush1.bf16.msra.mxu0 0
        %2256 = vmatprep.subr.bf16.mxu0 0
        %2257 = vmatpush1.bf16.msra.mxu0 0
        %2258 = vmatprep.subr.bf16.mxu0 0
        %2259 = vmatpush1.bf16.msra.mxu0 0
        %2260 = vmatprep.subr.bf16.mxu0 0
        %2261 = vmatpush1.bf16.msra.mxu0 0
        %2262 = vmatprep.subr.bf16.mxu0 0
        %2263 = vmatpush1.bf16.msra.mxu0 0
        %2264 = vmatprep.subr.bf16.mxu0 0
        %2265 = vmatpush1.bf16.msra.mxu0 0
        %2266 = vmatprep.subr.bf16.mxu0 0
        %2267 = vmatpush1.bf16.msra.mxu0 0
        %2268 = vmatprep.subr.bf16.mxu0 0
        %2269 = vmatpush1.bf16.msra.mxu0 0
        %2270 = vmatprep.subr.bf16.mxu0 0
        %2271 = vmatpush1.bf16.msra.mxu0 0
        %2272 = vmatprep.subr.bf16.mxu0 0
        %2273 = vmatpush1.bf16.msra.mxu0 0
        %2274 = vmatprep.mubr.bf16.mxu0 0
        %2275 = vmatmul.mubr.bf16.gmra.mrb[0].mxu0 %v2234
        %v2276 = vpop.f32.mrb[0].mxu0
        %v2277 = vadd.f32 0.0, %v2276
        %v2278 = vpop.f32.mrb[0].mxu0
        %v2279 = vpop.f32.mrb[0].mxu0
        %v2280 = vadd.f32 0.0, %v2279
        %v2281 = vpop.f32.mrb[0].mxu0
        %2282 = vmatprep.mubr.bf16.mxu0 0
        %2283 = vmatmul.mubr.bf16.gmra.mrb[0].mxu0 %v2237
        %v2284 = vpop.f32.mrb[0].mxu0
        %v2285 = vadd.f32 0.0, %v2284
        %v2286 = vpop.f32.mrb[0].mxu0
        %v2287 = vpop.f32.mrb[0].mxu0
        %v2288 = vpop.f32.mrb[0].mxu0
        %2289 = vdwg.mxu0
        %v2290 = vadd.f32 %v2164, %v2277
        %v2291 = vadd.f32 %v2165, %v2280
        %v2292 = vadd.f32 %v2166, %v2285
        %v2294 = vshrl.u32 %v2205, 16
        %v2296 = vrot.slane %v2294, 4
        %v2297 = vshll.u32 %v2205, 16
        %v2299 = vrot.slane %v2297, 5
        %v2300 = vor.u32 %v2296, %v2299
        %v2301 = vrot.slane %v2300, 4
        %v2303 = vshll.u32 %v2206, 16
        %v2305 = vrot.slane %v2303, 5
        %v2306 = vsel %vm1766, %v2301, %v2305
        %v2307 = vshrl.u32 %v2206, 16
        %v2309 = vrot.slane %v2307, 4
        %v2310 = vor.u32 %v2309, %v2305
        %v2311 = vrot.slane %v2310, 4
        %v2313 = vshll.u32 %v2207, 16
        %v2315 = vrot.slane %v2313, 5
        %v2316 = vsel %vm1766, %v2311, %v2315
        %v2317 = vshrl.u32 %v2207, 16
        %v2319 = vrot.slane %v2317, 4
        %v2320 = vor.u32 %v2319, %v2315
        %v2321 = vrot.slane %v2320, 4
        %v2325 = vmax.bf16 %v2199, %v2306
        %v2326 = vmax.bf16 %v2200, %v2316
        %v2327 = vmax.bf16 %v2201, %v2321
        %v2328 = vld [vmem:[#allocation2 + $0x4] sm:$0xe]
        %v2329 = vld [vmem:[#allocation3 + $0x4] sm:$0xe]
        %s2330 = scalar_lea.vmem %s6, 8
        %v2331 = vld [vmem:[%s2330] sm:$0x1]
        %v2333 = vunpack.c.l.b16 %v2328
        %v2334 = vpack.c.b16 %v2088, %v2333
        %vm2335 = vcmask 1046528
        %v2336 = vrot.slane %v2334, 1
        %v2337 = vrot.slane %v2091, 1
        %v2338 = vsel %vm2335, %v2336, %v2337
        %v2340 = vsel %vm1555, %v2338, 0
        %v2343 = vsel %vm1555, %v2337, 0
        %v2346 = vsel %vm1562, %v2331, 0
        %2348 = vmatprep.subr.bf16.mxu0 0
        %2349 = vmatpush1.bf16.msra.mxu0 %v2346
        %2350 = vmatprep.subr.bf16.mxu0 0
        %2351 = vmatpush1.bf16.msra.mxu0 0
        %2352 = vmatprep.subr.bf16.mxu0 0
        %2353 = vmatpush1.bf16.msra.mxu0 0
        %2354 = vmatprep.subr.bf16.mxu0 0
        %2355 = vmatpush1.bf16.msra.mxu0 0
        %2356 = vmatprep.subr.bf16.mxu0 0
        %2357 = vmatpush1.bf16.msra.mxu0 0
        %2358 = vmatprep.subr.bf16.mxu0 0
        %2359 = vmatpush1.bf16.msra.mxu0 0
        %2360 = vmatprep.subr.bf16.mxu0 0
        %2361 = vmatpush1.bf16.msra.mxu0 0
        %2362 = vmatprep.subr.bf16.mxu0 0
        %2363 = vmatpush1.bf16.msra.mxu0 0
        %2364 = vmatprep.subr.bf16.mxu0 0
        %2365 = vmatpush1.bf16.msra.mxu0 0
        %2366 = vmatprep.subr.bf16.mxu0 0
        %2367 = vmatpush1.bf16.msra.mxu0 0
        %2368 = vmatprep.subr.bf16.mxu0 0
        %2369 = vmatpush1.bf16.msra.mxu0 0
        %2370 = vmatprep.subr.bf16.mxu0 0
        %2371 = vmatpush1.bf16.msra.mxu0 0
        %2372 = vmatprep.subr.bf16.mxu0 0
        %2373 = vmatpush1.bf16.msra.mxu0 0
        %2374 = vmatprep.subr.bf16.mxu0 0
        %2375 = vmatpush1.bf16.msra.mxu0 0
        %2376 = vmatprep.subr.bf16.mxu0 0
        %2377 = vmatpush1.bf16.msra.mxu0 0
        %2378 = vmatprep.subr.bf16.mxu0 0
        %2379 = vmatpush1.bf16.msra.mxu0 0
        %2380 = vmatprep.mubr.bf16.mxu0 0
        %2381 = vmatmul.mubr.bf16.gmra.mrb[0].mxu0 %v2340
        %v2382 = vpop.f32.mrb[0].mxu0
        %v2383 = vadd.f32 0.0, %v2382
        %v2384 = vpop.f32.mrb[0].mxu0
        %v2385 = vpop.f32.mrb[0].mxu0
        %v2386 = vadd.f32 0.0, %v2385
        %v2387 = vpop.f32.mrb[0].mxu0
        %2388 = vmatprep.mubr.bf16.mxu0 0
        %2389 = vmatmul.mubr.bf16.gmra.mrb[0].mxu0 %v2343
        %v2390 = vpop.f32.mrb[0].mxu0
        %v2391 = vadd.f32 0.0, %v2390
        %v2392 = vpop.f32.mrb[0].mxu0
        %v2393 = vpop.f32.mrb[0].mxu0
        %v2394 = vpop.f32.mrb[0].mxu0
        %2395 = vdwg.mxu0
        %v2396 = vadd.f32 %v2290, %v2383
        %v2397 = vadd.f32 %v2291, %v2386
        %v2398 = vadd.f32 %v2292, %v2391
        %vm2402 = vcmask 1042432
        %vm2403 = vcmask 1046532
        %vm2404 = vmor %vm2402, %vm2403
        %v2405 = vrot.slane %v2329, 5
        %v2406 = vrot.slane %v2405, 4
        %v2407 = vrot.slane %v2080, 5
        %v2408 = vsel %vm2404, %v2406, %v2407
        %v2409 = vrot.slane %v2407, 4
        %v2410 = vrot.slane %v2081, 5
        %v2411 = vsel %vm2404, %v2409, %v2410
        %v2412 = vrot.slane %v2410, 4
        %v2416 = vmax.bf16 %v2325, %v2408
        %v2417 = vmax.bf16 %v2326, %v2411
        %v2418 = vmax.bf16 %v2327, %v2412
        %v2419 = vld [vmem:[%s7] sm:$0x1]
        %v2421 = vlaneseq
        %v2422 = vshrl.u32 %v2421, 7
        %v2423 = vsub.s32 0, %v2422
        %v2424 = vrot.slane %v2419, %v2423
        %v2426 = vadd.f32 %v2396, %v2424
        %v2427 = vadd.f32 %v2397, %v2424
        %v2428 = vadd.f32 %v2398, %v2424
        %v2429 = vxor.u32 %v2426, 2147483648
        %v2430 = vxor.u32 %v2427, 2147483648
        %v2431 = vxor.u32 %v2428, 2147483648
        %v2432 = vmul.f32 %v2429, 1.442695
        %v2433 = vpow.pop %v2432
        %v2434 = vmul.f32 %v2430, 1.442695
        %v2435 = vpow.pop %v2434
        %v2436 = vmul.f32 %v2431, 1.442695
        %v2437 = vpow.pop %v2436
        %v2438 = vadd.f32 %v2433, 1.0
        %v2439 = vadd.f32 %v2435, 1.0
        %v2440 = vadd.f32 %v2437, 1.0
        %v2441 = vrcp.pop %v2438
        %v2442 = vmul.f32 1.0, %v2441
        %v2443 = vrcp.pop %v2439
        %v2444 = vmul.f32 1.0, %v2443
        %v2445 = vrcp.pop %v2440
        %v2446 = vmul.f32 1.0, %v2445
        %v2447 = vmul.f32 %v2426, %v2442
        %v2448 = vmul.f32 %v2427, %v2444
        %v2449 = vmul.f32 %v2428, %v2446
        %v2450 = vpack.c.bf16 %v2448, %v2447
        %v2451 = vpack.c.bf16 %v2449, %v2449
        %v2452 = vld [vmem:[%s8] sm:$0x1]
        %v2453 = vld [vmem:[%s9] sm:$0x1]
        %v2455 = vlaneseq
        %v2456 = vshrl.u32 %v2455, 7
        %v2457 = vsub.s32 0, %v2456
        %v2458 = vrot.slane %v2453, %v2457
        %v2463 = vunpack.c.l.b16 %v2416
        %v2464 = vunpack.c.l.b16 %v2417
        %v2465 = vunpack.c.l.b16 %v2418
        %v2466 = vpack.c.b16 %v2464, %v2463
        %v2467 = vpack.c.b16 %v2465, %v2465
        %v2469 = vsel %vm1555, %v2466, 0
        %v2472 = vsel %vm1555, %v2467, 0
        %v2475 = vsel %vm1562, %v2452, 0
        %2477 = vmatprep.subr.bf16.mxu0 0
        %2478 = vmatpush1.bf16.msra.mxu0 %v2475
        %2479 = vmatprep.subr.bf16.mxu0 0
        %2480 = vmatpush1.bf16.msra.mxu0 0
        %2481 = vmatprep.subr.bf16.mxu0 0
        %2482 = vmatpush1.bf16.msra.mxu0 0
        %2483 = vmatprep.subr.bf16.mxu0 0
        %2484 = vmatpush1.bf16.msra.mxu0 0
        %2485 = vmatprep.subr.bf16.mxu0 0
        %2486 = vmatpush1.bf16.msra.mxu0 0
        %2487 = vmatprep.subr.bf16.mxu0 0
        %2488 = vmatpush1.bf16.msra.mxu0 0
        %2489 = vmatprep.subr.bf16.mxu0 0
        %2490 = vmatpush1.bf16.msra.mxu0 0
        %2491 = vmatprep.subr.bf16.mxu0 0
        %2492 = vmatpush1.bf16.msra.mxu0 0
        %2493 = vmatprep.subr.bf16.mxu0 0
        %2494 = vmatpush1.bf16.msra.mxu0 0
        %2495 = vmatprep.subr.bf16.mxu0 0
        %2496 = vmatpush1.bf16.msra.mxu0 0
        %2497 = vmatprep.subr.bf16.mxu0 0
        %2498 = vmatpush1.bf16.msra.mxu0 0
        %2499 = vmatprep.subr.bf16.mxu0 0
        %2500 = vmatpush1.bf16.msra.mxu0 0
        %2501 = vmatprep.subr.bf16.mxu0 0
        %2502 = vmatpush1.bf16.msra.mxu0 0
        %2503 = vmatprep.subr.bf16.mxu0 0
        %2504 = vmatpush1.bf16.msra.mxu0 0
        %2505 = vmatprep.subr.bf16.mxu0 0
        %2506 = vmatpush1.bf16.msra.mxu0 0
        %2507 = vmatprep.subr.bf16.mxu0 0
        %2508 = vmatpush1.bf16.msra.mxu0 0
        %2509 = vmatprep.mubr.bf16.mxu0 0
        %2510 = vmatmul.mubr.bf16.gmra.mrb[0].mxu0 %v2469
        %v2511 = vpop.f32.mrb[0].mxu0
        %v2512 = vadd.f32 %v2458, %v2511
        %v2513 = vpop.f32.mrb[0].mxu0
        %v2514 = vpop.f32.mrb[0].mxu0
        %v2515 = vadd.f32 %v2458, %v2514
        %v2516 = vpop.f32.mrb[0].mxu0
        %2517 = vmatprep.mubr.bf16.mxu0 0
        %2518 = vmatmul.mubr.bf16.gmra.mrb[0].mxu0 %v2472
        %v2519 = vpop.f32.mrb[0].mxu0
        %v2520 = vadd.f32 %v2458, %v2519
        %v2521 = vpop.f32.mrb[0].mxu0
        %v2522 = vpop.f32.mrb[0].mxu0
        %v2523 = vpop.f32.mrb[0].mxu0
        %2524 = vdwg.mxu0
        %v2525 = vxor.u32 %v2512, 2147483648
        %v2526 = vxor.u32 %v2515, 2147483648
        %v2527 = vxor.u32 %v2520, 2147483648
        %v2528 = vmul.f32 %v2525, 1.442695
        %v2529 = vpow.pop %v2528
        %v2530 = vmul.f32 %v2526, 1.442695
        %v2531 = vpow.pop %v2530
        %v2532 = vmul.f32 %v2527, 1.442695
        %v2533 = vpow.pop %v2532
        %v2534 = vadd.f32 %v2529, 1.0
        %v2535 = vadd.f32 %v2531, 1.0
        %v2536 = vadd.f32 %v2533, 1.0
        %v2537 = vrcp.pop %v2534
        %v2538 = vmul.f32 1.0, %v2537
        %v2539 = vrcp.pop %v2535
        %v2540 = vmul.f32 1.0, %v2539
        %v2541 = vrcp.pop %v2536
        %v2542 = vmul.f32 1.0, %v2541
        %v2543 = vmul.f32 %v2512, %v2538
        %v2544 = vmul.f32 %v2515, %v2540
        %v2545 = vmul.f32 %v2520, %v2542
        %v2546 = vpack.c.bf16 %v2544, %v2543
        %v2547 = vpack.c.bf16 %v2545, %v2545
        %vm2548 = vcmask 27648
        %2549 = vst.msk [vmem:[%s923] sm:$0xf] %vm2548, %v2450
        %v2551 = vunpack.c.l.b16 %v2546
        %v2552 = vpack.c.b16 %v2551, %v2551
        %2553 = vrot.lane.b32.xlu0 %v2552, 4
        %v2554 = vpop.permute.xlu0 %2553
        %vm2556 = vcmask 60448
        %2557 = vst.msk [vmem:[%s923] sm:$0xf] %vm2556, %v2554
        %v2560 = vunpack.c.h.b16 %v2450
        %v2561 = vunpack.c.l.b16 %v2451
        %v2562 = vpack.c.b16 %v2560, %v2560
        %v2563 = vpack.c.b16 %v2561, %v2561
        %v2565 = vshrl.u32 %v2562, 16
        %v2567 = vrot.slane %v2565, 4
        %v2568 = vshll.u32 %v2562, 16
        %v2570 = vrot.slane %v2568, 5
        %v2571 = vor.u32 %v2567, %v2570
        %v2572 = vrot.slane %v2571, 4
        %v2574 = vshll.u32 %v2563, 16
        %v2576 = vrot.slane %v2574, 5
        %v2577 = vsel %vm1766, %v2572, %v2576
        %s2579 = scalar_lea.vmem %s923, 4
        %2580 = vst.msk [vmem:[%s2579] sm:$0xf] %vm2548, %v2577
        %v2582 = vunpack.c.h.b16 %v2546
        %v2583 = vunpack.c.l.b16 %v2547
        %v2584 = vpack.c.b16 %v2582, %v2582
        %v2585 = vpack.c.b16 %v2583, %v2583
        %v2587 = vshrl.u32 %v2584, 16
        %v2589 = vrot.slane %v2587, 4
        %v2590 = vshll.u32 %v2584, 16
        %v2592 = vrot.slane %v2590, 5
        %v2593 = vor.u32 %v2589, %v2592
        %v2594 = vrot.slane %v2593, 4
        %v2596 = vshll.u32 %v2585, 16
        %v2598 = vrot.slane %v2596, 5
        %v2599 = vsel %vm1766, %v2594, %v2598
        %2600 = vrot.lane.b32.xlu0 %v2599, 4
        %v2601 = vpop.permute.xlu0 %2600
        %2603 = vst.msk [vmem:[%s2579] sm:$0xf] %vm2556, %v2601
        %s2604 = smul.u32 2, %s26
        %p2605 = scmp.lt.s32.totalorder %s25, 1
        %s2606 = scalar_select %p2605, %s25, 1
        %p2607 = scmp.lt.s32.totalorder %s2604, 7
        %s2608 = scalar_select %p2607, %s2604, 7
        %s2609 = smul.addr %s2606, 8
        %s2610 = sadd.s32 %s2608, %s2609
        %s2611 = smul.addr %s2610, 4
        %s2612 = scalar_lea.vmem %s10, %s2611
        // Predicated region
        $region315: #{_lambda_.1} parent=281 // pred_check
          %p2613 = pneg %p337
        $region316: #{_lambda_.1} parent=281 // pred_check_branch
          %2615 = sbr.rel (%p2613) target = $region318
        $region317: #{_lambda_.1} parent=281 // pred_region
          %s2616 = smul.u32 2, %s26
        $region318: #{_lambda_.1} parent=281 // pred_fallthru
          _
      $region282: #{_lambda_.1} parent=5 // pred_fallthru
        _
      %p2617 = scmp.le.s32.totalorder 2, %s16
      // Predicated region
      $region319: #{_lambda_.1} parent=5 // pred_check
        %p2618 = pneg %p2617
      $region320: #{_lambda_.1} parent=5 // pred_check_branch
        %2620 = sbr.rel (%p2618) target = $region322
      $region321: #{_lambda_.1} parent=5 // pred_region
        %s2621 = ssub.s32 %s16, 2
        // Predicated region
        $region323: #{_lambda_.1} parent=321 // pred_check
          %p2622 = pneg %p343
        $region324: #{_lambda_.1} parent=321 // pred_check_branch
          %2624 = sbr.rel (%p2622) target = $region326
        $region325: #{_lambda_.1} parent=321 // pred_region
          %s2625 = smul.u32 2, %s28
          %p2626 = scmp.lt.s32.totalorder %s27, 1
          %s2627 = scalar_select %p2626, %s27, 1
          %p2628 = scmp.lt.s32.totalorder %s2625, 7
          %s2629 = scalar_select %p2628, %s2625, 7
          %s2630 = smul.addr %s2627, 8
          %s2631 = sadd.s32 %s2629, %s2630
          %s2632 = smul.addr %s2631, 4
          %s2633 = scalar_lea.vmem %s10, %s2632
        $region326: #{_lambda_.1} parent=321 // pred_fallthru
          _
      $region322: #{_lambda_.1} parent=5 // pred_fallthru
        _
    $region6: #{_lambda_.1} parent=1 // loop_footer
      %s20 = sadd.s32 1, %s16
    $region7: #{_lambda_.1} parent=1 // loop_footer_branch
      %15 = sbr.rel target = $region3
    $region8: #{_lambda_.1} parent=1 // loop_exit
      _

</llo_original>
